<compile_context>
chip_gen: v7x
topology: tpu7x:2x2x1
jax: 0.10.0
libtpu: 0.0.40
codegen_flags: <defaults>
</compile_context>

<pallas_src>
import jax
import jax.numpy as jnp
from jax.experimental import pallas as pl
from jax.experimental.pallas import tpu as pltpu


# ------------------------------ small helpers --------------------------------

def _round_up(v, m):
    return ((v + m - 1) // m) * m


def _pad2(a, rows, cols):
    return jnp.pad(a, ((0, rows - a.shape[0]), (0, cols - a.shape[1])))


# ------------------------------ Pallas kernel --------------------------------

def make_gin_kernel(num_conv, tm, eps):
    """Fused GIN forward on a (layer, row_block) grid.

    Ref order: A_blk, x, pool_blk, [w1,b1,w2,b2]*L, [wlin]*(L+1), bias_sum,
               out, t0_scratch, t1_scratch.
    """
    one_plus_eps = float(1.0 + eps)
    n_in = 5 + 5 * num_conv

    def kernel(*refs):
        a_ref, x_ref, pool_ref = refs[0], refs[1], refs[2]
        conv_refs = refs[3:3 + 4 * num_conv]
        lin_refs = refs[3 + 4 * num_conv:4 + 5 * num_conv]
        bsum_ref = refs[4 + 5 * num_conv]
        out_ref = refs[n_in]
        t0_ref = refs[n_in + 1]
        t1_ref = refs[n_in + 2]

        l = pl.program_id(0)            # conv layer index (sequential)
        i = pl.program_id(1)            # node row-block index
        row0 = pl.multiple_of(i * tm, tm)

        # First grid step: init the output accumulator with the summed readout
        # biases and pre-transform the layer-0 input, T0 = X @ W1'_0
        # (reassociation: A @ (X @ W1) so the O(N^2) matmul is hidden-width).
        @pl.when(jnp.logical_and(l == 0, i == 0))
        def _():
            out_ref[...] = bsum_ref[...]
            t0_ref[...] = jnp.dot(
                x_ref[...], conv_refs[0][...],
                preferred_element_type=jnp.float32).astype(jnp.bfloat16)

        a_blk = a_ref[...]              # [tm, Np] bf16 edge counts (no diag)
        pool_blk = pool_ref[...]        # [Gp, tm] bf16 pooling one-hot columns

        for li in range(num_conv):
            @pl.when(l == li)
            def _(li=li):
                w1_ref, b1_ref, w2_ref, b2_ref = conv_refs[4 * li:4 * li + 4]
                t_rd = t0_ref if li % 2 == 0 else t1_ref
                t_wr = t1_ref if li % 2 == 0 else t0_ref

                if li == 0:
                    # Readout contribution of h_list[0] = x (per row block).
                    px = jnp.dot(pool_blk, x_ref[pl.ds(row0, tm), :],
                                 preferred_element_type=jnp.float32)
                    out_ref[...] += jnp.dot(
                        px.astype(jnp.bfloat16), lin_refs[0][...],
                        preferred_element_type=jnp.float32)

                # GINConv MLP layer 1 (inner BN folded into W1'/b1'):
                #   z = relu(A @ T + (1+eps) * T_blk + b1')   (diag term in f32)
                agg = jnp.dot(a_blk, t_rd[...],
                              preferred_element_type=jnp.float32)
                agg += one_plus_eps * t_rd[pl.ds(row0, tm), :].astype(jnp.float32)
                z = jnp.maximum(agg + b1_ref[...], 0.0)

                # MLP layer 2 + outer BN (folded) + ReLU.
                h = jnp.maximum(
                    jnp.dot(z.astype(jnp.bfloat16), w2_ref[...],
                            preferred_element_type=jnp.float32) + b2_ref[...],
                    0.0)
                h_bf = h.astype(jnp.bfloat16)

                # Per-layer pooled readout (dropout = identity in eval mode):
                #   out += (P_blk @ h_blk) @ Wlin_{li+1}
                ph = jnp.dot(pool_blk, h_bf, preferred_element_type=jnp.float32)
                out_ref[...] += jnp.dot(
                    ph.astype(jnp.bfloat16), lin_refs[li + 1][...],
                    preferred_element_type=jnp.float32)

                # Pre-transform this block for the next layer's aggregation:
                #   T_{li+1}[blk] = h_blk @ W1'_{li+1}
                if li + 1 < num_conv:
                    t_wr[pl.ds(row0, tm), :] = jnp.dot(
                        h_bf, conv_refs[4 * (li + 1)][...],
                        preferred_element_type=jnp.float32).astype(jnp.bfloat16)

    return kernel


# ---------------------------- parameter helpers -------------------------------

def _linear_init(key, fan_in, fan_out):
    """PyTorch-style uniform init; stored transposed: W [in, out], b [1, out]."""
    kw, kb = jax.random.split(key)
    bound = 1.0 / jnp.sqrt(float(fan_in))
    w = jax.random.uniform(kw, (fan_in, fan_out), jnp.float32, -bound, bound)
    b = jax.random.uniform(kb, (1, fan_out), jnp.float32, -bound, bound)
    return w, b


def _bn_eval_init(key, dim, eps=1e-5):
    """BatchNorm1d eval mode folded into per-channel scale/shift [1, dim]."""
    kg, kb, km, kv = jax.random.split(key, 4)
    gamma = 1.0 + 0.1 * jax.random.normal(kg, (1, dim), jnp.float32)
    beta = 0.1 * jax.random.normal(kb, (1, dim), jnp.float32)
    running_mean = 0.1 * jax.random.normal(km, (1, dim), jnp.float32)
    running_var = jnp.abs(1.0 + 0.1 * jax.random.normal(kv, (1, dim), jnp.float32))
    scale = gamma / jnp.sqrt(running_var + eps)
    shift = beta - running_mean * scale
    return scale, shift


def init_gin_params(key, num_features, num_classes, hidden_units, num_layers):
    n_keys = 4 * (num_layers - 1) + num_layers
    keys = jax.random.split(key, n_keys)
    kit = iter(keys)
    conv_params = []
    for i in range(num_layers - 1):
        in_dim = num_features if i == 0 else hidden_units
        w1, b1 = _linear_init(next(kit), in_dim, hidden_units)
        s1, t1 = _bn_eval_init(next(kit), hidden_units)       # BN inside MLP
        w2, b2 = _linear_init(next(kit), hidden_units, hidden_units)
        so, to = _bn_eval_init(next(kit), hidden_units)       # outer BN in GIN
        conv_params.append(dict(w1=w1, b1=b1, s1=s1, t1=t1,
                                w2=w2, b2=b2, so=so, to=to))
    lin_ws, lin_bs = [], []
    dims = [num_features] + [hidden_units] * (num_layers - 1)
    for d in dims:
        w, b = _linear_init(next(kit), d, num_classes)
        lin_ws.append(w)
        lin_bs.append(b)
    return conv_params, lin_ws, lin_bs


# --------------------------------- forward ------------------------------------

def gin_forward(x, edge_index, batch, params, num_classes, num_graphs,
                eps=0.0, tile_rows=256):
    conv_params, lin_ws, lin_bs = params
    num_conv = len(conv_params)
    n, f = x.shape
    hidden = conv_params[0]["w1"].shape[1]

    assert tile_rows % 256 == 0
    tm = tile_rows
    n_pad = _round_up(n, tm)            # 256-aligned node dim (MXU occupancy)
    f_pad = _round_up(f, 128)
    h_pad = _round_up(hidden, 128)
    c_pad = _round_up(num_classes, 128)
    g_pad = _round_up(num_graphs, 8)
    num_blocks = n_pad // tm

    # Pure neighbor-count adjacency (NO self-loop term): integer counts are
    # exact in bf16 for multiplicity <= 256; the (1+eps)*h diagonal term is
    # applied in f32 inside the kernel.
    src, dst = edge_index[0], edge_index[1]
    adj = jnp.zeros((n_pad, n_pad), jnp.float32).at[dst, src].add(1.0)
    a_bf = adj.astype(jnp.bfloat16)

    x_bf = _pad2(x, n_pad, f_pad).astype(jnp.bfloat16)
    pool_bf = _pad2(jax.nn.one_hot(batch, g_pad, dtype=jnp.float32).T,
                    g_pad, n_pad).astype(jnp.bfloat16)        # 0/1, exact

    # Fold eval-mode BN into the Linear weights/biases; weights -> bf16.
    conv_args = []
    din_pad = f_pad
    for lp in conv_params:
        w1f = _pad2(lp["w1"] * lp["s1"], din_pad, h_pad).astype(jnp.bfloat16)
        b1f = _pad2(lp["b1"] * lp["s1"] + lp["t1"], 1, h_pad)            # f32
        w2f = _pad2(lp["w2"] * lp["so"], h_pad, h_pad).astype(jnp.bfloat16)
        b2f = _pad2(lp["b2"] * lp["so"] + lp["to"], 1, h_pad)            # f32
        conv_args += [w1f, b1f, w2f, b2f]
        din_pad = h_pad

    seg_dims = [f_pad] + [h_pad] * num_conv
    lin_args = [_pad2(w, seg, c_pad).astype(jnp.bfloat16)
                for w, seg in zip(lin_ws, seg_dims)]
    bsum = jnp.tile(_pad2(sum(lin_bs), 1, c_pad), (g_pad, 1))            # f32

    flat_args = [a_bf, x_bf, pool_bf] + conv_args + lin_args + [bsum]

    def _resident_spec(arr):
        # Full-array block with constant index -> fetched once, stays in VMEM.
        return pl.BlockSpec(arr.shape, lambda l, i: (0, 0))

    in_specs = ([pl.BlockSpec((tm, n_pad), lambda l, i: (i, 0)),   # A row blocks
                 _resident_spec(x_bf),
                 pl.BlockSpec((g_pad, tm), lambda l, i: (0, i))]   # pool cols
                + [_resident_spec(a) for a in conv_args + lin_args + [bsum]])
    out_specs = pl.BlockSpec((g_pad, c_pad), lambda l, i: (0, 0))
    scratch_shapes = [pltpu.VMEM((n_pad, h_pad), jnp.bfloat16),    # T ping
                      pltpu.VMEM((n_pad, h_pad), jnp.bfloat16)]    # T pong

    # Explicit VMEM budget (resident operands are double-buffered by Pallas).
    def _nbytes(a):
        return int(a.size) * int(a.dtype.itemsize)

    vmem_need = (2 * sum(_nbytes(a) for a in flat_args[1:])       # resident
                 + 2 * (tm * n_pad * 2 + g_pad * tm * 2)          # streamed blks
                 + 2 * n_pad * h_pad * 2                          # T scratches
                 + 2 * g_pad * c_pad * 4)                         # out acc
    vmem_limit = min(int(1.25 * vmem_need) + (2 << 20), 96 * (1 << 20))

    # Advisory cost estimate for XLA scheduling around the kernel.
    flops = 2 * n_pad * f_pad * h_pad
    flops += num_conv * 2 * n_pad * n_pad * h_pad
    flops += (2 * num_conv - 1) * 2 * n_pad * h_pad * h_pad
    flops += 2 * g_pad * n_pad * f_pad + 2 * g_pad * f_pad * c_pad
    flops += num_conv * (2 * g_pad * n_pad * h_pad + 2 * g_pad * h_pad * c_pad)
    bytes_accessed = (num_conv * _nbytes(a_bf)
                      + sum(_nbytes(a) for a in flat_args[1:])
                      + g_pad * c_pad * 4)

    kernel = make_gin_kernel(num_conv, tm, eps)
    out_pad = pl.pallas_call(
        kernel,
        out_shape=jax.ShapeDtypeStruct((g_pad, c_pad), jnp.float32),
        grid_spec=pltpu.PrefetchScalarGridSpec(
            num_scalar_prefetch=0,
            grid=(num_conv, num_blocks),
            in_specs=in_specs,
            out_specs=out_specs,
            scratch_shapes=scratch_shapes),
        compiler_params=pltpu.CompilerParams(
            dimension_semantics=("arbitrary", "arbitrary"),
            vmem_limit_bytes=vmem_limit),
        cost_estimate=pl.CostEstimate(flops=int(flops), transcendentals=0,
                                      bytes_accessed=int(bytes_accessed)),
    )(*flat_args)

    return out_pad[:num_graphs, :num_classes]


# ------------------------- pure-JAX f32 reference -----------------------------

def gin_reference(x, edge_index, batch, params, num_graphs, eps=0.0):
    conv_params, lin_ws, lin_bs = params
    n = x.shape[0]
    adj = jnp.zeros((n, n), jnp.float32).at[edge_index[1], edge_index[0]].add(1.0)
    pool = jax.nn.one_hot(batch, num_graphs, dtype=jnp.float32).T
    h = x
    h_list = [x]
    for lp in conv_params:
        agg = adj @ h + (1.0 + eps) * h
        u = agg @ lp["w1"] + lp["b1"]
        z = jnp.maximum(u * lp["s1"] + lp["t1"], 0.0)
        v = z @ lp["w2"] + lp["b2"]
        h = jnp.maximum(v * lp["so"] + lp["to"], 0.0)
        h_list.append(h)
    out = 0.0
    for hi, w, b in zip(h_list, lin_ws, lin_bs):
        out = out + (pool @ hi) @ w + b
    return out


# ----------------------------------- main --------------------------------------

if __name__ == "__main__":
    NUM_FEATURES = 16
    NUM_CLASSES = 8
    HIDDEN = 32
    NUM_LAYERS = 3
    N_NODES = 300            # -> n_pad = 512 -> two 256-row A blocks
    N_EDGES = 900
    N_GRAPHS = 4

    key = jax.random.PRNGKey(0)
    k_x, k_e, k_p = jax.random.split(key, 3)

    x = jax.random.normal(k_x, (N_NODES, NUM_FEATURES), jnp.float32)
    edge_index = jax.random.randint(k_e, (2, N_EDGES), 0, N_NODES, jnp.int32)
    batch = jnp.repeat(jnp.arange(N_GRAPHS, dtype=jnp.int32),
                       N_NODES // N_GRAPHS)

    params = init_gin_params(k_p, NUM_FEATURES, NUM_CLASSES, HIDDEN, NUM_LAYERS)

    out = gin_forward(x, edge_index, batch, params, NUM_CLASSES, N_GRAPHS)
    out = jax.block_until_ready(out)
    assert out.shape == (N_GRAPHS, NUM_CLASSES)
    assert bool(jnp.all(jnp.isfinite(out)))

    ref = gin_reference(x, edge_index, batch, params, N_GRAPHS)
    err = float(jnp.max(jnp.abs(out - ref)) / (jnp.max(jnp.abs(ref)) + 1e-6))
    assert err < 5e-2, f"max normalized error too large: {err}"
    print("KERNEL_OK")
</pallas_src>

<mosaic_0001>
module attributes {stable_mosaic.version = 11 : i64} {
  func.func @kernel(%arg0: i32, %arg1: i32, %arg2: memref<256x512xbf16, #tpu.memory_space<vmem>>, %arg3: memref<512x128xbf16, #tpu.memory_space<vmem>>, %arg4: memref<8x256xbf16, #tpu.memory_space<vmem>>, %arg5: memref<128x128xbf16, #tpu.memory_space<vmem>>, %arg6: memref<1x128xf32, #tpu.memory_space<vmem>>, %arg7: memref<128x128xbf16, #tpu.memory_space<vmem>>, %arg8: memref<1x128xf32, #tpu.memory_space<vmem>>, %arg9: memref<128x128xbf16, #tpu.memory_space<vmem>>, %arg10: memref<1x128xf32, #tpu.memory_space<vmem>>, %arg11: memref<128x128xbf16, #tpu.memory_space<vmem>>, %arg12: memref<1x128xf32, #tpu.memory_space<vmem>>, %arg13: memref<128x128xbf16, #tpu.memory_space<vmem>>, %arg14: memref<128x128xbf16, #tpu.memory_space<vmem>>, %arg15: memref<128x128xbf16, #tpu.memory_space<vmem>>, %arg16: memref<8x128xf32, #tpu.memory_space<vmem>>, %arg17: memref<8x128xf32, #tpu.memory_space<vmem>>, %arg18: memref<512x128xbf16, #tpu.memory_space<vmem>>, %arg19: memref<512x128xbf16, #tpu.memory_space<vmem>>) attributes {dimension_semantics = [#tpu.dimension_semantics<arbitrary>, #tpu.dimension_semantics<arbitrary>], iteration_bounds = array<i64: 2, 2>, scalar_prefetch = 0 : i64, scratch_operands = 2 : i64, tpu.core_type = #tpu.core_type<tc>, window_params = [{transform_indices = @transform_0, window_bounds = array<i64: 256, 512>}, {pipeline_mode = #tpu.pipeline_mode<synchronous>, transform_indices = @transform_1, window_bounds = array<i64: 512, 128>}, {transform_indices = @transform_2, window_bounds = array<i64: 8, 256>}, {pipeline_mode = #tpu.pipeline_mode<synchronous>, transform_indices = @transform_3, window_bounds = array<i64: 128, 128>}, {pipeline_mode = #tpu.pipeline_mode<synchronous>, transform_indices = @transform_4, window_bounds = array<i64: 1, 128>}, {pipeline_mode = #tpu.pipeline_mode<synchronous>, transform_indices = @transform_5, window_bounds = array<i64: 128, 128>}, {pipeline_mode = #tpu.pipeline_mode<synchronous>, transform_indices = @transform_6, window_bounds = array<i64: 1, 128>}, {pipeline_mode = #tpu.pipeline_mode<synchronous>, transform_indices = @transform_7, window_bounds = array<i64: 128, 128>}, {pipeline_mode = #tpu.pipeline_mode<synchronous>, transform_indices = @transform_8, window_bounds = array<i64: 1, 128>}, {pipeline_mode = #tpu.pipeline_mode<synchronous>, transform_indices = @transform_9, window_bounds = array<i64: 128, 128>}, {pipeline_mode = #tpu.pipeline_mode<synchronous>, transform_indices = @transform_10, window_bounds = array<i64: 1, 128>}, {pipeline_mode = #tpu.pipeline_mode<synchronous>, transform_indices = @transform_11, window_bounds = array<i64: 128, 128>}, {pipeline_mode = #tpu.pipeline_mode<synchronous>, transform_indices = @transform_12, window_bounds = array<i64: 128, 128>}, {pipeline_mode = #tpu.pipeline_mode<synchronous>, transform_indices = @transform_13, window_bounds = array<i64: 128, 128>}, {pipeline_mode = #tpu.pipeline_mode<synchronous>, transform_indices = @transform_14, window_bounds = array<i64: 8, 128>}, {pipeline_mode = #tpu.pipeline_mode<synchronous>, transform_indices = @transform_15, window_bounds = array<i64: 8, 128>}]} {
    %c256_i32 = arith.constant 256 : i32
    %0 = arith.muli %arg1, %c256_i32 : i32
    %1 = tpu.assume_multiple %0, 256 : i32
    %c0_i32 = arith.constant 0 : i32
    %2 = arith.cmpi eq, %arg0, %c0_i32 : i32
    %c0_i32_0 = arith.constant 0 : i32
    %3 = arith.cmpi eq, %arg1, %c0_i32_0 : i32
    %4 = arith.andi %2, %3 : i1
    %5 = arith.extui %4 : i1 to i32
    %c0_i32_1 = arith.constant 0 : i32
    %6 = arith.cmpi ne, %5, %c0_i32_1 : i32
    scf.if %6 {
      %c0_8 = arith.constant 0 : index
      %c0_9 = arith.constant 0 : index
      %15 = vector.load %arg16[%c0_8, %c0_9] : memref<8x128xf32, #tpu.memory_space<vmem>>, vector<8x128xf32>
      %c0_10 = arith.constant 0 : index
      %c0_11 = arith.constant 0 : index
      %16 = vector.load %arg17[%c0_10, %c0_11] : memref<8x128xf32, #tpu.memory_space<vmem>>, vector<8x128xf32>
      tpu.vector_store %arg17[%c0_10, %c0_11], %15 {strides = array<i32>} : memref<8x128xf32, #tpu.memory_space<vmem>>, vector<8x128xf32>,
      %c0_12 = arith.constant 0 : index
      %c0_13 = arith.constant 0 : index
      %17 = vector.load %arg3[%c0_12, %c0_13] : memref<512x128xbf16, #tpu.memory_space<vmem>>, vector<512x128xbf16>
      %c0_14 = arith.constant 0 : index
      %c0_15 = arith.constant 0 : index
      %18 = vector.load %arg5[%c0_14, %c0_15] : memref<128x128xbf16, #tpu.memory_space<vmem>>, vector<128x128xbf16>
      %cst = arith.constant dense<0.000000e+00> : vector<512x128xf32>
      %19 = tpu.matmul %17, %18, %cst {dimension_numbers = #tpu.dot_dimension_numbers<[1], [0], [0], [1], [0, 0, 1, 1], [], []>} : vector<512x128xbf16>, vector<128x128xbf16>, vector<512x128xf32> -> vector<512x128xf32>
      %20 = arith.truncf %19 : vector<512x128xf32> to vector<512x128xbf16>
      %c0_16 = arith.constant 0 : index
      %c0_17 = arith.constant 0 : index
      %21 = vector.load %arg18[%c0_16, %c0_17] : memref<512x128xbf16, #tpu.memory_space<vmem>>, vector<512x128xbf16>
      tpu.vector_store %arg18[%c0_16, %c0_17], %20 {strides = array<i32>} : memref<512x128xbf16, #tpu.memory_space<vmem>>, vector<512x128xbf16>,
    } else {
    }
    %c0 = arith.constant 0 : index
    %c0_2 = arith.constant 0 : index
    %7 = vector.load %arg2[%c0, %c0_2] : memref<256x512xbf16, #tpu.memory_space<vmem>>, vector<256x512xbf16>
    %c0_3 = arith.constant 0 : index
    %c0_4 = arith.constant 0 : index
    %8 = vector.load %arg4[%c0_3, %c0_4] : memref<8x256xbf16, #tpu.memory_space<vmem>>, vector<8x256xbf16>
    %c0_i32_5 = arith.constant 0 : i32
    %9 = arith.cmpi eq, %arg0, %c0_i32_5 : i32
    %10 = arith.extui %9 : i1 to i32
    %c0_i32_6 = arith.constant 0 : i32
    %11 = arith.cmpi ne, %10, %c0_i32_6 : i32
    scf.if %11 {
      %15 = arith.index_cast %1 : i32 to index
      %c0_8 = arith.constant 0 : index
      %16 = vector.load %arg3[%15, %c0_8] : memref<512x128xbf16, #tpu.memory_space<vmem>>, vector<256x128xbf16>
      %cst = arith.constant dense<0.000000e+00> : vector<8x128xf32>
      %17 = tpu.matmul %8, %16, %cst {dimension_numbers = #tpu.dot_dimension_numbers<[1], [0], [0], [1], [0, 0, 1, 1], [], []>} : vector<8x256xbf16>, vector<256x128xbf16>, vector<8x128xf32> -> vector<8x128xf32>
      %c0_9 = arith.constant 0 : index
      %c0_10 = arith.constant 0 : index
      %18 = vector.load %arg17[%c0_9, %c0_10] : memref<8x128xf32, #tpu.memory_space<vmem>>, vector<8x128xf32>
      %19 = arith.truncf %17 : vector<8x128xf32> to vector<8x128xbf16>
      %c0_11 = arith.constant 0 : index
      %c0_12 = arith.constant 0 : index
      %20 = vector.load %arg13[%c0_11, %c0_12] : memref<128x128xbf16, #tpu.memory_space<vmem>>, vector<128x128xbf16>
      %cst_13 = arith.constant dense<0.000000e+00> : vector<8x128xf32>
      %21 = tpu.matmul %19, %20, %cst_13 {dimension_numbers = #tpu.dot_dimension_numbers<[1], [0], [0], [1], [0, 0, 1, 1], [], []>} : vector<8x128xbf16>, vector<128x128xbf16>, vector<8x128xf32> -> vector<8x128xf32>
      %22 = arith.addf %18, %21 : vector<8x128xf32>
      %c0_14 = arith.constant 0 : index
      %c0_15 = arith.constant 0 : index
      %23 = vector.load %arg17[%c0_14, %c0_15] : memref<8x128xf32, #tpu.memory_space<vmem>>, vector<8x128xf32>
      tpu.vector_store %arg17[%c0_14, %c0_15], %22 {strides = array<i32>} : memref<8x128xf32, #tpu.memory_space<vmem>>, vector<8x128xf32>,
      %c0_16 = arith.constant 0 : index
      %c0_17 = arith.constant 0 : index
      %24 = vector.load %arg18[%c0_16, %c0_17] : memref<512x128xbf16, #tpu.memory_space<vmem>>, vector<512x128xbf16>
      %cst_18 = arith.constant dense<0.000000e+00> : vector<256x128xf32>
      %25 = tpu.matmul %7, %24, %cst_18 {dimension_numbers = #tpu.dot_dimension_numbers<[1], [0], [0], [1], [0, 0, 1, 1], [], []>} : vector<256x512xbf16>, vector<512x128xbf16>, vector<256x128xf32> -> vector<256x128xf32>
      %26 = arith.index_cast %1 : i32 to index
      %c0_19 = arith.constant 0 : index
      %27 = vector.load %arg18[%26, %c0_19] : memref<512x128xbf16, #tpu.memory_space<vmem>>, vector<256x128xbf16>
      %28 = arith.extf %27 : vector<256x128xbf16> to vector<256x128xf32>
      %cst_20 = arith.constant 1.000000e+00 : f32
      %29 = vector.broadcast %cst_20 : f32 to vector<256x128xf32>
      %30 = arith.mulf %29, %28 : vector<256x128xf32>
      %31 = arith.addf %25, %30 : vector<256x128xf32>
      %c0_21 = arith.constant 0 : index
      %c0_22 = arith.constant 0 : index
      %32 = vector.load %arg6[%c0_21, %c0_22] : memref<1x128xf32, #tpu.memory_space<vmem>>, vector<1x128xf32>
      %33 = vector.broadcast %32 : vector<1x128xf32> to vector<256x128xf32>
      %34 = arith.addf %31, %33 : vector<256x128xf32>
      %cst_23 = arith.constant 0.000000e+00 : f32
      %35 = vector.broadcast %cst_23 : f32 to vector<256x128xf32>
      %36 = arith.maximumf %34, %35 : vector<256x128xf32>
      %37 = arith.truncf %36 : vector<256x128xf32> to vector<256x128xbf16>
      %c0_24 = arith.constant 0 : index
      %c0_25 = arith.constant 0 : index
      %38 = vector.load %arg7[%c0_24, %c0_25] : memref<128x128xbf16, #tpu.memory_space<vmem>>, vector<128x128xbf16>
      %cst_26 = arith.constant dense<0.000000e+00> : vector<256x128xf32>
      %39 = tpu.matmul %37, %38, %cst_26 {dimension_numbers = #tpu.dot_dimension_numbers<[1], [0], [0], [1], [0, 0, 1, 1], [], []>} : vector<256x128xbf16>, vector<128x128xbf16>, vector<256x128xf32> -> vector<256x128xf32>
      %c0_27 = arith.constant 0 : index
      %c0_28 = arith.constant 0 : index
      %40 = vector.load %arg8[%c0_27, %c0_28] : memref<1x128xf32, #tpu.memory_space<vmem>>, vector<1x128xf32>
      %41 = vector.broadcast %40 : vector<1x128xf32> to vector<256x128xf32>
      %42 = arith.addf %39, %41 : vector<256x128xf32>
      %cst_29 = arith.constant 0.000000e+00 : f32
      %43 = vector.broadcast %cst_29 : f32 to vector<256x128xf32>
      %44 = arith.maximumf %42, %43 : vector<256x128xf32>
      %45 = arith.truncf %44 : vector<256x128xf32> to vector<256x128xbf16>
      %cst_30 = arith.constant dense<0.000000e+00> : vector<8x128xf32>
      %46 = tpu.matmul %8, %45, %cst_30 {dimension_numbers = #tpu.dot_dimension_numbers<[1], [0], [0], [1], [0, 0, 1, 1], [], []>} : vector<8x256xbf16>, vector<256x128xbf16>, vector<8x128xf32> -> vector<8x128xf32>
      %c0_31 = arith.constant 0 : index
      %c0_32 = arith.constant 0 : index
      %47 = vector.load %arg17[%c0_31, %c0_32] : memref<8x128xf32, #tpu.memory_space<vmem>>, vector<8x128xf32>
      %48 = arith.truncf %46 : vector<8x128xf32> to vector<8x128xbf16>
      %c0_33 = arith.constant 0 : index
      %c0_34 = arith.constant 0 : index
      %49 = vector.load %arg14[%c0_33, %c0_34] : memref<128x128xbf16, #tpu.memory_space<vmem>>, vector<128x128xbf16>
      %cst_35 = arith.constant dense<0.000000e+00> : vector<8x128xf32>
      %50 = tpu.matmul %48, %49, %cst_35 {dimension_numbers = #tpu.dot_dimension_numbers<[1], [0], [0], [1], [0, 0, 1, 1], [], []>} : vector<8x128xbf16>, vector<128x128xbf16>, vector<8x128xf32> -> vector<8x128xf32>
      %51 = arith.addf %47, %50 : vector<8x128xf32>
      %c0_36 = arith.constant 0 : index
      %c0_37 = arith.constant 0 : index
      %52 = vector.load %arg17[%c0_36, %c0_37] : memref<8x128xf32, #tpu.memory_space<vmem>>, vector<8x128xf32>
      tpu.vector_store %arg17[%c0_36, %c0_37], %51 {strides = array<i32>} : memref<8x128xf32, #tpu.memory_space<vmem>>, vector<8x128xf32>,
      %c0_38 = arith.constant 0 : index
      %c0_39 = arith.constant 0 : index
      %53 = vector.load %arg9[%c0_38, %c0_39] : memref<128x128xbf16, #tpu.memory_space<vmem>>, vector<128x128xbf16>
      %cst_40 = arith.constant dense<0.000000e+00> : vector<256x128xf32>
      %54 = tpu.matmul %45, %53, %cst_40 {dimension_numbers = #tpu.dot_dimension_numbers<[1], [0], [0], [1], [0, 0, 1, 1], [], []>} : vector<256x128xbf16>, vector<128x128xbf16>, vector<256x128xf32> -> vector<256x128xf32>
      %55 = arith.truncf %54 : vector<256x128xf32> to vector<256x128xbf16>
      %56 = arith.index_cast %1 : i32 to index
      %c0_41 = arith.constant 0 : index
      %57 = vector.load %arg19[%56, %c0_41] : memref<512x128xbf16, #tpu.memory_space<vmem>>, vector<256x128xbf16>
      tpu.vector_store %arg19[%56, %c0_41], %55 {strides = array<i32>} : memref<512x128xbf16, #tpu.memory_space<vmem>>, vector<256x128xbf16>,
    } else {
    }
    %c1_i32 = arith.constant 1 : i32
    %12 = arith.cmpi eq, %arg0, %c1_i32 : i32
    %13 = arith.extui %12 : i1 to i32
    %c0_i32_7 = arith.constant 0 : i32
    %14 = arith.cmpi ne, %13, %c0_i32_7 : i32
    scf.if %14 {
      %c0_8 = arith.constant 0 : index
      %c0_9 = arith.constant 0 : index
      %15 = vector.load %arg19[%c0_8, %c0_9] : memref<512x128xbf16, #tpu.memory_space<vmem>>, vector<512x128xbf16>
      %cst = arith.constant dense<0.000000e+00> : vector<256x128xf32>
      %16 = tpu.matmul %7, %15, %cst {dimension_numbers = #tpu.dot_dimension_numbers<[1], [0], [0], [1], [0, 0, 1, 1], [], []>} : vector<256x512xbf16>, vector<512x128xbf16>, vector<256x128xf32> -> vector<256x128xf32>
      %17 = arith.index_cast %1 : i32 to index
      %c0_10 = arith.constant 0 : index
      %18 = vector.load %arg19[%17, %c0_10] : memref<512x128xbf16, #tpu.memory_space<vmem>>, vector<256x128xbf16>
      %19 = arith.extf %18 : vector<256x128xbf16> to vector<256x128xf32>
      %cst_11 = arith.constant 1.000000e+00 : f32
      %20 = vector.broadcast %cst_11 : f32 to vector<256x128xf32>
      %21 = arith.mulf %20, %19 : vector<256x128xf32>
      %22 = arith.addf %16, %21 : vector<256x128xf32>
      %c0_12 = arith.constant 0 : index
      %c0_13 = arith.constant 0 : index
      %23 = vector.load %arg10[%c0_12, %c0_13] : memref<1x128xf32, #tpu.memory_space<vmem>>, vector<1x128xf32>
      %24 = vector.broadcast %23 : vector<1x128xf32> to vector<256x128xf32>
      %25 = arith.addf %22, %24 : vector<256x128xf32>
      %cst_14 = arith.constant 0.000000e+00 : f32
      %26 = vector.broadcast %cst_14 : f32 to vector<256x128xf32>
      %27 = arith.maximumf %25, %26 : vector<256x128xf32>
      %28 = arith.truncf %27 : vector<256x128xf32> to vector<256x128xbf16>
      %c0_15 = arith.constant 0 : index
      %c0_16 = arith.constant 0 : index
      %29 = vector.load %arg11[%c0_15, %c0_16] : memref<128x128xbf16, #tpu.memory_space<vmem>>, vector<128x128xbf16>
      %cst_17 = arith.constant dense<0.000000e+00> : vector<256x128xf32>
      %30 = tpu.matmul %28, %29, %cst_17 {dimension_numbers = #tpu.dot_dimension_numbers<[1], [0], [0], [1], [0, 0, 1, 1], [], []>} : vector<256x128xbf16>, vector<128x128xbf16>, vector<256x128xf32> -> vector<256x128xf32>
      %c0_18 = arith.constant 0 : index
      %c0_19 = arith.constant 0 : index
      %31 = vector.load %arg12[%c0_18, %c0_19] : memref<1x128xf32, #tpu.memory_space<vmem>>, vector<1x128xf32>
      %32 = vector.broadcast %31 : vector<1x128xf32> to vector<256x128xf32>
      %33 = arith.addf %30, %32 : vector<256x128xf32>
      %cst_20 = arith.constant 0.000000e+00 : f32
      %34 = vector.broadcast %cst_20 : f32 to vector<256x128xf32>
      %35 = arith.maximumf %33, %34 : vector<256x128xf32>
      %36 = arith.truncf %35 : vector<256x128xf32> to vector<256x128xbf16>
      %cst_21 = arith.constant dense<0.000000e+00> : vector<8x128xf32>
      %37 = tpu.matmul %8, %36, %cst_21 {dimension_numbers = #tpu.dot_dimension_numbers<[1], [0], [0], [1], [0, 0, 1, 1], [], []>} : vector<8x256xbf16>, vector<256x128xbf16>, vector<8x128xf32> -> vector<8x128xf32>
      %c0_22 = arith.constant 0 : index
      %c0_23 = arith.constant 0 : index
      %38 = vector.load %arg17[%c0_22, %c0_23] : memref<8x128xf32, #tpu.memory_space<vmem>>, vector<8x128xf32>
      %39 = arith.truncf %37 : vector<8x128xf32> to vector<8x128xbf16>
      %c0_24 = arith.constant 0 : index
      %c0_25 = arith.constant 0 : index
      %40 = vector.load %arg15[%c0_24, %c0_25] : memref<128x128xbf16, #tpu.memory_space<vmem>>, vector<128x128xbf16>
      %cst_26 = arith.constant dense<0.000000e+00> : vector<8x128xf32>
      %41 = tpu.matmul %39, %40, %cst_26 {dimension_numbers = #tpu.dot_dimension_numbers<[1], [0], [0], [1], [0, 0, 1, 1], [], []>} : vector<8x128xbf16>, vector<128x128xbf16>, vector<8x128xf32> -> vector<8x128xf32>
      %42 = arith.addf %38, %41 : vector<8x128xf32>
      %c0_27 = arith.constant 0 : index
      %c0_28 = arith.constant 0 : index
      %43 = vector.load %arg17[%c0_27, %c0_28] : memref<8x128xf32, #tpu.memory_space<vmem>>, vector<8x128xf32>
      tpu.vector_store %arg17[%c0_27, %c0_28], %42 {strides = array<i32>} : memref<8x128xf32, #tpu.memory_space<vmem>>, vector<8x128xf32>,
    } else {
    }
    return
  }
  func.func @transform_0(%arg0: i32, %arg1: i32) -> (i32, i32) {
    %c0_i32 = arith.constant 0 : i32
    %c0_i32_0 = arith.constant 0 : i32
    return %arg1, %c0_i32 : i32, i32
  }
  func.func @transform_1(%arg0: i32, %arg1: i32) -> (i32, i32) {
    %c0_i32 = arith.constant 0 : i32
    %c0_i32_0 = arith.constant 0 : i32
    %c0_i32_1 = arith.constant 0 : i32
    return %c0_i32, %c0_i32_0 : i32, i32
  }
  func.func @transform_2(%arg0: i32, %arg1: i32) -> (i32, i32) {
    %c0_i32 = arith.constant 0 : i32
    %c0_i32_0 = arith.constant 0 : i32
    return %c0_i32, %arg1 : i32, i32
  }
  func.func @transform_3(%arg0: i32, %arg1: i32) -> (i32, i32) {
    %c0_i32 = arith.constant 0 : i32
    %c0_i32_0 = arith.constant 0 : i32
    %c0_i32_1 = arith.constant 0 : i32
    return %c0_i32, %c0_i32_0 : i32, i32
  }
  func.func @transform_4(%arg0: i32, %arg1: i32) -> (i32, i32) {
    %c0_i32 = arith.constant 0 : i32
    %c0_i32_0 = arith.constant 0 : i32
    %c0_i32_1 = arith.constant 0 : i32
    return %c0_i32, %c0_i32_0 : i32, i32
  }
  func.func @transform_5(%arg0: i32, %arg1: i32) -> (i32, i32) {
    %c0_i32 = arith.constant 0 : i32
    %c0_i32_0 = arith.constant 0 : i32
    %c0_i32_1 = arith.constant 0 : i32
    return %c0_i32, %c0_i32_0 : i32, i32
  }
  func.func @transform_6(%arg0: i32, %arg1: i32) -> (i32, i32) {
    %c0_i32 = arith.constant 0 : i32
    %c0_i32_0 = arith.constant 0 : i32
    %c0_i32_1 = arith.constant 0 : i32
    return %c0_i32, %c0_i32_0 : i32, i32
  }
  func.func @transform_7(%arg0: i32, %arg1: i32) -> (i32, i32) {
    %c0_i32 = arith.constant 0 : i32
    %c0_i32_0 = arith.constant 0 : i32
    %c0_i32_1 = arith.constant 0 : i32
    return %c0_i32, %c0_i32_0 : i32, i32
  }
  func.func @transform_8(%arg0: i32, %arg1: i32) -> (i32, i32) {
    %c0_i32 = arith.constant 0 : i32
    %c0_i32_0 = arith.constant 0 : i32
    %c0_i32_1 = arith.constant 0 : i32
    return %c0_i32, %c0_i32_0 : i32, i32
  }
  func.func @transform_9(%arg0: i32, %arg1: i32) -> (i32, i32) {
    %c0_i32 = arith.constant 0 : i32
    %c0_i32_0 = arith.constant 0 : i32
    %c0_i32_1 = arith.constant 0 : i32
    return %c0_i32, %c0_i32_0 : i32, i32
  }
  func.func @transform_10(%arg0: i32, %arg1: i32) -> (i32, i32) {
    %c0_i32 = arith.constant 0 : i32
    %c0_i32_0 = arith.constant 0 : i32
    %c0_i32_1 = arith.constant 0 : i32
    return %c0_i32, %c0_i32_0 : i32, i32
  }
  func.func @transform_11(%arg0: i32, %arg1: i32) -> (i32, i32) {
    %c0_i32 = arith.constant 0 : i32
    %c0_i32_0 = arith.constant 0 : i32
    %c0_i32_1 = arith.constant 0 : i32
    return %c0_i32, %c0_i32_0 : i32, i32
  }
  func.func @transform_12(%arg0: i32, %arg1: i32) -> (i32, i32) {
    %c0_i32 = arith.constant 0 : i32
    %c0_i32_0 = arith.constant 0 : i32
    %c0_i32_1 = arith.constant 0 : i32
    return %c0_i32, %c0_i32_0 : i32, i32
  }
  func.func @transform_13(%arg0: i32, %arg1: i32) -> (i32, i32) {
    %c0_i32 = arith.constant 0 : i32
    %c0_i32_0 = arith.constant 0 : i32
    %c0_i32_1 = arith.constant 0 : i32
    return %c0_i32, %c0_i32_0 : i32, i32
  }
  func.func @transform_14(%arg0: i32, %arg1: i32) -> (i32, i32) {
    %c0_i32 = arith.constant 0 : i32
    %c0_i32_0 = arith.constant 0 : i32
    %c0_i32_1 = arith.constant 0 : i32
    return %c0_i32, %c0_i32_0 : i32, i32
  }
  func.func @transform_15(%arg0: i32, %arg1: i32) -> (i32, i32) {
    %c0_i32 = arith.constant 0 : i32
    %c0_i32_0 = arith.constant 0 : i32
    %c0_i32_1 = arith.constant 0 : i32
    return %c0_i32, %c0_i32_0 : i32, i32
  }
}

</mosaic_0001>

<llo_original>
// kernel: tpu_custom_call.1
$region0: #{tpu_custom_call.1}
  #allocation0 [shape = 'u32[]', space=smem, size = 0x4, offset = 0x4, fixed_abs, tag = 'smem constant byte address 0x4 - core index']
  #allocation1 [shape = 'u32[144,128]{1,0:T(1,128)}', space=vmem, size = 0x12000, scoped, tag = 'internal scratch']
  #allocation2 [shape = 'bf16[512,128]{1,0:T(16,128)(2,1)}', space=vmem, size = 0x20000, scoped, tag = 'scratch operand']
  #allocation3 [shape = 'bf16[512,128]{1,0:T(16,128)(2,1)}', space=vmem, size = 0x20000, scoped, tag = 'scratch operand']
  %s0 = inlined_call_operand.hbm [shape: bf16[512,512], index: 0, kind: input, shape index: {}]
  %s1 = inlined_call_operand.hbm [shape: bf16[512,128], index: 1, kind: input, shape index: {}]
  %s2 = inlined_call_operand.hbm [shape: bf16[8,512], index: 2, kind: input, shape index: {}]
  %s3 = inlined_call_operand.hbm [shape: bf16[128,128], index: 3, kind: input, shape index: {}]
  %s4 = inlined_call_operand.vmem [shape: f32[1,128], index: 4, kind: input, shape index: {}]
  %s5 = inlined_call_operand.hbm [shape: bf16[128,128], index: 5, kind: input, shape index: {}]
  %s6 = inlined_call_operand.vmem [shape: f32[1,128], index: 6, kind: input, shape index: {}]
  %s7 = inlined_call_operand.hbm [shape: bf16[128,128], index: 7, kind: input, shape index: {}]
  %s8 = inlined_call_operand.vmem [shape: f32[1,128], index: 8, kind: input, shape index: {}]
  %s9 = inlined_call_operand.hbm [shape: bf16[128,128], index: 9, kind: input, shape index: {}]
  %s10 = inlined_call_operand.vmem [shape: f32[1,128], index: 10, kind: input, shape index: {}]
  %s11 = inlined_call_operand.hbm [shape: bf16[128,128], index: 11, kind: input, shape index: {}]
  %s12 = inlined_call_operand.hbm [shape: bf16[128,128], index: 12, kind: input, shape index: {}]
  %s13 = inlined_call_operand.hbm [shape: bf16[128,128], index: 13, kind: input, shape index: {}]
  %s14 = inlined_call_operand.vmem [shape: f32[8,128], index: 14, kind: input, shape index: {}]
  %s15 = inlined_call_operand.hbm [shape: f32[8,128], index: 15, kind: output, shape index: {}]
  %s16 = sld [smem:[#allocation0]]
  $region145: #{tpu_custom_call.1} parent=0
    _
  %s18 = ssub.s32 1, %s16
  %s19 = scalar_select 0, %s18, %s16
  $region1: #{tpu_custom_call.1} parent=0
    #allocation4 [shape = 'u8[524288]{0}', space=vmem, size = 0x80000, scoped, tag = 'input window, operand 0']
    #allocation5 [shape = 's32[2]{0}', space=sflag, size = 0x8, scoped, tag = 'scoped memory for tpu_custom_call.1']
    #allocation6 [shape = 's32[2]{0}', space=sflag, size = 0x8, scoped, tag = 'scoped memory for tpu_custom_call.1']
    #allocation7 [shape = 'u8[131072]{0}', space=vmem, size = 0x20000, scoped, tag = 'input window, operand 1, single buffered']
    #allocation8 [shape = 's32[1]{0}', space=sflag, size = 0x4, scoped, tag = 'scoped memory for tpu_custom_call.1']
    #allocation9 [shape = 'u8[8192]{0}', space=vmem, size = 0x2000, scoped, tag = 'input window, operand 2']
    #allocation10 [shape = 'u8[32768]{0}', space=vmem, size = 0x8000, scoped, tag = 'input window, operand 3, single buffered']
    #allocation11 [shape = 'u8[32768]{0}', space=vmem, size = 0x8000, scoped, tag = 'input window, operand 5, single buffered']
    #allocation12 [shape = 's32[1]{0}', space=sflag, size = 0x4, scoped, tag = 'scoped memory for tpu_custom_call.1']
    #allocation13 [shape = 'u8[32768]{0}', space=vmem, size = 0x8000, scoped, tag = 'input window, operand 7, single buffered']
    #allocation14 [shape = 'u8[32768]{0}', space=vmem, size = 0x8000, scoped, tag = 'input window, operand 9, single buffered']
    #allocation15 [shape = 's32[1]{0}', space=sflag, size = 0x4, scoped, tag = 'scoped memory for tpu_custom_call.1']
    #allocation16 [shape = 'u8[32768]{0}', space=vmem, size = 0x8000, scoped, tag = 'input window, operand 11, single buffered']
    #allocation17 [shape = 'u8[32768]{0}', space=vmem, size = 0x8000, scoped, tag = 'input window, operand 12, single buffered']
    #allocation18 [shape = 's32[1]{0}', space=sflag, size = 0x4, scoped, tag = 'scoped memory for tpu_custom_call.1']
    #allocation19 [shape = 'u8[32768]{0}', space=vmem, size = 0x8000, scoped, tag = 'input window, operand 13, single buffered']
    #allocation20 [shape = 'u8[4096]{0}', space=vmem, size = 0x1000, scoped, tag = 'output window, operand 0, single buffered']
    %20 = vsyncpa [#allocation5], 0
    %s21 = scalar_lea.sflag [#allocation5], 1
    %22 = vsyncpa %s21, 0
    %23 = vsyncpa [#allocation8], 0
    %24 = vsyncpa [#allocation12], 0
    %25 = vsyncpa [#allocation15], 0
    %26 = vsyncpa [#allocation18], 0
    %27 = vsyncpa [#allocation6], 0
    loop: start=0, step=1, limit=6
    $region2: #{tpu_custom_call.1} parent=1 // loop_pre_header
      _
    $region3: #{tpu_custom_call.1} parent=1 // loop_header
      %s29 = sphi 0, %s33
      %p30 = scmp.ge.s32.totalorder %s29, 6
      %s36 = sphi 0, %s48
      %s37 = sphi 0, %s44
      %s38 = sphi 0, %s36
      %s39 = sphi 0, %s37
      %s40 = sphi 0, %s38
      %s41 = sphi 0, %s39
      %s51 = sphi 0, %s53
      %s54 = sphi 0, %s51
      %s55 = sphi 0, %s54
      %s71 = sphi 0, %s55
      %s75 = sphi 0, %s75
      %s77 = sphi 0, %s75
      %s78 = sphi 0, %s77
      %s92 = sphi 0, %s78
      %s98 = sphi 0, %s100
      %s101 = sphi 0, %s98
      %s102 = sphi 0, %s101
      %s118 = sphi 0, %s102
      %s122 = sphi 0, %s122
      %s124 = sphi 0, %s122
      %s125 = sphi 0, %s124
      %s139 = sphi 0, %s125
      %s143 = sphi 0, %s143
      %s145 = sphi 0, %s143
      %s146 = sphi 0, %s145
      %s160 = sphi 0, %s146
      %s164 = sphi 0, %s164
      %s166 = sphi 0, %s164
      %s167 = sphi 0, %s166
      %s181 = sphi 0, %s167
      %s185 = sphi 0, %s185
      %s187 = sphi 0, %s185
      %s188 = sphi 0, %s187
      %s202 = sphi 0, %s188
      %s206 = sphi 0, %s206
      %s208 = sphi 0, %s206
      %s209 = sphi 0, %s208
      %s223 = sphi 0, %s209
      %s227 = sphi 0, %s227
      %s229 = sphi 0, %s227
      %s230 = sphi 0, %s229
      %s244 = sphi 0, %s230
      %s248 = sphi 0, %s248
      %s250 = sphi 0, %s248
      %s251 = sphi 0, %s250
      %s265 = sphi 0, %s251
      %s269 = sphi 0, %s269
      %s271 = sphi 0, %s269
      %s272 = sphi 0, %s271
      %s286 = sphi 0, %s272
      %s290 = sphi 0, %s290
      %s292 = sphi 0, %s290
      %s293 = sphi 0, %s292
      %s307 = sphi 0, %s293
      %s311 = sphi 0, %s311
      %s313 = sphi 0, %s311
      %s314 = sphi 0, %s313
      %s328 = sphi 0, %s314
      %s332 = sphi 0, %s332
      %s334 = sphi 0, %s332
      %s335 = sphi 0, %s334
      %s349 = sphi 0, %s335
      %s353 = sphi 0, %s353
      %s355 = sphi 0, %s353
      %s356 = sphi 0, %s355
      %s370 = sphi 0, %s356
      %s374 = sphi 0, %s374
      %s376 = sphi 0, %s374
      %s377 = sphi 0, %s376
      %s391 = sphi 0, %s377
    $region4: #{tpu_custom_call.1} parent=1 // loop_header_branch
      %32 = sbr.rel (%p30) target = $region8
    $region5: #{tpu_custom_call.1} parent=1 // loop_body
      %s34 = ssub.s32 %s29, 1
      %s35 = ssub.s32 %s29, 2
      %s42 = sadd.s32 1, %s37
      %p43 = scmp.ge.s32.totalorder %s42, 2
      %s44 = scalar_select %p43, 0, %s42
      %s45 = sadd.s32 1, %s36
      %s46 = scalar_select %p43, %s45, %s36
      %p47 = scmp.ge.s32.totalorder %s46, 2
      %s48 = scalar_select %p47, 0, %s46
      %s49 = ssub.s32 %s37, %s44
      %p50 = scmp.eq.s32.totalorder %s49, 0
      %s52 = sadd.s32 %s51, 1
      %s53 = scalar_select %p50, %s51, %s52
      %p56 = pneg %p50
      %p57 = scmp.eq.s32.totalorder %s29, 3
      %p58 = por %p56, %p57
      %p59 = scmp.ne.s32.totalorder %s51, %s54
      %p60 = scmp.eq.s32.totalorder %s29, 0
      %p61 = por %p59, %p60
      %p62 = scmp.ne.s32.totalorder %s51, %s54
      %p63 = scmp.eq.s32.totalorder %s34, 3
      %p64 = por %p62, %p63
      %p65 = scmp.ne.s32.totalorder %s54, %s55
      %p66 = scmp.eq.s32.totalorder %s34, 0
      %p67 = por %p65, %p66
      %p68 = scmp.ne.s32.totalorder %s54, %s55
      %p69 = scmp.eq.s32.totalorder %s35, 3
      %p70 = por %p68, %p69
      %p72 = scmp.ne.s32.totalorder %s55, %s71
      %p73 = scmp.eq.s32.totalorder %s35, 0
      %p74 = por %p72, %p73
      %s76 = sadd.s32 %s75, 1
      %p79 = scmp.eq.s32.totalorder %s29, 3
      %p80 = scmp.ne.s32.totalorder %s75, %s77
      %p81 = scmp.eq.s32.totalorder %s29, 0
      %p82 = por %p80, %p81
      %p83 = scmp.ne.s32.totalorder %s75, %s77
      %p84 = scmp.eq.s32.totalorder %s34, 3
      %p85 = por %p83, %p84
      %p86 = scmp.ne.s32.totalorder %s77, %s78
      %p87 = scmp.eq.s32.totalorder %s34, 0
      %p88 = por %p86, %p87
      %p89 = scmp.ne.s32.totalorder %s77, %s78
      %p90 = scmp.eq.s32.totalorder %s35, 3
      %p91 = por %p89, %p90
      %p93 = scmp.ne.s32.totalorder %s78, %s92
      %p94 = scmp.eq.s32.totalorder %s35, 0
      %p95 = por %p93, %p94
      %s96 = ssub.s32 %s37, %s44
      %p97 = scmp.eq.s32.totalorder %s96, 0
      %s99 = sadd.s32 %s98, 1
      %s100 = scalar_select %p97, %s98, %s99
      %p103 = pneg %p97
      %p104 = scmp.eq.s32.totalorder %s29, 3
      %p105 = por %p103, %p104
      %p106 = scmp.ne.s32.totalorder %s98, %s101
      %p107 = scmp.eq.s32.totalorder %s29, 0
      %p108 = por %p106, %p107
      %p109 = scmp.ne.s32.totalorder %s98, %s101
      %p110 = scmp.eq.s32.totalorder %s34, 3
      %p111 = por %p109, %p110
      %p112 = scmp.ne.s32.totalorder %s101, %s102
      %p113 = scmp.eq.s32.totalorder %s34, 0
      %p114 = por %p112, %p113
      %p115 = scmp.ne.s32.totalorder %s101, %s102
      %p116 = scmp.eq.s32.totalorder %s35, 3
      %p117 = por %p115, %p116
      %p119 = scmp.ne.s32.totalorder %s102, %s118
      %p120 = scmp.eq.s32.totalorder %s35, 0
      %p121 = por %p119, %p120
      %s123 = sadd.s32 %s122, 1
      %p126 = scmp.eq.s32.totalorder %s29, 3
      %p127 = scmp.ne.s32.totalorder %s122, %s124
      %p128 = scmp.eq.s32.totalorder %s29, 0
      %p129 = por %p127, %p128
      %p130 = scmp.ne.s32.totalorder %s122, %s124
      %p131 = scmp.eq.s32.totalorder %s34, 3
      %p132 = por %p130, %p131
      %p133 = scmp.ne.s32.totalorder %s124, %s125
      %p134 = scmp.eq.s32.totalorder %s34, 0
      %p135 = por %p133, %p134
      %p136 = scmp.ne.s32.totalorder %s124, %s125
      %p137 = scmp.eq.s32.totalorder %s35, 3
      %p138 = por %p136, %p137
      %p140 = scmp.ne.s32.totalorder %s125, %s139
      %p141 = scmp.eq.s32.totalorder %s35, 0
      %p142 = por %p140, %p141
      %s144 = sadd.s32 %s143, 1
      %p147 = scmp.eq.s32.totalorder %s29, 3
      %p148 = scmp.ne.s32.totalorder %s143, %s145
      %p149 = scmp.eq.s32.totalorder %s29, 0
      %p150 = por %p148, %p149
      %p151 = scmp.ne.s32.totalorder %s143, %s145
      %p152 = scmp.eq.s32.totalorder %s34, 3
      %p153 = por %p151, %p152
      %p154 = scmp.ne.s32.totalorder %s145, %s146
      %p155 = scmp.eq.s32.totalorder %s34, 0
      %p156 = por %p154, %p155
      %p157 = scmp.ne.s32.totalorder %s145, %s146
      %p158 = scmp.eq.s32.totalorder %s35, 3
      %p159 = por %p157, %p158
      %p161 = scmp.ne.s32.totalorder %s146, %s160
      %p162 = scmp.eq.s32.totalorder %s35, 0
      %p163 = por %p161, %p162
      %s165 = sadd.s32 %s164, 1
      %p168 = scmp.eq.s32.totalorder %s29, 3
      %p169 = scmp.ne.s32.totalorder %s164, %s166
      %p170 = scmp.eq.s32.totalorder %s29, 0
      %p171 = por %p169, %p170
      %p172 = scmp.ne.s32.totalorder %s164, %s166
      %p173 = scmp.eq.s32.totalorder %s34, 3
      %p174 = por %p172, %p173
      %p175 = scmp.ne.s32.totalorder %s166, %s167
      %p176 = scmp.eq.s32.totalorder %s34, 0
      %p177 = por %p175, %p176
      %p178 = scmp.ne.s32.totalorder %s166, %s167
      %p179 = scmp.eq.s32.totalorder %s35, 3
      %p180 = por %p178, %p179
      %p182 = scmp.ne.s32.totalorder %s167, %s181
      %p183 = scmp.eq.s32.totalorder %s35, 0
      %p184 = por %p182, %p183
      %s186 = sadd.s32 %s185, 1
      %p189 = scmp.eq.s32.totalorder %s29, 3
      %p190 = scmp.ne.s32.totalorder %s185, %s187
      %p191 = scmp.eq.s32.totalorder %s29, 0
      %p192 = por %p190, %p191
      %p193 = scmp.ne.s32.totalorder %s185, %s187
      %p194 = scmp.eq.s32.totalorder %s34, 3
      %p195 = por %p193, %p194
      %p196 = scmp.ne.s32.totalorder %s187, %s188
      %p197 = scmp.eq.s32.totalorder %s34, 0
      %p198 = por %p196, %p197
      %p199 = scmp.ne.s32.totalorder %s187, %s188
      %p200 = scmp.eq.s32.totalorder %s35, 3
      %p201 = por %p199, %p200
      %p203 = scmp.ne.s32.totalorder %s188, %s202
      %p204 = scmp.eq.s32.totalorder %s35, 0
      %p205 = por %p203, %p204
      %s207 = sadd.s32 %s206, 1
      %p210 = scmp.eq.s32.totalorder %s29, 3
      %p211 = scmp.ne.s32.totalorder %s206, %s208
      %p212 = scmp.eq.s32.totalorder %s29, 0
      %p213 = por %p211, %p212
      %p214 = scmp.ne.s32.totalorder %s206, %s208
      %p215 = scmp.eq.s32.totalorder %s34, 3
      %p216 = por %p214, %p215
      %p217 = scmp.ne.s32.totalorder %s208, %s209
      %p218 = scmp.eq.s32.totalorder %s34, 0
      %p219 = por %p217, %p218
      %p220 = scmp.ne.s32.totalorder %s208, %s209
      %p221 = scmp.eq.s32.totalorder %s35, 3
      %p222 = por %p220, %p221
      %p224 = scmp.ne.s32.totalorder %s209, %s223
      %p225 = scmp.eq.s32.totalorder %s35, 0
      %p226 = por %p224, %p225
      %s228 = sadd.s32 %s227, 1
      %p231 = scmp.eq.s32.totalorder %s29, 3
      %p232 = scmp.ne.s32.totalorder %s227, %s229
      %p233 = scmp.eq.s32.totalorder %s29, 0
      %p234 = por %p232, %p233
      %p235 = scmp.ne.s32.totalorder %s227, %s229
      %p236 = scmp.eq.s32.totalorder %s34, 3
      %p237 = por %p235, %p236
      %p238 = scmp.ne.s32.totalorder %s229, %s230
      %p239 = scmp.eq.s32.totalorder %s34, 0
      %p240 = por %p238, %p239
      %p241 = scmp.ne.s32.totalorder %s229, %s230
      %p242 = scmp.eq.s32.totalorder %s35, 3
      %p243 = por %p241, %p242
      %p245 = scmp.ne.s32.totalorder %s230, %s244
      %p246 = scmp.eq.s32.totalorder %s35, 0
      %p247 = por %p245, %p246
      %s249 = sadd.s32 %s248, 1
      %p252 = scmp.eq.s32.totalorder %s29, 3
      %p253 = scmp.ne.s32.totalorder %s248, %s250
      %p254 = scmp.eq.s32.totalorder %s29, 0
      %p255 = por %p253, %p254
      %p256 = scmp.ne.s32.totalorder %s248, %s250
      %p257 = scmp.eq.s32.totalorder %s34, 3
      %p258 = por %p256, %p257
      %p259 = scmp.ne.s32.totalorder %s250, %s251
      %p260 = scmp.eq.s32.totalorder %s34, 0
      %p261 = por %p259, %p260
      %p262 = scmp.ne.s32.totalorder %s250, %s251
      %p263 = scmp.eq.s32.totalorder %s35, 3
      %p264 = por %p262, %p263
      %p266 = scmp.ne.s32.totalorder %s251, %s265
      %p267 = scmp.eq.s32.totalorder %s35, 0
      %p268 = por %p266, %p267
      %s270 = sadd.s32 %s269, 1
      %p273 = scmp.eq.s32.totalorder %s29, 3
      %p274 = scmp.ne.s32.totalorder %s269, %s271
      %p275 = scmp.eq.s32.totalorder %s29, 0
      %p276 = por %p274, %p275
      %p277 = scmp.ne.s32.totalorder %s269, %s271
      %p278 = scmp.eq.s32.totalorder %s34, 3
      %p279 = por %p277, %p278
      %p280 = scmp.ne.s32.totalorder %s271, %s272
      %p281 = scmp.eq.s32.totalorder %s34, 0
      %p282 = por %p280, %p281
      %p283 = scmp.ne.s32.totalorder %s271, %s272
      %p284 = scmp.eq.s32.totalorder %s35, 3
      %p285 = por %p283, %p284
      %p287 = scmp.ne.s32.totalorder %s272, %s286
      %p288 = scmp.eq.s32.totalorder %s35, 0
      %p289 = por %p287, %p288
      %s291 = sadd.s32 %s290, 1
      %p294 = scmp.eq.s32.totalorder %s29, 3
      %p295 = scmp.ne.s32.totalorder %s290, %s292
      %p296 = scmp.eq.s32.totalorder %s29, 0
      %p297 = por %p295, %p296
      %p298 = scmp.ne.s32.totalorder %s290, %s292
      %p299 = scmp.eq.s32.totalorder %s34, 3
      %p300 = por %p298, %p299
      %p301 = scmp.ne.s32.totalorder %s292, %s293
      %p302 = scmp.eq.s32.totalorder %s34, 0
      %p303 = por %p301, %p302
      %p304 = scmp.ne.s32.totalorder %s292, %s293
      %p305 = scmp.eq.s32.totalorder %s35, 3
      %p306 = por %p304, %p305
      %p308 = scmp.ne.s32.totalorder %s293, %s307
      %p309 = scmp.eq.s32.totalorder %s35, 0
      %p310 = por %p308, %p309
      %s312 = sadd.s32 %s311, 1
      %p315 = scmp.eq.s32.totalorder %s29, 3
      %p316 = scmp.ne.s32.totalorder %s311, %s313
      %p317 = scmp.eq.s32.totalorder %s29, 0
      %p318 = por %p316, %p317
      %p319 = scmp.ne.s32.totalorder %s311, %s313
      %p320 = scmp.eq.s32.totalorder %s34, 3
      %p321 = por %p319, %p320
      %p322 = scmp.ne.s32.totalorder %s313, %s314
      %p323 = scmp.eq.s32.totalorder %s34, 0
      %p324 = por %p322, %p323
      %p325 = scmp.ne.s32.totalorder %s313, %s314
      %p326 = scmp.eq.s32.totalorder %s35, 3
      %p327 = por %p325, %p326
      %p329 = scmp.ne.s32.totalorder %s314, %s328
      %p330 = scmp.eq.s32.totalorder %s35, 0
      %p331 = por %p329, %p330
      %s333 = sadd.s32 %s332, 1
      %p336 = scmp.eq.s32.totalorder %s29, 3
      %p337 = scmp.ne.s32.totalorder %s332, %s334
      %p338 = scmp.eq.s32.totalorder %s29, 0
      %p339 = por %p337, %p338
      %p340 = scmp.ne.s32.totalorder %s332, %s334
      %p341 = scmp.eq.s32.totalorder %s34, 3
      %p342 = por %p340, %p341
      %p343 = scmp.ne.s32.totalorder %s334, %s335
      %p344 = scmp.eq.s32.totalorder %s34, 0
      %p345 = por %p343, %p344
      %p346 = scmp.ne.s32.totalorder %s334, %s335
      %p347 = scmp.eq.s32.totalorder %s35, 3
      %p348 = por %p346, %p347
      %p350 = scmp.ne.s32.totalorder %s335, %s349
      %p351 = scmp.eq.s32.totalorder %s35, 0
      %p352 = por %p350, %p351
      %s354 = sadd.s32 %s353, 1
      %p357 = scmp.eq.s32.totalorder %s29, 3
      %p358 = scmp.ne.s32.totalorder %s353, %s355
      %p359 = scmp.eq.s32.totalorder %s29, 0
      %p360 = por %p358, %p359
      %p361 = scmp.ne.s32.totalorder %s353, %s355
      %p362 = scmp.eq.s32.totalorder %s34, 3
      %p363 = por %p361, %p362
      %p364 = scmp.ne.s32.totalorder %s355, %s356
      %p365 = scmp.eq.s32.totalorder %s34, 0
      %p366 = por %p364, %p365
      %p367 = scmp.ne.s32.totalorder %s355, %s356
      %p368 = scmp.eq.s32.totalorder %s35, 3
      %p369 = por %p367, %p368
      %p371 = scmp.ne.s32.totalorder %s356, %s370
      %p372 = scmp.eq.s32.totalorder %s35, 0
      %p373 = por %p371, %p372
      %s375 = sadd.s32 %s374, 1
      %p378 = scmp.eq.s32.totalorder %s29, 3
      %p379 = scmp.ne.s32.totalorder %s374, %s376
      %p380 = scmp.eq.s32.totalorder %s29, 0
      %p381 = por %p379, %p380
      %p382 = scmp.ne.s32.totalorder %s374, %s376
      %p383 = scmp.eq.s32.totalorder %s34, 3
      %p384 = por %p382, %p383
      %p385 = scmp.ne.s32.totalorder %s376, %s377
      %p386 = scmp.eq.s32.totalorder %s34, 0
      %p387 = por %p385, %p386
      %p388 = scmp.ne.s32.totalorder %s376, %s377
      %p389 = scmp.eq.s32.totalorder %s35, 3
      %p390 = por %p388, %p389
      %p392 = scmp.ne.s32.totalorder %s377, %s391
      %p393 = scmp.eq.s32.totalorder %s35, 0
      %p394 = por %p392, %p393
      %p395 = scmp.le.s32.totalorder 1, %s29
      %p396 = scmp.lt.s32.totalorder %s29, 5
      %p397 = pnand %p395, %p396
      %p398 = pneg %p397
      // Predicated region
      $region9: #{tpu_custom_call.1} parent=5 // pred_check
        _
      $region10: #{tpu_custom_call.1} parent=5 // pred_check_branch
        %400 = sbr.rel (%p397) target = $region12
      $region11: #{tpu_custom_call.1} parent=5 // pred_region
        %s401 = ssub.s32 %s29, 1
        // Predicated region
        $region13: #{tpu_custom_call.1} parent=11 // pred_check
          %p402 = pneg %p88
        $region14: #{tpu_custom_call.1} parent=11 // pred_check_branch
          %404 = sbr.rel (%p402) target = $region16
        $region15: #{tpu_custom_call.1} parent=11 // pred_region
          %s406 = ssub.s32 4096, 4096
          %407 = vsyncadd [#allocation8], %s406
          %s408 = sshll.u32 [#allocation7], 4
          %s409 = int_to_ptr.vmem [resolvable:$true] %s408
          %414 = dma.hbm_to_vmem [thread:$0]  %s1, 4096, %s409, [#allocation8], 64, 64, 4
        $region16: #{tpu_custom_call.1} parent=11 // pred_fallthru
          _
        // Predicated region
        $region17: #{tpu_custom_call.1} parent=11 // pred_check
          %p415 = pneg %p135
        $region18: #{tpu_custom_call.1} parent=11 // pred_check_branch
          %417 = sbr.rel (%p415) target = $region20
        $region19: #{tpu_custom_call.1} parent=11 // pred_region
          %s419 = ssub.s32 1024, 1024
          %420 = vsyncadd [#allocation8], %s419
          %s421 = sshll.u32 [#allocation10], 4
          %s422 = int_to_ptr.vmem [resolvable:$true] %s421
          %427 = dma.hbm_to_vmem [thread:$0]  %s3, 1024, %s422, [#allocation8], 64, 64, 4
        $region20: #{tpu_custom_call.1} parent=11 // pred_fallthru
          _
        // Predicated region
        $region21: #{tpu_custom_call.1} parent=11 // pred_check
          %p428 = pneg %p156
        $region22: #{tpu_custom_call.1} parent=11 // pred_check_branch
          %430 = sbr.rel (%p428) target = $region24
        $region23: #{tpu_custom_call.1} parent=11 // pred_region
          _
        $region24: #{tpu_custom_call.1} parent=11 // pred_fallthru
          _
        // Predicated region
        $region25: #{tpu_custom_call.1} parent=11 // pred_check
          %p431 = pneg %p177
        $region26: #{tpu_custom_call.1} parent=11 // pred_check_branch
          %433 = sbr.rel (%p431) target = $region28
        $region27: #{tpu_custom_call.1} parent=11 // pred_region
          %s435 = ssub.s32 1024, 1024
          %436 = vsyncadd [#allocation12], %s435
          %s437 = sshll.u32 [#allocation11], 4
          %s438 = int_to_ptr.vmem [resolvable:$true] %s437
          %443 = dma.hbm_to_vmem [thread:$0]  %s5, 1024, %s438, [#allocation12], 64, 64, 4
        $region28: #{tpu_custom_call.1} parent=11 // pred_fallthru
          _
        // Predicated region
        $region29: #{tpu_custom_call.1} parent=11 // pred_check
          %p444 = pneg %p198
        $region30: #{tpu_custom_call.1} parent=11 // pred_check_branch
          %446 = sbr.rel (%p444) target = $region32
        $region31: #{tpu_custom_call.1} parent=11 // pred_region
          _
        $region32: #{tpu_custom_call.1} parent=11 // pred_fallthru
          _
        // Predicated region
        $region33: #{tpu_custom_call.1} parent=11 // pred_check
          %p447 = pneg %p219
        $region34: #{tpu_custom_call.1} parent=11 // pred_check_branch
          %449 = sbr.rel (%p447) target = $region36
        $region35: #{tpu_custom_call.1} parent=11 // pred_region
          %s451 = ssub.s32 1024, 1024
          %452 = vsyncadd [#allocation12], %s451
          %s453 = sshll.u32 [#allocation13], 4
          %s454 = int_to_ptr.vmem [resolvable:$true] %s453
          %459 = dma.hbm_to_vmem [thread:$0]  %s7, 1024, %s454, [#allocation12], 64, 64, 4
        $region36: #{tpu_custom_call.1} parent=11 // pred_fallthru
          _
        // Predicated region
        $region37: #{tpu_custom_call.1} parent=11 // pred_check
          %p460 = pneg %p240
        $region38: #{tpu_custom_call.1} parent=11 // pred_check_branch
          %462 = sbr.rel (%p460) target = $region40
        $region39: #{tpu_custom_call.1} parent=11 // pred_region
          _
        $region40: #{tpu_custom_call.1} parent=11 // pred_fallthru
          _
        // Predicated region
        $region41: #{tpu_custom_call.1} parent=11 // pred_check
          %p463 = pneg %p261
        $region42: #{tpu_custom_call.1} parent=11 // pred_check_branch
          %465 = sbr.rel (%p463) target = $region44
        $region43: #{tpu_custom_call.1} parent=11 // pred_region
          %s467 = ssub.s32 1024, 1024
          %468 = vsyncadd [#allocation15], %s467
          %s469 = sshll.u32 [#allocation14], 4
          %s470 = int_to_ptr.vmem [resolvable:$true] %s469
          %475 = dma.hbm_to_vmem [thread:$0]  %s9, 1024, %s470, [#allocation15], 64, 64, 4
        $region44: #{tpu_custom_call.1} parent=11 // pred_fallthru
          _
        // Predicated region
        $region45: #{tpu_custom_call.1} parent=11 // pred_check
          %p476 = pneg %p282
        $region46: #{tpu_custom_call.1} parent=11 // pred_check_branch
          %478 = sbr.rel (%p476) target = $region48
        $region47: #{tpu_custom_call.1} parent=11 // pred_region
          _
        $region48: #{tpu_custom_call.1} parent=11 // pred_fallthru
          _
        // Predicated region
        $region49: #{tpu_custom_call.1} parent=11 // pred_check
          %p479 = pneg %p303
        $region50: #{tpu_custom_call.1} parent=11 // pred_check_branch
          %481 = sbr.rel (%p479) target = $region52
        $region51: #{tpu_custom_call.1} parent=11 // pred_region
          %s483 = ssub.s32 1024, 1024
          %484 = vsyncadd [#allocation15], %s483
          %s485 = sshll.u32 [#allocation16], 4
          %s486 = int_to_ptr.vmem [resolvable:$true] %s485
          %491 = dma.hbm_to_vmem [thread:$0]  %s11, 1024, %s486, [#allocation15], 64, 64, 4
        $region52: #{tpu_custom_call.1} parent=11 // pred_fallthru
          _
        // Predicated region
        $region53: #{tpu_custom_call.1} parent=11 // pred_check
          %p492 = pneg %p324
        $region54: #{tpu_custom_call.1} parent=11 // pred_check_branch
          %494 = sbr.rel (%p492) target = $region56
        $region55: #{tpu_custom_call.1} parent=11 // pred_region
          %s496 = ssub.s32 1024, 1024
          %497 = vsyncadd [#allocation18], %s496
          %s498 = sshll.u32 [#allocation17], 4
          %s499 = int_to_ptr.vmem [resolvable:$true] %s498
          %504 = dma.hbm_to_vmem [thread:$0]  %s12, 1024, %s499, [#allocation18], 64, 64, 4
        $region56: #{tpu_custom_call.1} parent=11 // pred_fallthru
          _
        // Predicated region
        $region57: #{tpu_custom_call.1} parent=11 // pred_check
          %p505 = pneg %p345
        $region58: #{tpu_custom_call.1} parent=11 // pred_check_branch
          %507 = sbr.rel (%p505) target = $region60
        $region59: #{tpu_custom_call.1} parent=11 // pred_region
          %s509 = ssub.s32 1024, 1024
          %510 = vsyncadd [#allocation18], %s509
          %s511 = sshll.u32 [#allocation19], 4
          %s512 = int_to_ptr.vmem [resolvable:$true] %s511
          %517 = dma.hbm_to_vmem [thread:$0]  %s13, 1024, %s512, [#allocation18], 64, 64, 4
        $region60: #{tpu_custom_call.1} parent=11 // pred_fallthru
          _
        // Predicated region
        $region61: #{tpu_custom_call.1} parent=11 // pred_check
          %p518 = pneg %p366
        $region62: #{tpu_custom_call.1} parent=11 // pred_check_branch
          %520 = sbr.rel (%p518) target = $region64
        $region63: #{tpu_custom_call.1} parent=11 // pred_region
          _
        $region64: #{tpu_custom_call.1} parent=11 // pred_fallthru
          _
      $region12: #{tpu_custom_call.1} parent=5 // pred_fallthru
        _
      %p521 = scmp.lt.s32.totalorder %s29, 4
      // Predicated region
      $region65: #{tpu_custom_call.1} parent=5 // pred_check
        %p522 = pneg %p521
      $region66: #{tpu_custom_call.1} parent=5 // pred_check_branch
        %524 = sbr.rel (%p522) target = $region68
      $region67: #{tpu_custom_call.1} parent=5 // pred_region
        // Predicated region
        $region69: #{tpu_custom_call.1} parent=67 // pred_check
          %p525 = pneg %p61
        $region70: #{tpu_custom_call.1} parent=67 // pred_check_branch
          %527 = sbr.rel (%p525) target = $region72
        $region71: #{tpu_custom_call.1} parent=67 // pred_region
          %s528 = sand.u32 %s29, 1
          %s529 = scalar_lea.sflag [#allocation5], %s528
          %s530 = sand.u32 %s51, 1
          %s531 = smul.addr %s530, 512
          %s532 = scalar_lea.vmem [#allocation4], %s531
          %s533 = smul.u32 32, %s37
          %s535 = ssub.s32 8192, 8192
          %536 = vsyncadd %s529, %s535
          %s537 = smul.addr %s533, 4
          %s538 = smul.addr %s537, 64
          %s539 = scalar_lea.hbm %s0, %s538
          %s540 = sshll.u32 %s532, 4
          %s541 = int_to_ptr.vmem [resolvable:$true] %s540
          %546 = dma.hbm_to_vmem [thread:$0]  %s539, 8192, %s541, %s529, 256, 256, 16
        $region72: #{tpu_custom_call.1} parent=67 // pred_fallthru
          _
        // Predicated region
        $region73: #{tpu_custom_call.1} parent=67 // pred_check
          %p547 = pneg %p108
        $region74: #{tpu_custom_call.1} parent=67 // pred_check_branch
          %549 = sbr.rel (%p547) target = $region76
        $region75: #{tpu_custom_call.1} parent=67 // pred_region
          %s550 = sand.u32 %s29, 1
          %s551 = scalar_lea.sflag [#allocation5], %s550
          %s552 = sand.u32 %s98, 1
          %s553 = smul.addr %s552, 8
          %s554 = scalar_lea.vmem [#allocation9], %s553
          %s555 = smul.u32 2, %s37
          %s557 = ssub.s32 128, 128
          %558 = vsyncadd %s551, %s557
          %s559 = smul.addr %s555, 64
          %s560 = scalar_lea.hbm %s2, %s559
          %s562 = sshll.u32 %s554, 4
          %s563 = int_to_ptr.vmem [resolvable:$true] %s562
          %565 = dma.hbm_to_vmem [thread:$0]  %s560, 128, %s563, %s551
        $region76: #{tpu_custom_call.1} parent=67 // pred_fallthru
          _
      $region68: #{tpu_custom_call.1} parent=5 // pred_fallthru
        _
      %p566 = scmp.le.s32.totalorder 1, %s29
      %p567 = scmp.lt.s32.totalorder %s29, 5
      %p568 = pnand %p566, %p567
      %p569 = pneg %p568
      // Predicated region
      $region77: #{tpu_custom_call.1} parent=5 // pred_check
        _
      $region78: #{tpu_custom_call.1} parent=5 // pred_check_branch
        %571 = sbr.rel (%p568) target = $region80
      $region79: #{tpu_custom_call.1} parent=5 // pred_region
        %s572 = ssub.s32 %s29, 1
        %s573 = sand.u32 %s34, 1
        %s574 = scalar_lea.sflag [#allocation5], %s573
        %s575 = sand.u32 %s54, 1
        %s576 = smul.addr %s575, 512
        %s577 = scalar_lea.vmem [#allocation4], %s576
        // Predicated region
        $region81: #{tpu_custom_call.1} parent=79 // pred_check
          %p578 = pneg %p67
        $region82: #{tpu_custom_call.1} parent=79 // pred_check_branch
          %580 = sbr.rel (%p578) target = $region84
        $region83: #{tpu_custom_call.1} parent=79 // pred_region
          %581 = dma.done %s574, 8192
        $region84: #{tpu_custom_call.1} parent=79 // pred_fallthru
          _
        // Predicated region
        $region85: #{tpu_custom_call.1} parent=79 // pred_check
          %p582 = pneg %p88
        $region86: #{tpu_custom_call.1} parent=79 // pred_check_branch
          %584 = sbr.rel (%p582) target = $region88
        $region87: #{tpu_custom_call.1} parent=79 // pred_region
          %585 = dma.done [#allocation8], 4096
        $region88: #{tpu_custom_call.1} parent=79 // pred_fallthru
          _
        %s586 = sand.u32 %s34, 1
        %s587 = scalar_lea.sflag [#allocation5], %s586
        %s588 = sand.u32 %s101, 1
        %s589 = smul.addr %s588, 8
        %s590 = scalar_lea.vmem [#allocation9], %s589
        // Predicated region
        $region89: #{tpu_custom_call.1} parent=79 // pred_check
          %p591 = pneg %p114
        $region90: #{tpu_custom_call.1} parent=79 // pred_check_branch
          %593 = sbr.rel (%p591) target = $region92
        $region91: #{tpu_custom_call.1} parent=79 // pred_region
          %594 = dma.done %s587, 128
        $region92: #{tpu_custom_call.1} parent=79 // pred_fallthru
          _
        // Predicated region
        $region93: #{tpu_custom_call.1} parent=79 // pred_check
          %p595 = pneg %p135
        $region94: #{tpu_custom_call.1} parent=79 // pred_check_branch
          %597 = sbr.rel (%p595) target = $region96
        $region95: #{tpu_custom_call.1} parent=79 // pred_region
          %598 = dma.done [#allocation8], 1024
        $region96: #{tpu_custom_call.1} parent=79 // pred_fallthru
          _
        // Predicated region
        $region97: #{tpu_custom_call.1} parent=79 // pred_check
          %p599 = pneg %p177
        $region98: #{tpu_custom_call.1} parent=79 // pred_check_branch
          %601 = sbr.rel (%p599) target = $region100
        $region99: #{tpu_custom_call.1} parent=79 // pred_region
          %602 = dma.done [#allocation12], 1024
        $region100: #{tpu_custom_call.1} parent=79 // pred_fallthru
          _
        // Predicated region
        $region101: #{tpu_custom_call.1} parent=79 // pred_check
          %p603 = pneg %p219
        $region102: #{tpu_custom_call.1} parent=79 // pred_check_branch
          %605 = sbr.rel (%p603) target = $region104
        $region103: #{tpu_custom_call.1} parent=79 // pred_region
          %606 = dma.done [#allocation12], 1024
        $region104: #{tpu_custom_call.1} parent=79 // pred_fallthru
          _
        // Predicated region
        $region105: #{tpu_custom_call.1} parent=79 // pred_check
          %p607 = pneg %p261
        $region106: #{tpu_custom_call.1} parent=79 // pred_check_branch
          %609 = sbr.rel (%p607) target = $region108
        $region107: #{tpu_custom_call.1} parent=79 // pred_region
          %610 = dma.done [#allocation15], 1024
        $region108: #{tpu_custom_call.1} parent=79 // pred_fallthru
          _
        // Predicated region
        $region109: #{tpu_custom_call.1} parent=79 // pred_check
          %p611 = pneg %p303
        $region110: #{tpu_custom_call.1} parent=79 // pred_check_branch
          %613 = sbr.rel (%p611) target = $region112
        $region111: #{tpu_custom_call.1} parent=79 // pred_region
          %614 = dma.done [#allocation15], 1024
        $region112: #{tpu_custom_call.1} parent=79 // pred_fallthru
          _
        // Predicated region
        $region113: #{tpu_custom_call.1} parent=79 // pred_check
          %p615 = pneg %p324
        $region114: #{tpu_custom_call.1} parent=79 // pred_check_branch
          %617 = sbr.rel (%p615) target = $region116
        $region115: #{tpu_custom_call.1} parent=79 // pred_region
          %618 = dma.done [#allocation18], 1024
        $region116: #{tpu_custom_call.1} parent=79 // pred_fallthru
          _
        // Predicated region
        $region117: #{tpu_custom_call.1} parent=79 // pred_check
          %p619 = pneg %p345
        $region118: #{tpu_custom_call.1} parent=79 // pred_check_branch
          %621 = sbr.rel (%p619) target = $region120
        $region119: #{tpu_custom_call.1} parent=79 // pred_region
          %622 = dma.done [#allocation18], 1024
        $region120: #{tpu_custom_call.1} parent=79 // pred_fallthru
          _
        %s623 = sand.u32 %s34, 1
        %s624 = scalar_lea.sflag [#allocation5], %s623
        %s625 = sand.u32 %s54, 1
        %s626 = smul.addr %s625, 512
        %s627 = scalar_lea.vmem [#allocation4], %s626
        %p628 = pneg %p67
        %p629 = pneg %p64
        %p630 = pneg %p88
        %p631 = pneg %p85
        %s632 = sand.u32 %s34, 1
        %s633 = scalar_lea.sflag [#allocation5], %s632
        %s634 = sand.u32 %s101, 1
        %s635 = smul.addr %s634, 8
        %s636 = scalar_lea.vmem [#allocation9], %s635
        %p637 = pneg %p114
        %p638 = pneg %p111
        %p639 = pneg %p135
        %p640 = pneg %p132
        %p641 = pneg %p156
        %p642 = pneg %p153
        %p643 = pneg %p177
        %p644 = pneg %p174
        %p645 = pneg %p198
        %p646 = pneg %p195
        %p647 = pneg %p219
        %p648 = pneg %p216
        %p649 = pneg %p240
        %p650 = pneg %p237
        %p651 = pneg %p261
        %p652 = pneg %p258
        %p653 = pneg %p282
        %p654 = pneg %p279
        %p655 = pneg %p303
        %p656 = pneg %p300
        %p657 = pneg %p324
        %p658 = pneg %p321
        %p659 = pneg %p345
        %p660 = pneg %p342
        %p661 = pneg %p366
        %p662 = pneg %p363
        %p663 = pneg %p387
        %p664 = pneg %p384
        %s665 = smul.u32 32, %s39
        %s666 = smul.u32 2, %s39
        %s668 = smul.u32 %s39, 256
        %p669 = scmp.eq.s32.totalorder %s38, 0
        %p670 = scmp.eq.s32.totalorder %s39, 0
        %p671 = pnand %p669, %p670
        %p672 = pneg %p671
        // Predicated region
        $region121: #{tpu_custom_call.1} parent=79 // pred_check
          _
        $region122: #{tpu_custom_call.1} parent=79 // pred_check_branch
          %674 = sbr.rel (%p671) target = $region124
        $region123: #{tpu_custom_call.1} parent=79 // pred_region
          %v675 = vld [vmem:[%s14] sm:$0xff]
          %676 = vst [vmem:[#allocation20] sm:$0xff] %v675
          %v677 = vld [vmem:[#allocation7] sm:$0xf]
          %v678 = vld [vmem:[#allocation7 + $0x4] sm:$0xf]
          %v679 = vld [vmem:[#allocation7 + $0x8] sm:$0xf]
          %v680 = vld [vmem:[#allocation7 + $0xc] sm:$0xf]
          %v681 = vld [vmem:[#allocation7 + $0x10] sm:$0xf]
          %v682 = vld [vmem:[#allocation7 + $0x14] sm:$0xf]
          %v683 = vld [vmem:[#allocation7 + $0x18] sm:$0xf]
          %v684 = vld [vmem:[#allocation7 + $0x1c] sm:$0xf]
          %v685 = vld [vmem:[#allocation7 + $0x20] sm:$0xf]
          %v686 = vld [vmem:[#allocation7 + $0x24] sm:$0xf]
          %v687 = vld [vmem:[#allocation7 + $0x28] sm:$0xf]
          %v688 = vld [vmem:[#allocation7 + $0x2c] sm:$0xf]
          %v689 = vld [vmem:[#allocation7 + $0x30] sm:$0xf]
          %v690 = vld [vmem:[#allocation7 + $0x34] sm:$0xf]
          %v691 = vld [vmem:[#allocation7 + $0x38] sm:$0xf]
          %v692 = vld [vmem:[#allocation7 + $0x3c] sm:$0xf]
          %v693 = vld [vmem:[#allocation7 + $0x40] sm:$0xf]
          %v694 = vld [vmem:[#allocation7 + $0x44] sm:$0xf]
          %v695 = vld [vmem:[#allocation7 + $0x48] sm:$0xf]
          %v696 = vld [vmem:[#allocation7 + $0x4c] sm:$0xf]
          %v697 = vld [vmem:[#allocation7 + $0x50] sm:$0xf]
          %v698 = vld [vmem:[#allocation7 + $0x54] sm:$0xf]
          %v699 = vld [vmem:[#allocation7 + $0x58] sm:$0xf]
          %v700 = vld [vmem:[#allocation7 + $0x5c] sm:$0xf]
          %v701 = vld [vmem:[#allocation7 + $0x60] sm:$0xf]
          %v702 = vld [vmem:[#allocation7 + $0x64] sm:$0xf]
          %v703 = vld [vmem:[#allocation7 + $0x68] sm:$0xf]
          %v704 = vld [vmem:[#allocation7 + $0x6c] sm:$0xf]
          %v705 = vld [vmem:[#allocation7 + $0x70] sm:$0xf]
          %v706 = vld [vmem:[#allocation7 + $0x74] sm:$0xf]
          %v707 = vld [vmem:[#allocation7 + $0x78] sm:$0xf]
          %v708 = vld [vmem:[#allocation7 + $0x7c] sm:$0xf]
          %v709 = vld [vmem:[#allocation7 + $0x80] sm:$0xf]
          %v710 = vld [vmem:[#allocation7 + $0x84] sm:$0xf]
          %v711 = vld [vmem:[#allocation7 + $0x88] sm:$0xf]
          %v712 = vld [vmem:[#allocation7 + $0x8c] sm:$0xf]
          %v713 = vld [vmem:[#allocation7 + $0x90] sm:$0xf]
          %v714 = vld [vmem:[#allocation7 + $0x94] sm:$0xf]
          %v715 = vld [vmem:[#allocation7 + $0x98] sm:$0xf]
          %v716 = vld [vmem:[#allocation7 + $0x9c] sm:$0xf]
          %v717 = vld [vmem:[#allocation7 + $0xa0] sm:$0xf]
          %v718 = vld [vmem:[#allocation7 + $0xa4] sm:$0xf]
          %v719 = vld [vmem:[#allocation7 + $0xa8] sm:$0xf]
          %v720 = vld [vmem:[#allocation7 + $0xac] sm:$0xf]
          %v721 = vld [vmem:[#allocation7 + $0xb0] sm:$0xf]
          %v722 = vld [vmem:[#allocation7 + $0xb4] sm:$0xf]
          %v723 = vld [vmem:[#allocation7 + $0xb8] sm:$0xf]
          %v724 = vld [vmem:[#allocation7 + $0xbc] sm:$0xf]
          %v725 = vld [vmem:[#allocation7 + $0xc0] sm:$0xf]
          %v726 = vld [vmem:[#allocation7 + $0xc4] sm:$0xf]
          %v727 = vld [vmem:[#allocation7 + $0xc8] sm:$0xf]
          %v728 = vld [vmem:[#allocation7 + $0xcc] sm:$0xf]
          %v729 = vld [vmem:[#allocation7 + $0xd0] sm:$0xf]
          %v730 = vld [vmem:[#allocation7 + $0xd4] sm:$0xf]
          %v731 = vld [vmem:[#allocation7 + $0xd8] sm:$0xf]
          %v732 = vld [vmem:[#allocation7 + $0xdc] sm:$0xf]
          %v733 = vld [vmem:[#allocation7 + $0xe0] sm:$0xf]
          %v734 = vld [vmem:[#allocation7 + $0xe4] sm:$0xf]
          %v735 = vld [vmem:[#allocation7 + $0xe8] sm:$0xf]
          %v736 = vld [vmem:[#allocation7 + $0xec] sm:$0xf]
          %v737 = vld [vmem:[#allocation7 + $0xf0] sm:$0xf]
          %v738 = vld [vmem:[#allocation7 + $0xf4] sm:$0xf]
          %v739 = vld [vmem:[#allocation7 + $0xf8] sm:$0xf]
          %v740 = vld [vmem:[#allocation7 + $0xfc] sm:$0xf]
          %v741 = vld [vmem:[#allocation10] sm:$0xf]
          %v742 = vld [vmem:[#allocation10 + $0x4] sm:$0xf]
          %v743 = vld [vmem:[#allocation10 + $0x8] sm:$0xf]
          %v744 = vld [vmem:[#allocation10 + $0xc] sm:$0xf]
          %v745 = vld [vmem:[#allocation10 + $0x10] sm:$0xf]
          %v746 = vld [vmem:[#allocation10 + $0x14] sm:$0xf]
          %v747 = vld [vmem:[#allocation10 + $0x18] sm:$0xf]
          %v748 = vld [vmem:[#allocation10 + $0x1c] sm:$0xf]
          %v749 = vld [vmem:[#allocation10 + $0x20] sm:$0xf]
          %v750 = vld [vmem:[#allocation10 + $0x24] sm:$0xf]
          %v751 = vld [vmem:[#allocation10 + $0x28] sm:$0xf]
          %v752 = vld [vmem:[#allocation10 + $0x2c] sm:$0xf]
          %v753 = vld [vmem:[#allocation10 + $0x30] sm:$0xf]
          %v754 = vld [vmem:[#allocation10 + $0x34] sm:$0xf]
          %v755 = vld [vmem:[#allocation10 + $0x38] sm:$0xf]
          %v756 = vld [vmem:[#allocation10 + $0x3c] sm:$0xf]
          %v821 = vunpack.c.l.b16 %v677
          %v822 = vunpack.c.l.b16 %v678
          %v823 = vunpack.c.l.b16 %v679
          %v824 = vunpack.c.l.b16 %v680
          %v825 = vunpack.c.l.b16 %v681
          %v826 = vunpack.c.l.b16 %v682
          %v827 = vunpack.c.l.b16 %v683
          %v828 = vunpack.c.l.b16 %v684
          %v829 = vunpack.c.l.b16 %v685
          %v830 = vunpack.c.l.b16 %v686
          %v831 = vunpack.c.l.b16 %v687
          %v832 = vunpack.c.l.b16 %v688
          %v833 = vunpack.c.l.b16 %v689
          %v834 = vunpack.c.l.b16 %v690
          %v835 = vunpack.c.l.b16 %v691
          %v836 = vunpack.c.l.b16 %v692
          %v837 = vunpack.c.l.b16 %v693
          %v838 = vunpack.c.l.b16 %v694
          %v839 = vunpack.c.l.b16 %v695
          %v840 = vunpack.c.l.b16 %v696
          %v841 = vunpack.c.l.b16 %v697
          %v842 = vunpack.c.l.b16 %v698
          %v843 = vunpack.c.l.b16 %v699
          %v844 = vunpack.c.l.b16 %v700
          %v845 = vunpack.c.l.b16 %v701
          %v846 = vunpack.c.l.b16 %v702
          %v847 = vunpack.c.l.b16 %v703
          %v848 = vunpack.c.l.b16 %v704
          %v849 = vunpack.c.l.b16 %v705
          %v850 = vunpack.c.l.b16 %v706
          %v851 = vunpack.c.l.b16 %v707
          %v852 = vunpack.c.l.b16 %v708
          %v853 = vunpack.c.l.b16 %v709
          %v854 = vunpack.c.l.b16 %v710
          %v855 = vunpack.c.l.b16 %v711
          %v856 = vunpack.c.l.b16 %v712
          %v857 = vunpack.c.l.b16 %v713
          %v858 = vunpack.c.l.b16 %v714
          %v859 = vunpack.c.l.b16 %v715
          %v860 = vunpack.c.l.b16 %v716
          %v861 = vunpack.c.l.b16 %v717
          %v862 = vunpack.c.l.b16 %v718
          %v863 = vunpack.c.l.b16 %v719
          %v864 = vunpack.c.l.b16 %v720
          %v865 = vunpack.c.l.b16 %v721
          %v866 = vunpack.c.l.b16 %v722
          %v867 = vunpack.c.l.b16 %v723
          %v868 = vunpack.c.l.b16 %v724
          %v869 = vunpack.c.l.b16 %v725
          %v870 = vunpack.c.l.b16 %v726
          %v871 = vunpack.c.l.b16 %v727
          %v872 = vunpack.c.l.b16 %v728
          %v873 = vunpack.c.l.b16 %v729
          %v874 = vunpack.c.l.b16 %v730
          %v875 = vunpack.c.l.b16 %v731
          %v876 = vunpack.c.l.b16 %v732
          %v877 = vunpack.c.l.b16 %v733
          %v878 = vunpack.c.l.b16 %v734
          %v879 = vunpack.c.l.b16 %v735
          %v880 = vunpack.c.l.b16 %v736
          %v881 = vunpack.c.l.b16 %v737
          %v882 = vunpack.c.l.b16 %v738
          %v883 = vunpack.c.l.b16 %v739
          %v884 = vunpack.c.l.b16 %v740
          %v885 = vpack.c.b16 %v822, %v821
          %v886 = vpack.c.b16 %v824, %v823
          %v887 = vpack.c.b16 %v826, %v825
          %v888 = vpack.c.b16 %v828, %v827
          %v889 = vpack.c.b16 %v830, %v829
          %v890 = vpack.c.b16 %v832, %v831
          %v891 = vpack.c.b16 %v834, %v833
          %v892 = vpack.c.b16 %v836, %v835
          %v893 = vpack.c.b16 %v838, %v837
          %v894 = vpack.c.b16 %v840, %v839
          %v895 = vpack.c.b16 %v842, %v841
          %v896 = vpack.c.b16 %v844, %v843
          %v897 = vpack.c.b16 %v846, %v845
          %v898 = vpack.c.b16 %v848, %v847
          %v899 = vpack.c.b16 %v850, %v849
          %v900 = vpack.c.b16 %v852, %v851
          %v901 = vpack.c.b16 %v854, %v853
          %v902 = vpack.c.b16 %v856, %v855
          %v903 = vpack.c.b16 %v858, %v857
          %v904 = vpack.c.b16 %v860, %v859
          %v905 = vpack.c.b16 %v862, %v861
          %v906 = vpack.c.b16 %v864, %v863
          %v907 = vpack.c.b16 %v866, %v865
          %v908 = vpack.c.b16 %v868, %v867
          %v909 = vpack.c.b16 %v870, %v869
          %v910 = vpack.c.b16 %v872, %v871
          %v911 = vpack.c.b16 %v874, %v873
          %v912 = vpack.c.b16 %v876, %v875
          %v913 = vpack.c.b16 %v878, %v877
          %v914 = vpack.c.b16 %v880, %v879
          %v915 = vpack.c.b16 %v882, %v881
          %v916 = vpack.c.b16 %v884, %v883
          %v965 = vunpack.c.l.b16 %v741
          %v966 = vunpack.c.l.b16 %v742
          %v967 = vunpack.c.l.b16 %v743
          %v968 = vunpack.c.l.b16 %v744
          %v969 = vunpack.c.l.b16 %v745
          %v970 = vunpack.c.l.b16 %v746
          %v971 = vunpack.c.l.b16 %v747
          %v972 = vunpack.c.l.b16 %v748
          %v973 = vunpack.c.l.b16 %v749
          %v974 = vunpack.c.l.b16 %v750
          %v975 = vunpack.c.l.b16 %v751
          %v976 = vunpack.c.l.b16 %v752
          %v977 = vunpack.c.l.b16 %v753
          %v978 = vunpack.c.l.b16 %v754
          %v979 = vunpack.c.l.b16 %v755
          %v980 = vunpack.c.l.b16 %v756
          %v981 = vpack.c.b16 %v966, %v965
          %v982 = vpack.c.b16 %v968, %v967
          %v983 = vpack.c.b16 %v970, %v969
          %v984 = vpack.c.b16 %v972, %v971
          %v985 = vpack.c.b16 %v974, %v973
          %v986 = vpack.c.b16 %v976, %v975
          %v987 = vpack.c.b16 %v978, %v977
          %v988 = vpack.c.b16 %v980, %v979
          %997 = vmatprep.subr.bf16.mxu0 0
          %998 = vmatpush1.bf16.msra.mxu0 %v981
          %999 = vmatprep.subr.bf16.mxu0 0
          %1000 = vmatpush1.bf16.msra.mxu0 %v982
          %1001 = vmatprep.subr.bf16.mxu0 0
          %1002 = vmatpush1.bf16.msra.mxu0 %v983
          %1003 = vmatprep.subr.bf16.mxu0 0
          %1004 = vmatpush1.bf16.msra.mxu0 %v984
          %1005 = vmatprep.subr.bf16.mxu0 0
          %1006 = vmatpush1.bf16.msra.mxu0 %v985
          %1007 = vmatprep.subr.bf16.mxu0 0
          %1008 = vmatpush1.bf16.msra.mxu0 %v986
          %1009 = vmatprep.subr.bf16.mxu0 0
          %1010 = vmatpush1.bf16.msra.mxu0 %v987
          %1011 = vmatprep.subr.bf16.mxu0 0
          %1012 = vmatpush1.bf16.msra.mxu0 %v988
          %1013 = vmatprep.subr.bf16.mxu0 0
          %1014 = vmatpush1.bf16.msra.mxu0 0
          %1015 = vmatprep.subr.bf16.mxu0 0
          %1016 = vmatpush1.bf16.msra.mxu0 0
          %1017 = vmatprep.subr.bf16.mxu0 0
          %1018 = vmatpush1.bf16.msra.mxu0 0
          %1019 = vmatprep.subr.bf16.mxu0 0
          %1020 = vmatpush1.bf16.msra.mxu0 0
          %1021 = vmatprep.subr.bf16.mxu0 0
          %1022 = vmatpush1.bf16.msra.mxu0 0
          %1023 = vmatprep.subr.bf16.mxu0 0
          %1024 = vmatpush1.bf16.msra.mxu0 0
          %1025 = vmatprep.subr.bf16.mxu0 0
          %1026 = vmatpush1.bf16.msra.mxu0 0
          %1027 = vmatprep.subr.bf16.mxu0 0
          %1028 = vmatpush1.bf16.msra.mxu0 0
          %1029 = vmatprep.mubr.bf16.mxu0 0
          %1030 = vmatmul.mubr.bf16.gmra.mrb[0].mxu0 %v885
          %v1031 = vpop.f32.mrb[0].mxu0
          %v1032 = vadd.f32 0.0, %v1031
          %v1033 = vpop.f32.mrb[0].mxu0
          %v1034 = vpop.f32.mrb[0].mxu0
          %v1035 = vadd.f32 0.0, %v1034
          %v1036 = vpop.f32.mrb[0].mxu0
          %1037 = vmatprep.mubr.bf16.mxu0 0
          %1038 = vmatmul.mubr.bf16.gmra.mrb[0].mxu0 %v886
          %v1039 = vpop.f32.mrb[0].mxu0
          %v1040 = vadd.f32 0.0, %v1039
          %v1041 = vpop.f32.mrb[0].mxu0
          %v1042 = vpop.f32.mrb[0].mxu0
          %v1043 = vadd.f32 0.0, %v1042
          %v1044 = vpop.f32.mrb[0].mxu0
          %1045 = vmatprep.mubr.bf16.mxu0 0
          %1046 = vmatmul.mubr.bf16.gmra.mrb[0].mxu0 %v887
          %v1047 = vpop.f32.mrb[0].mxu0
          %v1048 = vadd.f32 0.0, %v1047
          %v1049 = vpop.f32.mrb[0].mxu0
          %v1050 = vpop.f32.mrb[0].mxu0
          %v1051 = vadd.f32 0.0, %v1050
          %v1052 = vpop.f32.mrb[0].mxu0
          %1053 = vmatprep.mubr.bf16.mxu0 0
          %1054 = vmatmul.mubr.bf16.gmra.mrb[0].mxu0 %v888
          %v1055 = vpop.f32.mrb[0].mxu0
          %v1056 = vadd.f32 0.0, %v1055
          %v1057 = vpop.f32.mrb[0].mxu0
          %v1058 = vpop.f32.mrb[0].mxu0
          %v1059 = vadd.f32 0.0, %v1058
          %v1060 = vpop.f32.mrb[0].mxu0
          %1061 = vmatprep.mubr.bf16.mxu0 0
          %1062 = vmatmul.mubr.bf16.gmra.mrb[0].mxu0 %v889
          %v1063 = vpop.f32.mrb[0].mxu0
          %v1064 = vadd.f32 0.0, %v1063
          %v1065 = vpop.f32.mrb[0].mxu0
          %v1066 = vpop.f32.mrb[0].mxu0
          %v1067 = vadd.f32 0.0, %v1066
          %v1068 = vpop.f32.mrb[0].mxu0
          %1069 = vmatprep.mubr.bf16.mxu0 0
          %1070 = vmatmul.mubr.bf16.gmra.mrb[0].mxu0 %v890
          %v1071 = vpop.f32.mrb[0].mxu0
          %v1072 = vadd.f32 0.0, %v1071
          %v1073 = vpop.f32.mrb[0].mxu0
          %v1074 = vpop.f32.mrb[0].mxu0
          %v1075 = vadd.f32 0.0, %v1074
          %v1076 = vpop.f32.mrb[0].mxu0
          %1077 = vmatprep.mubr.bf16.mxu0 0
          %1078 = vmatmul.mubr.bf16.gmra.mrb[0].mxu0 %v891
          %v1079 = vpop.f32.mrb[0].mxu0
          %v1080 = vadd.f32 0.0, %v1079
          %v1081 = vpop.f32.mrb[0].mxu0
          %v1082 = vpop.f32.mrb[0].mxu0
          %v1083 = vadd.f32 0.0, %v1082
          %v1084 = vpop.f32.mrb[0].mxu0
          %1085 = vmatprep.mubr.bf16.mxu0 0
          %1086 = vmatmul.mubr.bf16.gmra.mrb[0].mxu0 %v892
          %v1087 = vpop.f32.mrb[0].mxu0
          %v1088 = vadd.f32 0.0, %v1087
          %v1089 = vpop.f32.mrb[0].mxu0
          %v1090 = vpop.f32.mrb[0].mxu0
          %v1091 = vadd.f32 0.0, %v1090
          %v1092 = vpop.f32.mrb[0].mxu0
          %1093 = vmatprep.mubr.bf16.mxu0 0
          %1094 = vmatmul.mubr.bf16.gmra.mrb[0].mxu0 %v893
          %v1095 = vpop.f32.mrb[0].mxu0
          %v1096 = vadd.f32 0.0, %v1095
          %v1097 = vpop.f32.mrb[0].mxu0
          %v1098 = vpop.f32.mrb[0].mxu0
          %v1099 = vadd.f32 0.0, %v1098
          %v1100 = vpop.f32.mrb[0].mxu0
          %1101 = vmatprep.mubr.bf16.mxu0 0
          %1102 = vmatmul.mubr.bf16.gmra.mrb[0].mxu0 %v894
          %v1103 = vpop.f32.mrb[0].mxu0
          %v1104 = vadd.f32 0.0, %v1103
          %v1105 = vpop.f32.mrb[0].mxu0
          %v1106 = vpop.f32.mrb[0].mxu0
          %v1107 = vadd.f32 0.0, %v1106
          %v1108 = vpop.f32.mrb[0].mxu0
          %1109 = vmatprep.mubr.bf16.mxu0 0
          %1110 = vmatmul.mubr.bf16.gmra.mrb[0].mxu0 %v895
          %v1111 = vpop.f32.mrb[0].mxu0
          %v1112 = vadd.f32 0.0, %v1111
          %v1113 = vpop.f32.mrb[0].mxu0
          %v1114 = vpop.f32.mrb[0].mxu0
          %v1115 = vadd.f32 0.0, %v1114
          %v1116 = vpop.f32.mrb[0].mxu0
          %1117 = vmatprep.mubr.bf16.mxu0 0
          %1118 = vmatmul.mubr.bf16.gmra.mrb[0].mxu0 %v896
          %v1119 = vpop.f32.mrb[0].mxu0
          %v1120 = vadd.f32 0.0, %v1119
          %v1121 = vpop.f32.mrb[0].mxu0
          %v1122 = vpop.f32.mrb[0].mxu0
          %v1123 = vadd.f32 0.0, %v1122
          %v1124 = vpop.f32.mrb[0].mxu0
          %1125 = vmatprep.mubr.bf16.mxu0 0
          %1126 = vmatmul.mubr.bf16.gmra.mrb[0].mxu0 %v897
          %v1127 = vpop.f32.mrb[0].mxu0
          %v1128 = vadd.f32 0.0, %v1127
          %v1129 = vpop.f32.mrb[0].mxu0
          %v1130 = vpop.f32.mrb[0].mxu0
          %v1131 = vadd.f32 0.0, %v1130
          %v1132 = vpop.f32.mrb[0].mxu0
          %1133 = vmatprep.mubr.bf16.mxu0 0
          %1134 = vmatmul.mubr.bf16.gmra.mrb[0].mxu0 %v898
          %v1135 = vpop.f32.mrb[0].mxu0
          %v1136 = vadd.f32 0.0, %v1135
          %v1137 = vpop.f32.mrb[0].mxu0
          %v1138 = vpop.f32.mrb[0].mxu0
          %v1139 = vadd.f32 0.0, %v1138
          %v1140 = vpop.f32.mrb[0].mxu0
          %1141 = vmatprep.mubr.bf16.mxu0 0
          %1142 = vmatmul.mubr.bf16.gmra.mrb[0].mxu0 %v899
          %v1143 = vpop.f32.mrb[0].mxu0
          %v1144 = vadd.f32 0.0, %v1143
          %v1145 = vpop.f32.mrb[0].mxu0
          %v1146 = vpop.f32.mrb[0].mxu0
          %v1147 = vadd.f32 0.0, %v1146
          %v1148 = vpop.f32.mrb[0].mxu0
          %1149 = vmatprep.mubr.bf16.mxu0 0
          %1150 = vmatmul.mubr.bf16.gmra.mrb[0].mxu0 %v900
          %v1151 = vpop.f32.mrb[0].mxu0
          %v1152 = vadd.f32 0.0, %v1151
          %v1153 = vpop.f32.mrb[0].mxu0
          %v1154 = vpop.f32.mrb[0].mxu0
          %v1155 = vadd.f32 0.0, %v1154
          %v1156 = vpop.f32.mrb[0].mxu0
          %1157 = vmatprep.mubr.bf16.mxu0 0
          %1158 = vmatmul.mubr.bf16.gmra.mrb[0].mxu0 %v901
          %v1159 = vpop.f32.mrb[0].mxu0
          %v1160 = vadd.f32 0.0, %v1159
          %v1161 = vpop.f32.mrb[0].mxu0
          %v1162 = vpop.f32.mrb[0].mxu0
          %v1163 = vadd.f32 0.0, %v1162
          %v1164 = vpop.f32.mrb[0].mxu0
          %1165 = vmatprep.mubr.bf16.mxu0 0
          %1166 = vmatmul.mubr.bf16.gmra.mrb[0].mxu0 %v902
          %v1167 = vpop.f32.mrb[0].mxu0
          %v1168 = vadd.f32 0.0, %v1167
          %v1169 = vpop.f32.mrb[0].mxu0
          %v1170 = vpop.f32.mrb[0].mxu0
          %v1171 = vadd.f32 0.0, %v1170
          %v1172 = vpop.f32.mrb[0].mxu0
          %1173 = vmatprep.mubr.bf16.mxu0 0
          %1174 = vmatmul.mubr.bf16.gmra.mrb[0].mxu0 %v903
          %v1175 = vpop.f32.mrb[0].mxu0
          %v1176 = vadd.f32 0.0, %v1175
          %v1177 = vpop.f32.mrb[0].mxu0
          %v1178 = vpop.f32.mrb[0].mxu0
          %v1179 = vadd.f32 0.0, %v1178
          %v1180 = vpop.f32.mrb[0].mxu0
          %1181 = vmatprep.mubr.bf16.mxu0 0
          %1182 = vmatmul.mubr.bf16.gmra.mrb[0].mxu0 %v904
          %v1183 = vpop.f32.mrb[0].mxu0
          %v1184 = vadd.f32 0.0, %v1183
          %v1185 = vpop.f32.mrb[0].mxu0
          %v1186 = vpop.f32.mrb[0].mxu0
          %v1187 = vadd.f32 0.0, %v1186
          %v1188 = vpop.f32.mrb[0].mxu0
          %1189 = vmatprep.mubr.bf16.mxu0 0
          %1190 = vmatmul.mubr.bf16.gmra.mrb[0].mxu0 %v905
          %v1191 = vpop.f32.mrb[0].mxu0
          %v1192 = vadd.f32 0.0, %v1191
          %v1193 = vpop.f32.mrb[0].mxu0
          %v1194 = vpop.f32.mrb[0].mxu0
          %v1195 = vadd.f32 0.0, %v1194
          %v1196 = vpop.f32.mrb[0].mxu0
          %1197 = vmatprep.mubr.bf16.mxu0 0
          %1198 = vmatmul.mubr.bf16.gmra.mrb[0].mxu0 %v906
          %v1199 = vpop.f32.mrb[0].mxu0
          %v1200 = vadd.f32 0.0, %v1199
          %v1201 = vpop.f32.mrb[0].mxu0
          %v1202 = vpop.f32.mrb[0].mxu0
          %v1203 = vadd.f32 0.0, %v1202
          %v1204 = vpop.f32.mrb[0].mxu0
          %1205 = vmatprep.mubr.bf16.mxu0 0
          %1206 = vmatmul.mubr.bf16.gmra.mrb[0].mxu0 %v907
          %v1207 = vpop.f32.mrb[0].mxu0
          %v1208 = vadd.f32 0.0, %v1207
          %v1209 = vpop.f32.mrb[0].mxu0
          %v1210 = vpop.f32.mrb[0].mxu0
          %v1211 = vadd.f32 0.0, %v1210
          %v1212 = vpop.f32.mrb[0].mxu0
          %1213 = vmatprep.mubr.bf16.mxu0 0
          %1214 = vmatmul.mubr.bf16.gmra.mrb[0].mxu0 %v908
          %v1215 = vpop.f32.mrb[0].mxu0
          %v1216 = vadd.f32 0.0, %v1215
          %v1217 = vpop.f32.mrb[0].mxu0
          %v1218 = vpop.f32.mrb[0].mxu0
          %v1219 = vadd.f32 0.0, %v1218
          %v1220 = vpop.f32.mrb[0].mxu0
          %1221 = vmatprep.mubr.bf16.mxu0 0
          %1222 = vmatmul.mubr.bf16.gmra.mrb[0].mxu0 %v909
          %v1223 = vpop.f32.mrb[0].mxu0
          %v1224 = vadd.f32 0.0, %v1223
          %v1225 = vpop.f32.mrb[0].mxu0
          %v1226 = vpop.f32.mrb[0].mxu0
          %v1227 = vadd.f32 0.0, %v1226
          %v1228 = vpop.f32.mrb[0].mxu0
          %1229 = vmatprep.mubr.bf16.mxu0 0
          %1230 = vmatmul.mubr.bf16.gmra.mrb[0].mxu0 %v910
          %v1231 = vpop.f32.mrb[0].mxu0
          %v1232 = vadd.f32 0.0, %v1231
          %v1233 = vpop.f32.mrb[0].mxu0
          %v1234 = vpop.f32.mrb[0].mxu0
          %v1235 = vadd.f32 0.0, %v1234
          %v1236 = vpop.f32.mrb[0].mxu0
          %1237 = vmatprep.mubr.bf16.mxu0 0
          %1238 = vmatmul.mubr.bf16.gmra.mrb[0].mxu0 %v911
          %v1239 = vpop.f32.mrb[0].mxu0
          %v1240 = vadd.f32 0.0, %v1239
          %v1241 = vpop.f32.mrb[0].mxu0
          %v1242 = vpop.f32.mrb[0].mxu0
          %v1243 = vadd.f32 0.0, %v1242
          %v1244 = vpop.f32.mrb[0].mxu0
          %1245 = vmatprep.mubr.bf16.mxu0 0
          %1246 = vmatmul.mubr.bf16.gmra.mrb[0].mxu0 %v912
          %v1247 = vpop.f32.mrb[0].mxu0
          %v1248 = vadd.f32 0.0, %v1247
          %v1249 = vpop.f32.mrb[0].mxu0
          %v1250 = vpop.f32.mrb[0].mxu0
          %v1251 = vadd.f32 0.0, %v1250
          %v1252 = vpop.f32.mrb[0].mxu0
          %1253 = vmatprep.mubr.bf16.mxu0 0
          %1254 = vmatmul.mubr.bf16.gmra.mrb[0].mxu0 %v913
          %v1255 = vpop.f32.mrb[0].mxu0
          %v1256 = vadd.f32 0.0, %v1255
          %v1257 = vpop.f32.mrb[0].mxu0
          %v1258 = vpop.f32.mrb[0].mxu0
          %v1259 = vadd.f32 0.0, %v1258
          %v1260 = vpop.f32.mrb[0].mxu0
          %1261 = vmatprep.mubr.bf16.mxu0 0
          %1262 = vmatmul.mubr.bf16.gmra.mrb[0].mxu0 %v914
          %v1263 = vpop.f32.mrb[0].mxu0
          %v1264 = vadd.f32 0.0, %v1263
          %v1265 = vpop.f32.mrb[0].mxu0
          %v1266 = vpop.f32.mrb[0].mxu0
          %v1267 = vadd.f32 0.0, %v1266
          %v1268 = vpop.f32.mrb[0].mxu0
          %1269 = vmatprep.mubr.bf16.mxu0 0
          %1270 = vmatmul.mubr.bf16.gmra.mrb[0].mxu0 %v915
          %v1271 = vpop.f32.mrb[0].mxu0
          %v1272 = vadd.f32 0.0, %v1271
          %v1273 = vpop.f32.mrb[0].mxu0
          %v1274 = vpop.f32.mrb[0].mxu0
          %v1275 = vadd.f32 0.0, %v1274
          %v1276 = vpop.f32.mrb[0].mxu0
          %1277 = vmatprep.mubr.bf16.mxu0 0
          %1278 = vmatmul.mubr.bf16.gmra.mrb[0].mxu0 %v916
          %v1279 = vpop.f32.mrb[0].mxu0
          %v1280 = vadd.f32 0.0, %v1279
          %v1281 = vpop.f32.mrb[0].mxu0
          %v1282 = vpop.f32.mrb[0].mxu0
          %v1283 = vadd.f32 0.0, %v1282
          %v1284 = vpop.f32.mrb[0].mxu0
          %1285 = vdwg.mxu0
          %v1286 = vpack.c.bf16 %v1035, %v1032
          %v1287 = vpack.c.bf16 %v1043, %v1040
          %v1288 = vpack.c.bf16 %v1051, %v1048
          %v1289 = vpack.c.bf16 %v1059, %v1056
          %v1290 = vpack.c.bf16 %v1067, %v1064
          %v1291 = vpack.c.bf16 %v1075, %v1072
          %v1292 = vpack.c.bf16 %v1083, %v1080
          %v1293 = vpack.c.bf16 %v1091, %v1088
          %v1294 = vpack.c.bf16 %v1099, %v1096
          %v1295 = vpack.c.bf16 %v1107, %v1104
          %v1296 = vpack.c.bf16 %v1115, %v1112
          %v1297 = vpack.c.bf16 %v1123, %v1120
          %v1298 = vpack.c.bf16 %v1131, %v1128
          %v1299 = vpack.c.bf16 %v1139, %v1136
          %v1300 = vpack.c.bf16 %v1147, %v1144
          %v1301 = vpack.c.bf16 %v1155, %v1152
          %v1302 = vpack.c.bf16 %v1163, %v1160
          %v1303 = vpack.c.bf16 %v1171, %v1168
          %v1304 = vpack.c.bf16 %v1179, %v1176
          %v1305 = vpack.c.bf16 %v1187, %v1184
          %v1306 = vpack.c.bf16 %v1195, %v1192
          %v1307 = vpack.c.bf16 %v1203, %v1200
          %v1308 = vpack.c.bf16 %v1211, %v1208
          %v1309 = vpack.c.bf16 %v1219, %v1216
          %v1310 = vpack.c.bf16 %v1227, %v1224
          %v1311 = vpack.c.bf16 %v1235, %v1232
          %v1312 = vpack.c.bf16 %v1243, %v1240
          %v1313 = vpack.c.bf16 %v1251, %v1248
          %v1314 = vpack.c.bf16 %v1259, %v1256
          %v1315 = vpack.c.bf16 %v1267, %v1264
          %v1316 = vpack.c.bf16 %v1275, %v1272
          %v1317 = vpack.c.bf16 %v1283, %v1280
          %1318 = vst [vmem:[#allocation2] sm:$0xff] %v1286
          %1319 = vst [vmem:[#allocation2 + $0x8] sm:$0xff] %v1287
          %1320 = vst [vmem:[#allocation2 + $0x10] sm:$0xff] %v1288
          %1321 = vst [vmem:[#allocation2 + $0x18] sm:$0xff] %v1289
          %1322 = vst [vmem:[#allocation2 + $0x20] sm:$0xff] %v1290
          %1323 = vst [vmem:[#allocation2 + $0x28] sm:$0xff] %v1291
          %1324 = vst [vmem:[#allocation2 + $0x30] sm:$0xff] %v1292
          %1325 = vst [vmem:[#allocation2 + $0x38] sm:$0xff] %v1293
          %1326 = vst [vmem:[#allocation2 + $0x40] sm:$0xff] %v1294
          %1327 = vst [vmem:[#allocation2 + $0x48] sm:$0xff] %v1295
          %1328 = vst [vmem:[#allocation2 + $0x50] sm:$0xff] %v1296
          %1329 = vst [vmem:[#allocation2 + $0x58] sm:$0xff] %v1297
          %1330 = vst [vmem:[#allocation2 + $0x60] sm:$0xff] %v1298
          %1331 = vst [vmem:[#allocation2 + $0x68] sm:$0xff] %v1299
          %1332 = vst [vmem:[#allocation2 + $0x70] sm:$0xff] %v1300
          %1333 = vst [vmem:[#allocation2 + $0x78] sm:$0xff] %v1301
          %1334 = vst [vmem:[#allocation2 + $0x80] sm:$0xff] %v1302
          %1335 = vst [vmem:[#allocation2 + $0x88] sm:$0xff] %v1303
          %1336 = vst [vmem:[#allocation2 + $0x90] sm:$0xff] %v1304
          %1337 = vst [vmem:[#allocation2 + $0x98] sm:$0xff] %v1305
          %1338 = vst [vmem:[#allocation2 + $0xa0] sm:$0xff] %v1306
          %1339 = vst [vmem:[#allocation2 + $0xa8] sm:$0xff] %v1307
          %1340 = vst [vmem:[#allocation2 + $0xb0] sm:$0xff] %v1308
          %1341 = vst [vmem:[#allocation2 + $0xb8] sm:$0xff] %v1309
          %1342 = vst [vmem:[#allocation2 + $0xc0] sm:$0xff] %v1310
          %1343 = vst [vmem:[#allocation2 + $0xc8] sm:$0xff] %v1311
          %1344 = vst [vmem:[#allocation2 + $0xd0] sm:$0xff] %v1312
          %1345 = vst [vmem:[#allocation2 + $0xd8] sm:$0xff] %v1313
          %1346 = vst [vmem:[#allocation2 + $0xe0] sm:$0xff] %v1314
          %1347 = vst [vmem:[#allocation2 + $0xe8] sm:$0xff] %v1315
          %1348 = vst [vmem:[#allocation2 + $0xf0] sm:$0xff] %v1316
          %1349 = vst [vmem:[#allocation2 + $0xf8] sm:$0xff] %v1317
        $region124: #{tpu_custom_call.1} parent=79 // pred_fallthru
          _
        %v1350 = vld [vmem:[%s577] sm:$0xff]
        %v1351 = vld [vmem:[%s577 + $0x8] sm:$0xff]
        %v1352 = vld [vmem:[%s577 + $0x10] sm:$0xff]
        %v1353 = vld [vmem:[%s577 + $0x18] sm:$0xff]
        %v1354 = vld [vmem:[%s577 + $0x20] sm:$0xff]
        %v1355 = vld [vmem:[%s577 + $0x28] sm:$0xff]
        %v1356 = vld [vmem:[%s577 + $0x30] sm:$0xff]
        %v1357 = vld [vmem:[%s577 + $0x38] sm:$0xff]
        %v1358 = vld [vmem:[%s577 + $0x40] sm:$0xff]
        %v1359 = vld [vmem:[%s577 + $0x48] sm:$0xff]
        %v1360 = vld [vmem:[%s577 + $0x50] sm:$0xff]
        %v1361 = vld [vmem:[%s577 + $0x58] sm:$0xff]
        %v1362 = vld [vmem:[%s577 + $0x60] sm:$0xff]
        %v1363 = vld [vmem:[%s577 + $0x68] sm:$0xff]
        %v1364 = vld [vmem:[%s577 + $0x70] sm:$0xff]
        %v1365 = vld [vmem:[%s577 + $0x78] sm:$0xff]
        %v1366 = vld [vmem:[%s577 + $0x80] sm:$0xff]
        %v1367 = vld [vmem:[%s577 + $0x88] sm:$0xff]
        %v1368 = vld [vmem:[%s577 + $0x90] sm:$0xff]
        %v1369 = vld [vmem:[%s577 + $0x98] sm:$0xff]
        %v1370 = vld [vmem:[%s577 + $0xa0] sm:$0xff]
        %v1371 = vld [vmem:[%s577 + $0xa8] sm:$0xff]
        %v1372 = vld [vmem:[%s577 + $0xb0] sm:$0xff]
        %v1373 = vld [vmem:[%s577 + $0xb8] sm:$0xff]
        %v1374 = vld [vmem:[%s577 + $0xc0] sm:$0xff]
        %v1375 = vld [vmem:[%s577 + $0xc8] sm:$0xff]
        %v1376 = vld [vmem:[%s577 + $0xd0] sm:$0xff]
        %v1377 = vld [vmem:[%s577 + $0xd8] sm:$0xff]
        %v1378 = vld [vmem:[%s577 + $0xe0] sm:$0xff]
        %v1379 = vld [vmem:[%s577 + $0xe8] sm:$0xff]
        %v1380 = vld [vmem:[%s577 + $0xf0] sm:$0xff]
        %v1381 = vld [vmem:[%s577 + $0xf8] sm:$0xff]
        %v1382 = vld [vmem:[%s577 + $0x100] sm:$0xff]
        %v1383 = vld [vmem:[%s577 + $0x108] sm:$0xff]
        %v1384 = vld [vmem:[%s577 + $0x110] sm:$0xff]
        %v1385 = vld [vmem:[%s577 + $0x118] sm:$0xff]
        %v1386 = vld [vmem:[%s577 + $0x120] sm:$0xff]
        %v1387 = vld [vmem:[%s577 + $0x128] sm:$0xff]
        %v1388 = vld [vmem:[%s577 + $0x130] sm:$0xff]
        %v1389 = vld [vmem:[%s577 + $0x138] sm:$0xff]
        %v1390 = vld [vmem:[%s577 + $0x140] sm:$0xff]
        %v1391 = vld [vmem:[%s577 + $0x148] sm:$0xff]
        %v1392 = vld [vmem:[%s577 + $0x150] sm:$0xff]
        %v1393 = vld [vmem:[%s577 + $0x158] sm:$0xff]
        %v1394 = vld [vmem:[%s577 + $0x160] sm:$0xff]
        %v1395 = vld [vmem:[%s577 + $0x168] sm:$0xff]
        %v1396 = vld [vmem:[%s577 + $0x170] sm:$0xff]
        %v1397 = vld [vmem:[%s577 + $0x178] sm:$0xff]
        %v1398 = vld [vmem:[%s577 + $0x180] sm:$0xff]
        %v1399 = vld [vmem:[%s577 + $0x188] sm:$0xff]
        %v1400 = vld [vmem:[%s577 + $0x190] sm:$0xff]
        %v1401 = vld [vmem:[%s577 + $0x198] sm:$0xff]
        %v1402 = vld [vmem:[%s577 + $0x1a0] sm:$0xff]
        %v1403 = vld [vmem:[%s577 + $0x1a8] sm:$0xff]
        %v1404 = vld [vmem:[%s577 + $0x1b0] sm:$0xff]
        %v1405 = vld [vmem:[%s577 + $0x1b8] sm:$0xff]
        %v1406 = vld [vmem:[%s577 + $0x1c0] sm:$0xff]
        %v1407 = vld [vmem:[%s577 + $0x1c8] sm:$0xff]
        %v1408 = vld [vmem:[%s577 + $0x1d0] sm:$0xff]
        %v1409 = vld [vmem:[%s577 + $0x1d8] sm:$0xff]
        %v1410 = vld [vmem:[%s577 + $0x1e0] sm:$0xff]
        %v1411 = vld [vmem:[%s577 + $0x1e8] sm:$0xff]
        %v1412 = vld [vmem:[%s577 + $0x1f0] sm:$0xff]
        %v1413 = vld [vmem:[%s577 + $0x1f8] sm:$0xff]
        %v1414 = vld [vmem:[%s590] sm:$0xff]
        // Predicated region
        $region125: #{tpu_custom_call.1} parent=79 // pred_check
          %p1415 = pneg %p669
        $region126: #{tpu_custom_call.1} parent=79 // pred_check_branch
          %1417 = sbr.rel (%p1415) target = $region128
        $region127: #{tpu_custom_call.1} parent=79 // pred_region
          %s1418 = sshra.s32 %s668, 3
          %s1419 = sand.u32 %s668, 7
          %s1420 = smul.addr %s1418, 4
          %s1421 = scalar_lea.vmem [#allocation7], %s1420
          %v1422 = vld [vmem:[%s1421] sm:$0xf]
          %v1423 = vld [vmem:[%s1421 + $0x4] sm:$0xf]
          %v1424 = vld [vmem:[%s1421 + $0x8] sm:$0xf]
          %v1425 = vld [vmem:[%s1421 + $0xc] sm:$0xf]
          %v1426 = vld [vmem:[%s1421 + $0x10] sm:$0xf]
          %v1427 = vld [vmem:[%s1421 + $0x14] sm:$0xf]
          %v1428 = vld [vmem:[%s1421 + $0x18] sm:$0xf]
          %v1429 = vld [vmem:[%s1421 + $0x1c] sm:$0xf]
          %v1430 = vld [vmem:[%s1421 + $0x20] sm:$0xf]
          %v1431 = vld [vmem:[%s1421 + $0x24] sm:$0xf]
          %v1432 = vld [vmem:[%s1421 + $0x28] sm:$0xf]
          %v1433 = vld [vmem:[%s1421 + $0x2c] sm:$0xf]
          %v1434 = vld [vmem:[%s1421 + $0x30] sm:$0xf]
          %v1435 = vld [vmem:[%s1421 + $0x34] sm:$0xf]
          %v1436 = vld [vmem:[%s1421 + $0x38] sm:$0xf]
          %v1437 = vld [vmem:[%s1421 + $0x3c] sm:$0xf]
          %v1438 = vld [vmem:[%s1421 + $0x40] sm:$0xf]
          %v1439 = vld [vmem:[%s1421 + $0x44] sm:$0xf]
          %v1440 = vld [vmem:[%s1421 + $0x48] sm:$0xf]
          %v1441 = vld [vmem:[%s1421 + $0x4c] sm:$0xf]
          %v1442 = vld [vmem:[%s1421 + $0x50] sm:$0xf]
          %v1443 = vld [vmem:[%s1421 + $0x54] sm:$0xf]
          %v1444 = vld [vmem:[%s1421 + $0x58] sm:$0xf]
          %v1445 = vld [vmem:[%s1421 + $0x5c] sm:$0xf]
          %v1446 = vld [vmem:[%s1421 + $0x60] sm:$0xf]
          %v1447 = vld [vmem:[%s1421 + $0x64] sm:$0xf]
          %v1448 = vld [vmem:[%s1421 + $0x68] sm:$0xf]
          %v1449 = vld [vmem:[%s1421 + $0x6c] sm:$0xf]
          %v1450 = vld [vmem:[%s1421 + $0x70] sm:$0xf]
          %v1451 = vld [vmem:[%s1421 + $0x74] sm:$0xf]
          %v1452 = vld [vmem:[%s1421 + $0x78] sm:$0xf]
          %v1453 = vld [vmem:[%s1421 + $0x7c] sm:$0xf]
          %v1455 = vunpack.c.l.b16 %v1414
          %v1456 = vunpack.c.h.b16 %v1414
          %v1457 = vpack.c.b16 %v1455, %v1455
          %v1458 = vpack.c.b16 %v1456, %v1456
          %v1493 = vunpack.c.l.b16 %v1422
          %v1494 = vunpack.c.l.b16 %v1423
          %v1495 = vunpack.c.l.b16 %v1424
          %v1496 = vunpack.c.l.b16 %v1425
          %v1497 = vunpack.c.l.b16 %v1426
          %v1498 = vunpack.c.l.b16 %v1427
          %v1499 = vunpack.c.l.b16 %v1428
          %v1500 = vunpack.c.l.b16 %v1429
          %v1501 = vunpack.c.l.b16 %v1430
          %v1502 = vunpack.c.l.b16 %v1431
          %v1503 = vunpack.c.l.b16 %v1432
          %v1504 = vunpack.c.l.b16 %v1433
          %v1505 = vunpack.c.l.b16 %v1434
          %v1506 = vunpack.c.l.b16 %v1435
          %v1507 = vunpack.c.l.b16 %v1436
          %v1508 = vunpack.c.l.b16 %v1437
          %v1509 = vunpack.c.l.b16 %v1438
          %v1510 = vunpack.c.l.b16 %v1439
          %v1511 = vunpack.c.l.b16 %v1440
          %v1512 = vunpack.c.l.b16 %v1441
          %v1513 = vunpack.c.l.b16 %v1442
          %v1514 = vunpack.c.l.b16 %v1443
          %v1515 = vunpack.c.l.b16 %v1444
          %v1516 = vunpack.c.l.b16 %v1445
          %v1517 = vunpack.c.l.b16 %v1446
          %v1518 = vunpack.c.l.b16 %v1447
          %v1519 = vunpack.c.l.b16 %v1448
          %v1520 = vunpack.c.l.b16 %v1449
          %v1521 = vunpack.c.l.b16 %v1450
          %v1522 = vunpack.c.l.b16 %v1451
          %v1523 = vunpack.c.l.b16 %v1452
          %v1524 = vunpack.c.l.b16 %v1453
          %v1525 = vpack.c.b16 %v1494, %v1493
          %v1526 = vpack.c.b16 %v1496, %v1495
          %v1527 = vpack.c.b16 %v1498, %v1497
          %v1528 = vpack.c.b16 %v1500, %v1499
          %v1529 = vpack.c.b16 %v1502, %v1501
          %v1530 = vpack.c.b16 %v1504, %v1503
          %v1531 = vpack.c.b16 %v1506, %v1505
          %v1532 = vpack.c.b16 %v1508, %v1507
          %v1533 = vpack.c.b16 %v1510, %v1509
          %v1534 = vpack.c.b16 %v1512, %v1511
          %v1535 = vpack.c.b16 %v1514, %v1513
          %v1536 = vpack.c.b16 %v1516, %v1515
          %v1537 = vpack.c.b16 %v1518, %v1517
          %v1538 = vpack.c.b16 %v1520, %v1519
          %v1539 = vpack.c.b16 %v1522, %v1521
          %v1540 = vpack.c.b16 %v1524, %v1523
          %1557 = vmatprep.subr.bf16.mxu0 0
          %1558 = vmatpush1.bf16.msra.mxu0 %v1525
          %1559 = vmatprep.subr.bf16.mxu0 0
          %1560 = vmatpush1.bf16.msra.mxu0 %v1526
          %1561 = vmatprep.subr.bf16.mxu0 0
          %1562 = vmatpush1.bf16.msra.mxu0 %v1527
          %1563 = vmatprep.subr.bf16.mxu0 0
          %1564 = vmatpush1.bf16.msra.mxu0 %v1528
          %1565 = vmatprep.subr.bf16.mxu0 0
          %1566 = vmatpush1.bf16.msra.mxu0 %v1529
          %1567 = vmatprep.subr.bf16.mxu0 0
          %1568 = vmatpush1.bf16.msra.mxu0 %v1530
          %1569 = vmatprep.subr.bf16.mxu0 0
          %1570 = vmatpush1.bf16.msra.mxu0 %v1531
          %1571 = vmatprep.subr.bf16.mxu0 0
          %1572 = vmatpush1.bf16.msra.mxu0 %v1532
          %1573 = vmatprep.subr.bf16.mxu0 0
          %1574 = vmatpush1.bf16.msra.mxu0 %v1533
          %1575 = vmatprep.subr.bf16.mxu0 0
          %1576 = vmatpush1.bf16.msra.mxu0 %v1534
          %1577 = vmatprep.subr.bf16.mxu0 0
          %1578 = vmatpush1.bf16.msra.mxu0 %v1535
          %1579 = vmatprep.subr.bf16.mxu0 0
          %1580 = vmatpush1.bf16.msra.mxu0 %v1536
          %1581 = vmatprep.subr.bf16.mxu0 0
          %1582 = vmatpush1.bf16.msra.mxu0 %v1537
          %1583 = vmatprep.subr.bf16.mxu0 0
          %1584 = vmatpush1.bf16.msra.mxu0 %v1538
          %1585 = vmatprep.subr.bf16.mxu0 0
          %1586 = vmatpush1.bf16.msra.mxu0 %v1539
          %1587 = vmatprep.subr.bf16.mxu0 0
          %1588 = vmatpush1.bf16.msra.mxu0 %v1540
          %1589 = vmatprep.mubr.bf16.mxu0 %v1458
          %1590 = vmatmul.mubr.bf16.gmra.mrb[0].mxu0 %v1457
          %v1591 = vpop.f32.mrb[0].mxu0
          %v1592 = vadd.f32 0.0, %v1591
          %v1593 = vpop.f32.mrb[0].mxu0
          %v1594 = vpop.f32.mrb[0].mxu0
          %v1595 = vpop.f32.mrb[0].mxu0
          %1596 = vdwg.mxu0
          %v1597 = vld [vmem:[#allocation20] sm:$0xff]
          %v1598 = vpack.c.bf16 %v1592, %v1592
          %v1599 = vld [vmem:[#allocation16] sm:$0xf]
          %v1600 = vld [vmem:[#allocation16 + $0x4] sm:$0xf]
          %v1601 = vld [vmem:[#allocation16 + $0x8] sm:$0xf]
          %v1602 = vld [vmem:[#allocation16 + $0xc] sm:$0xf]
          %v1603 = vld [vmem:[#allocation16 + $0x10] sm:$0xf]
          %v1604 = vld [vmem:[#allocation16 + $0x14] sm:$0xf]
          %v1605 = vld [vmem:[#allocation16 + $0x18] sm:$0xf]
          %v1606 = vld [vmem:[#allocation16 + $0x1c] sm:$0xf]
          %v1607 = vld [vmem:[#allocation16 + $0x20] sm:$0xf]
          %v1608 = vld [vmem:[#allocation16 + $0x24] sm:$0xf]
          %v1609 = vld [vmem:[#allocation16 + $0x28] sm:$0xf]
          %v1610 = vld [vmem:[#allocation16 + $0x2c] sm:$0xf]
          %v1611 = vld [vmem:[#allocation16 + $0x30] sm:$0xf]
          %v1612 = vld [vmem:[#allocation16 + $0x34] sm:$0xf]
          %v1613 = vld [vmem:[#allocation16 + $0x38] sm:$0xf]
          %v1614 = vld [vmem:[#allocation16 + $0x3c] sm:$0xf]
          %v1631 = vunpack.c.l.b16 %v1599
          %v1632 = vunpack.c.l.b16 %v1600
          %v1633 = vunpack.c.l.b16 %v1601
          %v1634 = vunpack.c.l.b16 %v1602
          %v1635 = vunpack.c.l.b16 %v1603
          %v1636 = vunpack.c.l.b16 %v1604
          %v1637 = vunpack.c.l.b16 %v1605
          %v1638 = vunpack.c.l.b16 %v1606
          %v1639 = vunpack.c.l.b16 %v1607
          %v1640 = vunpack.c.l.b16 %v1608
          %v1641 = vunpack.c.l.b16 %v1609
          %v1642 = vunpack.c.l.b16 %v1610
          %v1643 = vunpack.c.l.b16 %v1611
          %v1644 = vunpack.c.l.b16 %v1612
          %v1645 = vunpack.c.l.b16 %v1613
          %v1646 = vunpack.c.l.b16 %v1614
          %v1647 = vpack.c.b16 %v1632, %v1631
          %v1648 = vpack.c.b16 %v1634, %v1633
          %v1649 = vpack.c.b16 %v1636, %v1635
          %v1650 = vpack.c.b16 %v1638, %v1637
          %v1651 = vpack.c.b16 %v1640, %v1639
          %v1652 = vpack.c.b16 %v1642, %v1641
          %v1653 = vpack.c.b16 %v1644, %v1643
          %v1654 = vpack.c.b16 %v1646, %v1645
          %1663 = vmatprep.subr.bf16.mxu0 0
          %1664 = vmatpush1.bf16.msra.mxu0 %v1647
          %1665 = vmatprep.subr.bf16.mxu0 0
          %1666 = vmatpush1.bf16.msra.mxu0 %v1648
          %1667 = vmatprep.subr.bf16.mxu0 0
          %1668 = vmatpush1.bf16.msra.mxu0 %v1649
          %1669 = vmatprep.subr.bf16.mxu0 0
          %1670 = vmatpush1.bf16.msra.mxu0 %v1650
          %1671 = vmatprep.subr.bf16.mxu0 0
          %1672 = vmatpush1.bf16.msra.mxu0 %v1651
          %1673 = vmatprep.subr.bf16.mxu0 0
          %1674 = vmatpush1.bf16.msra.mxu0 %v1652
          %1675 = vmatprep.subr.bf16.mxu0 0
          %1676 = vmatpush1.bf16.msra.mxu0 %v1653
          %1677 = vmatprep.subr.bf16.mxu0 0
          %1678 = vmatpush1.bf16.msra.mxu0 %v1654
          %1679 = vmatprep.subr.bf16.mxu0 0
          %1680 = vmatpush1.bf16.msra.mxu0 0
          %1681 = vmatprep.subr.bf16.mxu0 0
          %1682 = vmatpush1.bf16.msra.mxu0 0
          %1683 = vmatprep.subr.bf16.mxu0 0
          %1684 = vmatpush1.bf16.msra.mxu0 0
          %1685 = vmatprep.subr.bf16.mxu0 0
          %1686 = vmatpush1.bf16.msra.mxu0 0
          %1687 = vmatprep.subr.bf16.mxu0 0
          %1688 = vmatpush1.bf16.msra.mxu0 0
          %1689 = vmatprep.subr.bf16.mxu0 0
          %1690 = vmatpush1.bf16.msra.mxu0 0
          %1691 = vmatprep.subr.bf16.mxu0 0
          %1692 = vmatpush1.bf16.msra.mxu0 0
          %1693 = vmatprep.subr.bf16.mxu0 0
          %1694 = vmatpush1.bf16.msra.mxu0 0
          %1695 = vmatprep.mubr.bf16.mxu0 0
          %1696 = vmatmul.mubr.bf16.gmra.mrb[0].mxu0 %v1598
          %v1697 = vpop.f32.mrb[0].mxu0
          %v1698 = vadd.f32 0.0, %v1697
          %v1699 = vpop.f32.mrb[0].mxu0
          %v1700 = vpop.f32.mrb[0].mxu0
          %v1701 = vpop.f32.mrb[0].mxu0
          %1702 = vdwg.mxu0
          %v1703 = vadd.f32 %v1597, %v1698
          %1704 = vst [vmem:[#allocation20] sm:$0xff] %v1703
          %v1705 = vld [vmem:[#allocation2] sm:$0xff]
          %v1706 = vld [vmem:[#allocation2 + $0x8] sm:$0xff]
          %v1707 = vld [vmem:[#allocation2 + $0x10] sm:$0xff]
          %v1708 = vld [vmem:[#allocation2 + $0x18] sm:$0xff]
          %v1709 = vld [vmem:[#allocation2 + $0x20] sm:$0xff]
          %v1710 = vld [vmem:[#allocation2 + $0x28] sm:$0xff]
          %v1711 = vld [vmem:[#allocation2 + $0x30] sm:$0xff]
          %v1712 = vld [vmem:[#allocation2 + $0x38] sm:$0xff]
          %v1713 = vld [vmem:[#allocation2 + $0x40] sm:$0xff]
          %v1714 = vld [vmem:[#allocation2 + $0x48] sm:$0xff]
          %v1715 = vld [vmem:[#allocation2 + $0x50] sm:$0xff]
          %v1716 = vld [vmem:[#allocation2 + $0x58] sm:$0xff]
          %v1717 = vld [vmem:[#allocation2 + $0x60] sm:$0xff]
          %v1718 = vld [vmem:[#allocation2 + $0x68] sm:$0xff]
          %v1719 = vld [vmem:[#allocation2 + $0x70] sm:$0xff]
          %v1720 = vld [vmem:[#allocation2 + $0x78] sm:$0xff]
          %v1721 = vld [vmem:[#allocation2 + $0x80] sm:$0xff]
          %v1722 = vld [vmem:[#allocation2 + $0x88] sm:$0xff]
          %v1723 = vld [vmem:[#allocation2 + $0x90] sm:$0xff]
          %v1724 = vld [vmem:[#allocation2 + $0x98] sm:$0xff]
          %v1725 = vld [vmem:[#allocation2 + $0xa0] sm:$0xff]
          %v1726 = vld [vmem:[#allocation2 + $0xa8] sm:$0xff]
          %v1727 = vld [vmem:[#allocation2 + $0xb0] sm:$0xff]
          %v1728 = vld [vmem:[#allocation2 + $0xb8] sm:$0xff]
          %v1729 = vld [vmem:[#allocation2 + $0xc0] sm:$0xff]
          %v1730 = vld [vmem:[#allocation2 + $0xc8] sm:$0xff]
          %v1731 = vld [vmem:[#allocation2 + $0xd0] sm:$0xff]
          %v1732 = vld [vmem:[#allocation2 + $0xd8] sm:$0xff]
          %v1733 = vld [vmem:[#allocation2 + $0xe0] sm:$0xff]
          %v1734 = vld [vmem:[#allocation2 + $0xe8] sm:$0xff]
          %v1735 = vld [vmem:[#allocation2 + $0xf0] sm:$0xff]
          %v1736 = vld [vmem:[#allocation2 + $0xf8] sm:$0xff]
          %s1737 = sshra.s32 %s668, 4
          %s1738 = sand.u32 %s668, 15
          %s1739 = smul.addr %s1737, 8
          %s1740 = scalar_lea.vmem [#allocation2], %s1739
          %v1741 = vld [vmem:[%s1740] sm:$0xff]
          %v1742 = vld [vmem:[%s1740 + $0x8] sm:$0xff]
          %v1743 = vld [vmem:[%s1740 + $0x10] sm:$0xff]
          %v1744 = vld [vmem:[%s1740 + $0x18] sm:$0xff]
          %v1745 = vld [vmem:[%s1740 + $0x20] sm:$0xff]
          %v1746 = vld [vmem:[%s1740 + $0x28] sm:$0xff]
          %v1747 = vld [vmem:[%s1740 + $0x30] sm:$0xff]
          %v1748 = vld [vmem:[%s1740 + $0x38] sm:$0xff]
          %v1749 = vld [vmem:[%s1740 + $0x40] sm:$0xff]
          %v1750 = vld [vmem:[%s1740 + $0x48] sm:$0xff]
          %v1751 = vld [vmem:[%s1740 + $0x50] sm:$0xff]
          %v1752 = vld [vmem:[%s1740 + $0x58] sm:$0xff]
          %v1753 = vld [vmem:[%s1740 + $0x60] sm:$0xff]
          %v1754 = vld [vmem:[%s1740 + $0x68] sm:$0xff]
          %v1755 = vld [vmem:[%s1740 + $0x70] sm:$0xff]
          %v1756 = vld [vmem:[%s1740 + $0x78] sm:$0xff]
          %v1757 = vunpack.c.l.bf16 %v1741
          %v1758 = vunpack.c.h.bf16 %v1741
          %v1759 = vunpack.c.l.bf16 %v1742
          %v1760 = vunpack.c.h.bf16 %v1742
          %v1761 = vunpack.c.l.bf16 %v1743
          %v1762 = vunpack.c.h.bf16 %v1743
          %v1763 = vunpack.c.l.bf16 %v1744
          %v1764 = vunpack.c.h.bf16 %v1744
          %v1765 = vunpack.c.l.bf16 %v1745
          %v1766 = vunpack.c.h.bf16 %v1745
          %v1767 = vunpack.c.l.bf16 %v1746
          %v1768 = vunpack.c.h.bf16 %v1746
          %v1769 = vunpack.c.l.bf16 %v1747
          %v1770 = vunpack.c.h.bf16 %v1747
          %v1771 = vunpack.c.l.bf16 %v1748
          %v1772 = vunpack.c.h.bf16 %v1748
          %v1773 = vunpack.c.l.bf16 %v1749
          %v1774 = vunpack.c.h.bf16 %v1749
          %v1775 = vunpack.c.l.bf16 %v1750
          %v1776 = vunpack.c.h.bf16 %v1750
          %v1777 = vunpack.c.l.bf16 %v1751
          %v1778 = vunpack.c.h.bf16 %v1751
          %v1779 = vunpack.c.l.bf16 %v1752
          %v1780 = vunpack.c.h.bf16 %v1752
          %v1781 = vunpack.c.l.bf16 %v1753
          %v1782 = vunpack.c.h.bf16 %v1753
          %v1783 = vunpack.c.l.bf16 %v1754
          %v1784 = vunpack.c.h.bf16 %v1754
          %v1785 = vunpack.c.l.bf16 %v1755
          %v1786 = vunpack.c.h.bf16 %v1755
          %v1787 = vunpack.c.l.bf16 %v1756
          %v1788 = vunpack.c.h.bf16 %v1756
          %v1853 = vunpack.c.l.b16 %v1350
          %v1854 = vunpack.c.h.b16 %v1350
          %v1855 = vunpack.c.l.b16 %v1351
          %v1856 = vunpack.c.h.b16 %v1351
          %v1857 = vunpack.c.l.b16 %v1352
          %v1858 = vunpack.c.h.b16 %v1352
          %v1859 = vunpack.c.l.b16 %v1353
          %v1860 = vunpack.c.h.b16 %v1353
          %v1861 = vunpack.c.l.b16 %v1354
          %v1862 = vunpack.c.h.b16 %v1354
          %v1863 = vunpack.c.l.b16 %v1355
          %v1864 = vunpack.c.h.b16 %v1355
          %v1865 = vunpack.c.l.b16 %v1356
          %v1866 = vunpack.c.h.b16 %v1356
          %v1867 = vunpack.c.l.b16 %v1357
          %v1868 = vunpack.c.h.b16 %v1357
          %v1869 = vunpack.c.l.b16 %v1358
          %v1870 = vunpack.c.h.b16 %v1358
          %v1871 = vunpack.c.l.b16 %v1359
          %v1872 = vunpack.c.h.b16 %v1359
          %v1873 = vunpack.c.l.b16 %v1360
          %v1874 = vunpack.c.h.b16 %v1360
          %v1875 = vunpack.c.l.b16 %v1361
          %v1876 = vunpack.c.h.b16 %v1361
          %v1877 = vunpack.c.l.b16 %v1362
          %v1878 = vunpack.c.h.b16 %v1362
          %v1879 = vunpack.c.l.b16 %v1363
          %v1880 = vunpack.c.h.b16 %v1363
          %v1881 = vunpack.c.l.b16 %v1364
          %v1882 = vunpack.c.h.b16 %v1364
          %v1883 = vunpack.c.l.b16 %v1365
          %v1884 = vunpack.c.h.b16 %v1365
          %v1885 = vunpack.c.l.b16 %v1366
          %v1886 = vunpack.c.h.b16 %v1366
          %v1887 = vunpack.c.l.b16 %v1367
          %v1888 = vunpack.c.h.b16 %v1367
          %v1889 = vunpack.c.l.b16 %v1368
          %v1890 = vunpack.c.h.b16 %v1368
          %v1891 = vunpack.c.l.b16 %v1369
          %v1892 = vunpack.c.h.b16 %v1369
          %v1893 = vunpack.c.l.b16 %v1370
          %v1894 = vunpack.c.h.b16 %v1370
          %v1895 = vunpack.c.l.b16 %v1371
          %v1896 = vunpack.c.h.b16 %v1371
          %v1897 = vunpack.c.l.b16 %v1372
          %v1898 = vunpack.c.h.b16 %v1372
          %v1899 = vunpack.c.l.b16 %v1373
          %v1900 = vunpack.c.h.b16 %v1373
          %v1901 = vunpack.c.l.b16 %v1374
          %v1902 = vunpack.c.h.b16 %v1374
          %v1903 = vunpack.c.l.b16 %v1375
          %v1904 = vunpack.c.h.b16 %v1375
          %v1905 = vunpack.c.l.b16 %v1376
          %v1906 = vunpack.c.h.b16 %v1376
          %v1907 = vunpack.c.l.b16 %v1377
          %v1908 = vunpack.c.h.b16 %v1377
          %v1909 = vunpack.c.l.b16 %v1378
          %v1910 = vunpack.c.h.b16 %v1378
          %v1911 = vunpack.c.l.b16 %v1379
          %v1912 = vunpack.c.h.b16 %v1379
          %v1913 = vunpack.c.l.b16 %v1380
          %v1914 = vunpack.c.h.b16 %v1380
          %v1915 = vunpack.c.l.b16 %v1381
          %v1916 = vunpack.c.h.b16 %v1381
          %v1917 = vunpack.c.l.b16 %v1382
          %v1918 = vunpack.c.h.b16 %v1382
          %v1919 = vunpack.c.l.b16 %v1383
          %v1920 = vunpack.c.h.b16 %v1383
          %v1921 = vunpack.c.l.b16 %v1384
          %v1922 = vunpack.c.h.b16 %v1384
          %v1923 = vunpack.c.l.b16 %v1385
          %v1924 = vunpack.c.h.b16 %v1385
          %v1925 = vunpack.c.l.b16 %v1386
          %v1926 = vunpack.c.h.b16 %v1386
          %v1927 = vunpack.c.l.b16 %v1387
          %v1928 = vunpack.c.h.b16 %v1387
          %v1929 = vunpack.c.l.b16 %v1388
          %v1930 = vunpack.c.h.b16 %v1388
          %v1931 = vunpack.c.l.b16 %v1389
          %v1932 = vunpack.c.h.b16 %v1389
          %v1933 = vunpack.c.l.b16 %v1390
          %v1934 = vunpack.c.h.b16 %v1390
          %v1935 = vunpack.c.l.b16 %v1391
          %v1936 = vunpack.c.h.b16 %v1391
          %v1937 = vunpack.c.l.b16 %v1392
          %v1938 = vunpack.c.h.b16 %v1392
          %v1939 = vunpack.c.l.b16 %v1393
          %v1940 = vunpack.c.h.b16 %v1393
          %v1941 = vunpack.c.l.b16 %v1394
          %v1942 = vunpack.c.h.b16 %v1394
          %v1943 = vunpack.c.l.b16 %v1395
          %v1944 = vunpack.c.h.b16 %v1395
          %v1945 = vunpack.c.l.b16 %v1396
          %v1946 = vunpack.c.h.b16 %v1396
          %v1947 = vunpack.c.l.b16 %v1397
          %v1948 = vunpack.c.h.b16 %v1397
          %v1949 = vunpack.c.l.b16 %v1398
          %v1950 = vunpack.c.h.b16 %v1398
          %v1951 = vunpack.c.l.b16 %v1399
          %v1952 = vunpack.c.h.b16 %v1399
          %v1953 = vunpack.c.l.b16 %v1400
          %v1954 = vunpack.c.h.b16 %v1400
          %v1955 = vunpack.c.l.b16 %v1401
          %v1956 = vunpack.c.h.b16 %v1401
          %v1957 = vunpack.c.l.b16 %v1402
          %v1958 = vunpack.c.h.b16 %v1402
          %v1959 = vunpack.c.l.b16 %v1403
          %v1960 = vunpack.c.h.b16 %v1403
          %v1961 = vunpack.c.l.b16 %v1404
          %v1962 = vunpack.c.h.b16 %v1404
          %v1963 = vunpack.c.l.b16 %v1405
          %v1964 = vunpack.c.h.b16 %v1405
          %v1965 = vunpack.c.l.b16 %v1406
          %v1966 = vunpack.c.h.b16 %v1406
          %v1967 = vunpack.c.l.b16 %v1407
          %v1968 = vunpack.c.h.b16 %v1407
          %v1969 = vunpack.c.l.b16 %v1408
          %v1970 = vunpack.c.h.b16 %v1408
          %v1971 = vunpack.c.l.b16 %v1409
          %v1972 = vunpack.c.h.b16 %v1409
          %v1973 = vunpack.c.l.b16 %v1410
          %v1974 = vunpack.c.h.b16 %v1410
          %v1975 = vunpack.c.l.b16 %v1411
          %v1976 = vunpack.c.h.b16 %v1411
          %v1977 = vunpack.c.l.b16 %v1412
          %v1978 = vunpack.c.h.b16 %v1412
          %v1979 = vunpack.c.l.b16 %v1413
          %v1980 = vunpack.c.h.b16 %v1413
          %v1981 = vpack.c.b16 %v1857, %v1853
          %v1982 = vpack.c.b16 %v1858, %v1854
          %v1983 = vpack.c.b16 %v1859, %v1855
          %v1984 = vpack.c.b16 %v1860, %v1856
          %v1985 = vpack.c.b16 %v1865, %v1861
          %v1986 = vpack.c.b16 %v1866, %v1862
          %v1987 = vpack.c.b16 %v1867, %v1863
          %v1988 = vpack.c.b16 %v1868, %v1864
          %v1989 = vpack.c.b16 %v1873, %v1869
          %v1990 = vpack.c.b16 %v1874, %v1870
          %v1991 = vpack.c.b16 %v1875, %v1871
          %v1992 = vpack.c.b16 %v1876, %v1872
          %v1993 = vpack.c.b16 %v1881, %v1877
          %v1994 = vpack.c.b16 %v1882, %v1878
          %v1995 = vpack.c.b16 %v1883, %v1879
          %v1996 = vpack.c.b16 %v1884, %v1880
          %v1997 = vpack.c.b16 %v1889, %v1885
          %v1998 = vpack.c.b16 %v1890, %v1886
          %v1999 = vpack.c.b16 %v1891, %v1887
          %v2000 = vpack.c.b16 %v1892, %v1888
          %v2001 = vpack.c.b16 %v1897, %v1893
          %v2002 = vpack.c.b16 %v1898, %v1894
          %v2003 = vpack.c.b16 %v1899, %v1895
          %v2004 = vpack.c.b16 %v1900, %v1896
          %v2005 = vpack.c.b16 %v1905, %v1901
          %v2006 = vpack.c.b16 %v1906, %v1902
          %v2007 = vpack.c.b16 %v1907, %v1903
          %v2008 = vpack.c.b16 %v1908, %v1904
          %v2009 = vpack.c.b16 %v1913, %v1909
          %v2010 = vpack.c.b16 %v1914, %v1910
          %v2011 = vpack.c.b16 %v1915, %v1911
          %v2012 = vpack.c.b16 %v1916, %v1912
          %v2013 = vpack.c.b16 %v1921, %v1917
          %v2014 = vpack.c.b16 %v1922, %v1918
          %v2015 = vpack.c.b16 %v1923, %v1919
          %v2016 = vpack.c.b16 %v1924, %v1920
          %v2017 = vpack.c.b16 %v1929, %v1925
          %v2018 = vpack.c.b16 %v1930, %v1926
          %v2019 = vpack.c.b16 %v1931, %v1927
          %v2020 = vpack.c.b16 %v1932, %v1928
          %v2021 = vpack.c.b16 %v1937, %v1933
          %v2022 = vpack.c.b16 %v1938, %v1934
          %v2023 = vpack.c.b16 %v1939, %v1935
          %v2024 = vpack.c.b16 %v1940, %v1936
          %v2025 = vpack.c.b16 %v1945, %v1941
          %v2026 = vpack.c.b16 %v1946, %v1942
          %v2027 = vpack.c.b16 %v1947, %v1943
          %v2028 = vpack.c.b16 %v1948, %v1944
          %v2029 = vpack.c.b16 %v1953, %v1949
          %v2030 = vpack.c.b16 %v1954, %v1950
          %v2031 = vpack.c.b16 %v1955, %v1951
          %v2032 = vpack.c.b16 %v1956, %v1952
          %v2033 = vpack.c.b16 %v1961, %v1957
          %v2034 = vpack.c.b16 %v1962, %v1958
          %v2035 = vpack.c.b16 %v1963, %v1959
          %v2036 = vpack.c.b16 %v1964, %v1960
          %v2037 = vpack.c.b16 %v1969, %v1965
          %v2038 = vpack.c.b16 %v1970, %v1966
          %v2039 = vpack.c.b16 %v1971, %v1967
          %v2040 = vpack.c.b16 %v1972, %v1968
          %v2041 = vpack.c.b16 %v1977, %v1973
          %v2042 = vpack.c.b16 %v1978, %v1974
          %v2043 = vpack.c.b16 %v1979, %v1975
          %v2044 = vpack.c.b16 %v1980, %v1976
          %2109 = vmatprep.subr.bf16.mxu0 0
          %2110 = vmatpush1.bf16.msra.mxu0 %v1705
          %2111 = vmatprep.subr.bf16.mxu0 0
          %2112 = vmatpush1.bf16.msra.mxu0 %v1706
          %2113 = vmatprep.subr.bf16.mxu0 0
          %2114 = vmatpush1.bf16.msra.mxu0 %v1707
          %2115 = vmatprep.subr.bf16.mxu0 0
          %2116 = vmatpush1.bf16.msra.mxu0 %v1708
          %2117 = vmatprep.subr.bf16.mxu0 0
          %2118 = vmatpush1.bf16.msra.mxu0 %v1709
          %2119 = vmatprep.subr.bf16.mxu0 0
          %2120 = vmatpush1.bf16.msra.mxu0 %v1710
          %2121 = vmatprep.subr.bf16.mxu0 0
          %2122 = vmatpush1.bf16.msra.mxu0 %v1711
          %2123 = vmatprep.subr.bf16.mxu0 0
          %2124 = vmatpush1.bf16.msra.mxu0 %v1712
          %2125 = vmatprep.subr.bf16.mxu0 0
          %2126 = vmatpush1.bf16.msra.mxu0 %v1713
          %2127 = vmatprep.subr.bf16.mxu0 0
          %2128 = vmatpush1.bf16.msra.mxu0 %v1714
          %2129 = vmatprep.subr.bf16.mxu0 0
          %2130 = vmatpush1.bf16.msra.mxu0 %v1715
          %2131 = vmatprep.subr.bf16.mxu0 0
          %2132 = vmatpush1.bf16.msra.mxu0 %v1716
          %2133 = vmatprep.subr.bf16.mxu0 0
          %2134 = vmatpush1.bf16.msra.mxu0 %v1717
          %2135 = vmatprep.subr.bf16.mxu0 0
          %2136 = vmatpush1.bf16.msra.mxu0 %v1718
          %2137 = vmatprep.subr.bf16.mxu0 0
          %2138 = vmatpush1.bf16.msra.mxu0 %v1719
          %2139 = vmatprep.subr.bf16.mxu0 0
          %2140 = vmatpush1.bf16.msra.mxu0 %v1720
          %2141 = vmatprep.mubr.bf16.mxu0 %v1982
          %2142 = vmatmul.mubr.bf16.gmra.mrb[0].mxu0 %v1981
          %v2143 = vpop.f32.mrb[0].mxu0
          %v2144 = vadd.f32 %v1757, %v2143
          %v2145 = vpop.f32.mrb[0].mxu0
          %v2146 = vpop.f32.mrb[0].mxu0
          %v2147 = vadd.f32 %v1758, %v2146
          %v2148 = vpop.f32.mrb[0].mxu0
          %2149 = vmatprep.mubr.bf16.mxu0 %v1986
          %2150 = vmatmul.mubr.bf16.gmra.mrb[0].mxu0 %v1985
          %v2151 = vpop.f32.mrb[0].mxu0
          %v2152 = vadd.f32 %v1759, %v2151
          %v2153 = vpop.f32.mrb[0].mxu0
          %v2154 = vpop.f32.mrb[0].mxu0
          %v2155 = vadd.f32 %v1760, %v2154
          %v2156 = vpop.f32.mrb[0].mxu0
          %2157 = vmatprep.mubr.bf16.mxu0 %v1990
          %2158 = vmatmul.mubr.bf16.gmra.mrb[0].mxu0 %v1989
          %v2159 = vpop.f32.mrb[0].mxu0
          %v2160 = vadd.f32 %v1761, %v2159
          %v2161 = vpop.f32.mrb[0].mxu0
          %v2162 = vpop.f32.mrb[0].mxu0
          %v2163 = vadd.f32 %v1762, %v2162
          %v2164 = vpop.f32.mrb[0].mxu0
          %2165 = vmatprep.mubr.bf16.mxu0 %v1994
          %2166 = vmatmul.mubr.bf16.gmra.mrb[0].mxu0 %v1993
          %v2167 = vpop.f32.mrb[0].mxu0
          %v2168 = vadd.f32 %v1763, %v2167
          %v2169 = vpop.f32.mrb[0].mxu0
          %v2170 = vpop.f32.mrb[0].mxu0
          %v2171 = vadd.f32 %v1764, %v2170
          %v2172 = vpop.f32.mrb[0].mxu0
          %2173 = vmatprep.mubr.bf16.mxu0 %v1998
          %2174 = vmatmul.mubr.bf16.gmra.mrb[0].mxu0 %v1997
          %v2175 = vpop.f32.mrb[0].mxu0
          %v2176 = vadd.f32 %v1765, %v2175
          %v2177 = vpop.f32.mrb[0].mxu0
          %v2178 = vpop.f32.mrb[0].mxu0
          %v2179 = vadd.f32 %v1766, %v2178
          %v2180 = vpop.f32.mrb[0].mxu0
          %2181 = vmatprep.mubr.bf16.mxu0 %v2002
          %2182 = vmatmul.mubr.bf16.gmra.mrb[0].mxu0 %v2001
          %v2183 = vpop.f32.mrb[0].mxu0
          %v2184 = vadd.f32 %v1767, %v2183
          %v2185 = vpop.f32.mrb[0].mxu0
          %v2186 = vpop.f32.mrb[0].mxu0
          %v2187 = vadd.f32 %v1768, %v2186
          %v2188 = vpop.f32.mrb[0].mxu0
          %2189 = vmatprep.mubr.bf16.mxu0 %v2006
          %2190 = vmatmul.mubr.bf16.gmra.mrb[0].mxu0 %v2005
          %v2191 = vpop.f32.mrb[0].mxu0
          %v2192 = vadd.f32 %v1769, %v2191
          %v2193 = vpop.f32.mrb[0].mxu0
          %v2194 = vpop.f32.mrb[0].mxu0
          %v2195 = vadd.f32 %v1770, %v2194
          %v2196 = vpop.f32.mrb[0].mxu0
          %2197 = vmatprep.mubr.bf16.mxu0 %v2010
          %2198 = vmatmul.mubr.bf16.gmra.mrb[0].mxu0 %v2009
          %v2199 = vpop.f32.mrb[0].mxu0
          %v2200 = vadd.f32 %v1771, %v2199
          %v2201 = vpop.f32.mrb[0].mxu0
          %v2202 = vpop.f32.mrb[0].mxu0
          %v2203 = vadd.f32 %v1772, %v2202
          %v2204 = vpop.f32.mrb[0].mxu0
          %2205 = vmatprep.mubr.bf16.mxu0 %v2014
          %2206 = vmatmul.mubr.bf16.gmra.mrb[0].mxu0 %v2013
          %v2207 = vpop.f32.mrb[0].mxu0
          %v2208 = vadd.f32 %v1773, %v2207
          %v2209 = vpop.f32.mrb[0].mxu0
          %v2210 = vpop.f32.mrb[0].mxu0
          %v2211 = vadd.f32 %v1774, %v2210
          %v2212 = vpop.f32.mrb[0].mxu0
          %2213 = vmatprep.mubr.bf16.mxu0 %v2018
          %2214 = vmatmul.mubr.bf16.gmra.mrb[0].mxu0 %v2017
          %v2215 = vpop.f32.mrb[0].mxu0
          %v2216 = vadd.f32 %v1775, %v2215
          %v2217 = vpop.f32.mrb[0].mxu0
          %v2218 = vpop.f32.mrb[0].mxu0
          %v2219 = vadd.f32 %v1776, %v2218
          %v2220 = vpop.f32.mrb[0].mxu0
          %2221 = vmatprep.mubr.bf16.mxu0 %v2022
          %2222 = vmatmul.mubr.bf16.gmra.mrb[0].mxu0 %v2021
          %v2223 = vpop.f32.mrb[0].mxu0
          %v2224 = vadd.f32 %v1777, %v2223
          %v2225 = vpop.f32.mrb[0].mxu0
          %v2226 = vpop.f32.mrb[0].mxu0
          %v2227 = vadd.f32 %v1778, %v2226
          %v2228 = vpop.f32.mrb[0].mxu0
          %2229 = vmatprep.mubr.bf16.mxu0 %v2026
          %2230 = vmatmul.mubr.bf16.gmra.mrb[0].mxu0 %v2025
          %v2231 = vpop.f32.mrb[0].mxu0
          %v2232 = vadd.f32 %v1779, %v2231
          %v2233 = vpop.f32.mrb[0].mxu0
          %v2234 = vpop.f32.mrb[0].mxu0
          %v2235 = vadd.f32 %v1780, %v2234
          %v2236 = vpop.f32.mrb[0].mxu0
          %2237 = vmatprep.mubr.bf16.mxu0 %v2030
          %2238 = vmatmul.mubr.bf16.gmra.mrb[0].mxu0 %v2029
          %v2239 = vpop.f32.mrb[0].mxu0
          %v2240 = vadd.f32 %v1781, %v2239
          %v2241 = vpop.f32.mrb[0].mxu0
          %v2242 = vpop.f32.mrb[0].mxu0
          %v2243 = vadd.f32 %v1782, %v2242
          %v2244 = vpop.f32.mrb[0].mxu0
          %2245 = vmatprep.mubr.bf16.mxu0 %v2034
          %2246 = vmatmul.mubr.bf16.gmra.mrb[0].mxu0 %v2033
          %v2247 = vpop.f32.mrb[0].mxu0
          %v2248 = vadd.f32 %v1783, %v2247
          %v2249 = vpop.f32.mrb[0].mxu0
          %v2250 = vpop.f32.mrb[0].mxu0
          %v2251 = vadd.f32 %v1784, %v2250
          %v2252 = vpop.f32.mrb[0].mxu0
          %2253 = vmatprep.mubr.bf16.mxu0 %v2038
          %2254 = vmatmul.mubr.bf16.gmra.mrb[0].mxu0 %v2037
          %v2255 = vpop.f32.mrb[0].mxu0
          %v2256 = vadd.f32 %v1785, %v2255
          %v2257 = vpop.f32.mrb[0].mxu0
          %v2258 = vpop.f32.mrb[0].mxu0
          %v2259 = vadd.f32 %v1786, %v2258
          %v2260 = vpop.f32.mrb[0].mxu0
          %2261 = vmatprep.mubr.bf16.mxu0 %v2042
          %2262 = vmatmul.mubr.bf16.gmra.mrb[0].mxu0 %v2041
          %v2263 = vpop.f32.mrb[0].mxu0
          %v2264 = vadd.f32 %v1787, %v2263
          %v2265 = vpop.f32.mrb[0].mxu0
          %v2266 = vpop.f32.mrb[0].mxu0
          %v2267 = vadd.f32 %v1788, %v2266
          %v2268 = vpop.f32.mrb[0].mxu0
          %2269 = vdwg.mxu0
          %2270 = vmatprep.subr.bf16.mxu0 0
          %2271 = vmatpush1.bf16.msra.mxu0 %v1721
          %2272 = vmatprep.subr.bf16.mxu0 0
          %2273 = vmatpush1.bf16.msra.mxu0 %v1722
          %2274 = vmatprep.subr.bf16.mxu0 0
          %2275 = vmatpush1.bf16.msra.mxu0 %v1723
          %2276 = vmatprep.subr.bf16.mxu0 0
          %2277 = vmatpush1.bf16.msra.mxu0 %v1724
          %2278 = vmatprep.subr.bf16.mxu0 0
          %2279 = vmatpush1.bf16.msra.mxu0 %v1725
          %2280 = vmatprep.subr.bf16.mxu0 0
          %2281 = vmatpush1.bf16.msra.mxu0 %v1726
          %2282 = vmatprep.subr.bf16.mxu0 0
          %2283 = vmatpush1.bf16.msra.mxu0 %v1727
          %2284 = vmatprep.subr.bf16.mxu0 0
          %2285 = vmatpush1.bf16.msra.mxu0 %v1728
          %2286 = vmatprep.subr.bf16.mxu0 0
          %2287 = vmatpush1.bf16.msra.mxu0 %v1729
          %2288 = vmatprep.subr.bf16.mxu0 0
          %2289 = vmatpush1.bf16.msra.mxu0 %v1730
          %2290 = vmatprep.subr.bf16.mxu0 0
          %2291 = vmatpush1.bf16.msra.mxu0 %v1731
          %2292 = vmatprep.subr.bf16.mxu0 0
          %2293 = vmatpush1.bf16.msra.mxu0 %v1732
          %2294 = vmatprep.subr.bf16.mxu0 0
          %2295 = vmatpush1.bf16.msra.mxu0 %v1733
          %2296 = vmatprep.subr.bf16.mxu0 0
          %2297 = vmatpush1.bf16.msra.mxu0 %v1734
          %2298 = vmatprep.subr.bf16.mxu0 0
          %2299 = vmatpush1.bf16.msra.mxu0 %v1735
          %2300 = vmatprep.subr.bf16.mxu0 0
          %2301 = vmatpush1.bf16.msra.mxu0 %v1736
          %2302 = vmatprep.mubr.bf16.mxu0 %v1984
          %2303 = vmatmul.mubr.bf16.gmra.mrb[0].mxu0 %v1983
          %v2304 = vpop.f32.mrb[0].mxu0
          %v2305 = vadd.f32 %v2144, %v2304
          %v2306 = vpop.f32.mrb[0].mxu0
          %v2307 = vpop.f32.mrb[0].mxu0
          %v2308 = vadd.f32 %v2147, %v2307
          %v2309 = vpop.f32.mrb[0].mxu0
          %2310 = vmatprep.mubr.bf16.mxu0 %v1988
          %2311 = vmatmul.mubr.bf16.gmra.mrb[0].mxu0 %v1987
          %v2312 = vpop.f32.mrb[0].mxu0
          %v2313 = vadd.f32 %v2152, %v2312
          %v2314 = vpop.f32.mrb[0].mxu0
          %v2315 = vpop.f32.mrb[0].mxu0
          %v2316 = vadd.f32 %v2155, %v2315
          %v2317 = vpop.f32.mrb[0].mxu0
          %2318 = vmatprep.mubr.bf16.mxu0 %v1992
          %2319 = vmatmul.mubr.bf16.gmra.mrb[0].mxu0 %v1991
          %v2320 = vpop.f32.mrb[0].mxu0
          %v2321 = vadd.f32 %v2160, %v2320
          %v2322 = vpop.f32.mrb[0].mxu0
          %v2323 = vpop.f32.mrb[0].mxu0
          %v2324 = vadd.f32 %v2163, %v2323
          %v2325 = vpop.f32.mrb[0].mxu0
          %2326 = vmatprep.mubr.bf16.mxu0 %v1996
          %2327 = vmatmul.mubr.bf16.gmra.mrb[0].mxu0 %v1995
          %v2328 = vpop.f32.mrb[0].mxu0
          %v2329 = vadd.f32 %v2168, %v2328
          %v2330 = vpop.f32.mrb[0].mxu0
          %v2331 = vpop.f32.mrb[0].mxu0
          %v2332 = vadd.f32 %v2171, %v2331
          %v2333 = vpop.f32.mrb[0].mxu0
          %2334 = vmatprep.mubr.bf16.mxu0 %v2000
          %2335 = vmatmul.mubr.bf16.gmra.mrb[0].mxu0 %v1999
          %v2336 = vpop.f32.mrb[0].mxu0
          %v2337 = vadd.f32 %v2176, %v2336
          %v2338 = vpop.f32.mrb[0].mxu0
          %v2339 = vpop.f32.mrb[0].mxu0
          %v2340 = vadd.f32 %v2179, %v2339
          %v2341 = vpop.f32.mrb[0].mxu0
          %2342 = vmatprep.mubr.bf16.mxu0 %v2004
          %2343 = vmatmul.mubr.bf16.gmra.mrb[0].mxu0 %v2003
          %v2344 = vpop.f32.mrb[0].mxu0
          %v2345 = vadd.f32 %v2184, %v2344
          %v2346 = vpop.f32.mrb[0].mxu0
          %v2347 = vpop.f32.mrb[0].mxu0
          %v2348 = vadd.f32 %v2187, %v2347
          %v2349 = vpop.f32.mrb[0].mxu0
          %2350 = vmatprep.mubr.bf16.mxu0 %v2008
          %2351 = vmatmul.mubr.bf16.gmra.mrb[0].mxu0 %v2007
          %v2352 = vpop.f32.mrb[0].mxu0
          %v2353 = vadd.f32 %v2192, %v2352
          %v2354 = vpop.f32.mrb[0].mxu0
          %v2355 = vpop.f32.mrb[0].mxu0
          %v2356 = vadd.f32 %v2195, %v2355
          %v2357 = vpop.f32.mrb[0].mxu0
          %2358 = vmatprep.mubr.bf16.mxu0 %v2012
          %2359 = vmatmul.mubr.bf16.gmra.mrb[0].mxu0 %v2011
          %v2360 = vpop.f32.mrb[0].mxu0
          %v2361 = vadd.f32 %v2200, %v2360
          %v2362 = vpop.f32.mrb[0].mxu0
          %v2363 = vpop.f32.mrb[0].mxu0
          %v2364 = vadd.f32 %v2203, %v2363
          %v2365 = vpop.f32.mrb[0].mxu0
          %2366 = vmatprep.mubr.bf16.mxu0 %v2016
          %2367 = vmatmul.mubr.bf16.gmra.mrb[0].mxu0 %v2015
          %v2368 = vpop.f32.mrb[0].mxu0
          %v2369 = vadd.f32 %v2208, %v2368
          %v2370 = vpop.f32.mrb[0].mxu0
          %v2371 = vpop.f32.mrb[0].mxu0
          %v2372 = vadd.f32 %v2211, %v2371
          %v2373 = vpop.f32.mrb[0].mxu0
          %2374 = vmatprep.mubr.bf16.mxu0 %v2020
          %2375 = vmatmul.mubr.bf16.gmra.mrb[0].mxu0 %v2019
          %v2376 = vpop.f32.mrb[0].mxu0
          %v2377 = vadd.f32 %v2216, %v2376
          %v2378 = vpop.f32.mrb[0].mxu0
          %v2379 = vpop.f32.mrb[0].mxu0
          %v2380 = vadd.f32 %v2219, %v2379
          %v2381 = vpop.f32.mrb[0].mxu0
          %2382 = vmatprep.mubr.bf16.mxu0 %v2024
          %2383 = vmatmul.mubr.bf16.gmra.mrb[0].mxu0 %v2023
          %v2384 = vpop.f32.mrb[0].mxu0
          %v2385 = vadd.f32 %v2224, %v2384
          %v2386 = vpop.f32.mrb[0].mxu0
          %v2387 = vpop.f32.mrb[0].mxu0
          %v2388 = vadd.f32 %v2227, %v2387
          %v2389 = vpop.f32.mrb[0].mxu0
          %2390 = vmatprep.mubr.bf16.mxu0 %v2028
          %2391 = vmatmul.mubr.bf16.gmra.mrb[0].mxu0 %v2027
          %v2392 = vpop.f32.mrb[0].mxu0
          %v2393 = vadd.f32 %v2232, %v2392
          %v2394 = vpop.f32.mrb[0].mxu0
          %v2395 = vpop.f32.mrb[0].mxu0
          %v2396 = vadd.f32 %v2235, %v2395
          %v2397 = vpop.f32.mrb[0].mxu0
          %2398 = vmatprep.mubr.bf16.mxu0 %v2032
          %2399 = vmatmul.mubr.bf16.gmra.mrb[0].mxu0 %v2031
          %v2400 = vpop.f32.mrb[0].mxu0
          %v2401 = vadd.f32 %v2240, %v2400
          %v2402 = vpop.f32.mrb[0].mxu0
          %v2403 = vpop.f32.mrb[0].mxu0
          %v2404 = vadd.f32 %v2243, %v2403
          %v2405 = vpop.f32.mrb[0].mxu0
          %2406 = vmatprep.mubr.bf16.mxu0 %v2036
          %2407 = vmatmul.mubr.bf16.gmra.mrb[0].mxu0 %v2035
          %v2408 = vpop.f32.mrb[0].mxu0
          %v2409 = vadd.f32 %v2248, %v2408
          %v2410 = vpop.f32.mrb[0].mxu0
          %v2411 = vpop.f32.mrb[0].mxu0
          %v2412 = vadd.f32 %v2251, %v2411
          %v2413 = vpop.f32.mrb[0].mxu0
          %2414 = vmatprep.mubr.bf16.mxu0 %v2040
          %2415 = vmatmul.mubr.bf16.gmra.mrb[0].mxu0 %v2039
          %v2416 = vpop.f32.mrb[0].mxu0
          %v2417 = vadd.f32 %v2256, %v2416
          %v2418 = vpop.f32.mrb[0].mxu0
          %v2419 = vpop.f32.mrb[0].mxu0
          %v2420 = vadd.f32 %v2259, %v2419
          %v2421 = vpop.f32.mrb[0].mxu0
          %2422 = vmatprep.mubr.bf16.mxu0 %v2044
          %2423 = vmatmul.mubr.bf16.gmra.mrb[0].mxu0 %v2043
          %v2424 = vpop.f32.mrb[0].mxu0
          %v2425 = vadd.f32 %v2264, %v2424
          %v2426 = vpop.f32.mrb[0].mxu0
          %v2427 = vpop.f32.mrb[0].mxu0
          %v2428 = vadd.f32 %v2267, %v2427
          %v2429 = vpop.f32.mrb[0].mxu0
          %2430 = vdwg.mxu0
          %v2431 = vld [vmem:[%s4] sm:$0x1]
          %v2433 = vlaneseq
          %v2434 = vshrl.u32 %v2433, 7
          %v2435 = vsub.s32 0, %v2434
          %v2436 = vrot.slane %v2431, %v2435
          %v2438 = vadd.f32 %v2305, %v2436
          %v2439 = vadd.f32 %v2308, %v2436
          %v2440 = vadd.f32 %v2313, %v2436
          %v2441 = vadd.f32 %v2316, %v2436
          %v2442 = vadd.f32 %v2321, %v2436
          %v2443 = vadd.f32 %v2324, %v2436
          %v2444 = vadd.f32 %v2329, %v2436
          %v2445 = vadd.f32 %v2332, %v2436
          %v2446 = vadd.f32 %v2337, %v2436
          %v2447 = vadd.f32 %v2340, %v2436
          %v2448 = vadd.f32 %v2345, %v2436
          %v2449 = vadd.f32 %v2348, %v2436
          %v2450 = vadd.f32 %v2353, %v2436
          %v2451 = vadd.f32 %v2356, %v2436
          %v2452 = vadd.f32 %v2361, %v2436
          %v2453 = vadd.f32 %v2364, %v2436
          %v2454 = vadd.f32 %v2369, %v2436
          %v2455 = vadd.f32 %v2372, %v2436
          %v2456 = vadd.f32 %v2377, %v2436
          %v2457 = vadd.f32 %v2380, %v2436
          %v2458 = vadd.f32 %v2385, %v2436
          %v2459 = vadd.f32 %v2388, %v2436
          %v2460 = vadd.f32 %v2393, %v2436
          %v2461 = vadd.f32 %v2396, %v2436
          %v2462 = vadd.f32 %v2401, %v2436
          %v2463 = vadd.f32 %v2404, %v2436
          %v2464 = vadd.f32 %v2409, %v2436
          %v2465 = vadd.f32 %v2412, %v2436
          %v2466 = vadd.f32 %v2417, %v2436
          %v2467 = vadd.f32 %v2420, %v2436
          %v2468 = vadd.f32 %v2425, %v2436
          %v2469 = vadd.f32 %v2428, %v2436
          %v2470 = vmax.f32 %v2438, 0.0
          %v2471 = vmax.f32 %v2439, 0.0
          %v2472 = vmax.f32 %v2440, 0.0
          %v2473 = vmax.f32 %v2441, 0.0
          %v2474 = vmax.f32 %v2442, 0.0
          %v2475 = vmax.f32 %v2443, 0.0
          %v2476 = vmax.f32 %v2444, 0.0
          %v2477 = vmax.f32 %v2445, 0.0
          %v2478 = vmax.f32 %v2446, 0.0
          %v2479 = vmax.f32 %v2447, 0.0
          %v2480 = vmax.f32 %v2448, 0.0
          %v2481 = vmax.f32 %v2449, 0.0
          %v2482 = vmax.f32 %v2450, 0.0
          %v2483 = vmax.f32 %v2451, 0.0
          %v2484 = vmax.f32 %v2452, 0.0
          %v2485 = vmax.f32 %v2453, 0.0
          %v2486 = vmax.f32 %v2454, 0.0
          %v2487 = vmax.f32 %v2455, 0.0
          %v2488 = vmax.f32 %v2456, 0.0
          %v2489 = vmax.f32 %v2457, 0.0
          %v2490 = vmax.f32 %v2458, 0.0
          %v2491 = vmax.f32 %v2459, 0.0
          %v2492 = vmax.f32 %v2460, 0.0
          %v2493 = vmax.f32 %v2461, 0.0
          %v2494 = vmax.f32 %v2462, 0.0
          %v2495 = vmax.f32 %v2463, 0.0
          %v2496 = vmax.f32 %v2464, 0.0
          %v2497 = vmax.f32 %v2465, 0.0
          %v2498 = vmax.f32 %v2466, 0.0
          %v2499 = vmax.f32 %v2467, 0.0
          %v2500 = vmax.f32 %v2468, 0.0
          %v2501 = vmax.f32 %v2469, 0.0
          %v2502 = vpack.c.bf16 %v2471, %v2470
          %v2503 = vpack.c.bf16 %v2473, %v2472
          %v2504 = vpack.c.bf16 %v2475, %v2474
          %v2505 = vpack.c.bf16 %v2477, %v2476
          %v2506 = vpack.c.bf16 %v2479, %v2478
          %v2507 = vpack.c.bf16 %v2481, %v2480
          %v2508 = vpack.c.bf16 %v2483, %v2482
          %v2509 = vpack.c.bf16 %v2485, %v2484
          %v2510 = vpack.c.bf16 %v2487, %v2486
          %v2511 = vpack.c.bf16 %v2489, %v2488
          %v2512 = vpack.c.bf16 %v2491, %v2490
          %v2513 = vpack.c.bf16 %v2493, %v2492
          %v2514 = vpack.c.bf16 %v2495, %v2494
          %v2515 = vpack.c.bf16 %v2497, %v2496
          %v2516 = vpack.c.bf16 %v2499, %v2498
          %v2517 = vpack.c.bf16 %v2501, %v2500
          %v2518 = vld [vmem:[#allocation11] sm:$0xf]
          %v2519 = vld [vmem:[#allocation11 + $0x4] sm:$0xf]
          %v2520 = vld [vmem:[#allocation11 + $0x8] sm:$0xf]
          %v2521 = vld [vmem:[#allocation11 + $0xc] sm:$0xf]
          %v2522 = vld [vmem:[#allocation11 + $0x10] sm:$0xf]
          %v2523 = vld [vmem:[#allocation11 + $0x14] sm:$0xf]
          %v2524 = vld [vmem:[#allocation11 + $0x18] sm:$0xf]
          %v2525 = vld [vmem:[#allocation11 + $0x1c] sm:$0xf]
          %v2526 = vld [vmem:[#allocation11 + $0x20] sm:$0xf]
          %v2527 = vld [vmem:[#allocation11 + $0x24] sm:$0xf]
          %v2528 = vld [vmem:[#allocation11 + $0x28] sm:$0xf]
          %v2529 = vld [vmem:[#allocation11 + $0x2c] sm:$0xf]
          %v2530 = vld [vmem:[#allocation11 + $0x30] sm:$0xf]
          %v2531 = vld [vmem:[#allocation11 + $0x34] sm:$0xf]
          %v2532 = vld [vmem:[#allocation11 + $0x38] sm:$0xf]
          %v2533 = vld [vmem:[#allocation11 + $0x3c] sm:$0xf]
          %v2534 = vld [vmem:[%s6] sm:$0x1]
          %v2536 = vlaneseq
          %v2537 = vshrl.u32 %v2536, 7
          %v2538 = vsub.s32 0, %v2537
          %v2539 = vrot.slane %v2534, %v2538
          %v2557 = vunpack.c.l.b16 %v2518
          %v2558 = vunpack.c.l.b16 %v2519
          %v2559 = vunpack.c.l.b16 %v2520
          %v2560 = vunpack.c.l.b16 %v2521
          %v2561 = vunpack.c.l.b16 %v2522
          %v2562 = vunpack.c.l.b16 %v2523
          %v2563 = vunpack.c.l.b16 %v2524
          %v2564 = vunpack.c.l.b16 %v2525
          %v2565 = vunpack.c.l.b16 %v2526
          %v2566 = vunpack.c.l.b16 %v2527
          %v2567 = vunpack.c.l.b16 %v2528
          %v2568 = vunpack.c.l.b16 %v2529
          %v2569 = vunpack.c.l.b16 %v2530
          %v2570 = vunpack.c.l.b16 %v2531
          %v2571 = vunpack.c.l.b16 %v2532
          %v2572 = vunpack.c.l.b16 %v2533
          %v2573 = vpack.c.b16 %v2558, %v2557
          %v2574 = vpack.c.b16 %v2560, %v2559
          %v2575 = vpack.c.b16 %v2562, %v2561
          %v2576 = vpack.c.b16 %v2564, %v2563
          %v2577 = vpack.c.b16 %v2566, %v2565
          %v2578 = vpack.c.b16 %v2568, %v2567
          %v2579 = vpack.c.b16 %v2570, %v2569
          %v2580 = vpack.c.b16 %v2572, %v2571
          %2589 = vmatprep.subr.bf16.mxu0 0
          %2590 = vmatpush1.bf16.msra.mxu0 %v2573
          %2591 = vmatprep.subr.bf16.mxu0 0
          %2592 = vmatpush1.bf16.msra.mxu0 %v2574
          %2593 = vmatprep.subr.bf16.mxu0 0
          %2594 = vmatpush1.bf16.msra.mxu0 %v2575
          %2595 = vmatprep.subr.bf16.mxu0 0
          %2596 = vmatpush1.bf16.msra.mxu0 %v2576
          %2597 = vmatprep.subr.bf16.mxu0 0
          %2598 = vmatpush1.bf16.msra.mxu0 %v2577
          %2599 = vmatprep.subr.bf16.mxu0 0
          %2600 = vmatpush1.bf16.msra.mxu0 %v2578
          %2601 = vmatprep.subr.bf16.mxu0 0
          %2602 = vmatpush1.bf16.msra.mxu0 %v2579
          %2603 = vmatprep.subr.bf16.mxu0 0
          %2604 = vmatpush1.bf16.msra.mxu0 %v2580
          %2605 = vmatprep.subr.bf16.mxu0 0
          %2606 = vmatpush1.bf16.msra.mxu0 0
          %2607 = vmatprep.subr.bf16.mxu0 0
          %2608 = vmatpush1.bf16.msra.mxu0 0
          %2609 = vmatprep.subr.bf16.mxu0 0
          %2610 = vmatpush1.bf16.msra.mxu0 0
          %2611 = vmatprep.subr.bf16.mxu0 0
          %2612 = vmatpush1.bf16.msra.mxu0 0
          %2613 = vmatprep.subr.bf16.mxu0 0
          %2614 = vmatpush1.bf16.msra.mxu0 0
          %2615 = vmatprep.subr.bf16.mxu0 0
          %2616 = vmatpush1.bf16.msra.mxu0 0
          %2617 = vmatprep.subr.bf16.mxu0 0
          %2618 = vmatpush1.bf16.msra.mxu0 0
          %2619 = vmatprep.subr.bf16.mxu0 0
          %2620 = vmatpush1.bf16.msra.mxu0 0
          %2621 = vmatprep.mubr.bf16.mxu0 0
          %2622 = vmatmul.mubr.bf16.gmra.mrb[0].mxu0 %v2502
          %v2623 = vpop.f32.mrb[0].mxu0
          %v2624 = vadd.f32 %v2539, %v2623
          %v2625 = vpop.f32.mrb[0].mxu0
          %v2626 = vpop.f32.mrb[0].mxu0
          %v2627 = vadd.f32 %v2539, %v2626
          %v2628 = vpop.f32.mrb[0].mxu0
          %2629 = vmatprep.mubr.bf16.mxu0 0
          %2630 = vmatmul.mubr.bf16.gmra.mrb[0].mxu0 %v2503
          %v2631 = vpop.f32.mrb[0].mxu0
          %v2632 = vadd.f32 %v2539, %v2631
          %v2633 = vpop.f32.mrb[0].mxu0
          %v2634 = vpop.f32.mrb[0].mxu0
          %v2635 = vadd.f32 %v2539, %v2634
          %v2636 = vpop.f32.mrb[0].mxu0
          %2637 = vmatprep.mubr.bf16.mxu0 0
          %2638 = vmatmul.mubr.bf16.gmra.mrb[0].mxu0 %v2504
          %v2639 = vpop.f32.mrb[0].mxu0
          %v2640 = vadd.f32 %v2539, %v2639
          %v2641 = vpop.f32.mrb[0].mxu0
          %v2642 = vpop.f32.mrb[0].mxu0
          %v2643 = vadd.f32 %v2539, %v2642
          %v2644 = vpop.f32.mrb[0].mxu0
          %2645 = vmatprep.mubr.bf16.mxu0 0
          %2646 = vmatmul.mubr.bf16.gmra.mrb[0].mxu0 %v2505
          %v2647 = vpop.f32.mrb[0].mxu0
          %v2648 = vadd.f32 %v2539, %v2647
          %v2649 = vpop.f32.mrb[0].mxu0
          %v2650 = vpop.f32.mrb[0].mxu0
          %v2651 = vadd.f32 %v2539, %v2650
          %v2652 = vpop.f32.mrb[0].mxu0
          %2653 = vmatprep.mubr.bf16.mxu0 0
          %2654 = vmatmul.mubr.bf16.gmra.mrb[0].mxu0 %v2506
          %v2655 = vpop.f32.mrb[0].mxu0
          %v2656 = vadd.f32 %v2539, %v2655
          %v2657 = vpop.f32.mrb[0].mxu0
          %v2658 = vpop.f32.mrb[0].mxu0
          %v2659 = vadd.f32 %v2539, %v2658
          %v2660 = vpop.f32.mrb[0].mxu0
          %2661 = vmatprep.mubr.bf16.mxu0 0
          %2662 = vmatmul.mubr.bf16.gmra.mrb[0].mxu0 %v2507
          %v2663 = vpop.f32.mrb[0].mxu0
          %v2664 = vadd.f32 %v2539, %v2663
          %v2665 = vpop.f32.mrb[0].mxu0
          %v2666 = vpop.f32.mrb[0].mxu0
          %v2667 = vadd.f32 %v2539, %v2666
          %v2668 = vpop.f32.mrb[0].mxu0
          %2669 = vmatprep.mubr.bf16.mxu0 0
          %2670 = vmatmul.mubr.bf16.gmra.mrb[0].mxu0 %v2508
          %v2671 = vpop.f32.mrb[0].mxu0
          %v2672 = vadd.f32 %v2539, %v2671
          %v2673 = vpop.f32.mrb[0].mxu0
          %v2674 = vpop.f32.mrb[0].mxu0
          %v2675 = vadd.f32 %v2539, %v2674
          %v2676 = vpop.f32.mrb[0].mxu0
          %2677 = vmatprep.mubr.bf16.mxu0 0
          %2678 = vmatmul.mubr.bf16.gmra.mrb[0].mxu0 %v2509
          %v2679 = vpop.f32.mrb[0].mxu0
          %v2680 = vadd.f32 %v2539, %v2679
          %v2681 = vpop.f32.mrb[0].mxu0
          %v2682 = vpop.f32.mrb[0].mxu0
          %v2683 = vadd.f32 %v2539, %v2682
          %v2684 = vpop.f32.mrb[0].mxu0
          %2685 = vmatprep.mubr.bf16.mxu0 0
          %2686 = vmatmul.mubr.bf16.gmra.mrb[0].mxu0 %v2510
          %v2687 = vpop.f32.mrb[0].mxu0
          %v2688 = vadd.f32 %v2539, %v2687
          %v2689 = vpop.f32.mrb[0].mxu0
          %v2690 = vpop.f32.mrb[0].mxu0
          %v2691 = vadd.f32 %v2539, %v2690
          %v2692 = vpop.f32.mrb[0].mxu0
          %2693 = vmatprep.mubr.bf16.mxu0 0
          %2694 = vmatmul.mubr.bf16.gmra.mrb[0].mxu0 %v2511
          %v2695 = vpop.f32.mrb[0].mxu0
          %v2696 = vadd.f32 %v2539, %v2695
          %v2697 = vpop.f32.mrb[0].mxu0
          %v2698 = vpop.f32.mrb[0].mxu0
          %v2699 = vadd.f32 %v2539, %v2698
          %v2700 = vpop.f32.mrb[0].mxu0
          %2701 = vmatprep.mubr.bf16.mxu0 0
          %2702 = vmatmul.mubr.bf16.gmra.mrb[0].mxu0 %v2512
          %v2703 = vpop.f32.mrb[0].mxu0
          %v2704 = vadd.f32 %v2539, %v2703
          %v2705 = vpop.f32.mrb[0].mxu0
          %v2706 = vpop.f32.mrb[0].mxu0
          %v2707 = vadd.f32 %v2539, %v2706
          %v2708 = vpop.f32.mrb[0].mxu0
          %2709 = vmatprep.mubr.bf16.mxu0 0
          %2710 = vmatmul.mubr.bf16.gmra.mrb[0].mxu0 %v2513
          %v2711 = vpop.f32.mrb[0].mxu0
          %v2712 = vadd.f32 %v2539, %v2711
          %v2713 = vpop.f32.mrb[0].mxu0
          %v2714 = vpop.f32.mrb[0].mxu0
          %v2715 = vadd.f32 %v2539, %v2714
          %v2716 = vpop.f32.mrb[0].mxu0
          %2717 = vmatprep.mubr.bf16.mxu0 0
          %2718 = vmatmul.mubr.bf16.gmra.mrb[0].mxu0 %v2514
          %v2719 = vpop.f32.mrb[0].mxu0
          %v2720 = vadd.f32 %v2539, %v2719
          %v2721 = vpop.f32.mrb[0].mxu0
          %v2722 = vpop.f32.mrb[0].mxu0
          %v2723 = vadd.f32 %v2539, %v2722
          %v2724 = vpop.f32.mrb[0].mxu0
          %2725 = vmatprep.mubr.bf16.mxu0 0
          %2726 = vmatmul.mubr.bf16.gmra.mrb[0].mxu0 %v2515
          %v2727 = vpop.f32.mrb[0].mxu0
          %v2728 = vadd.f32 %v2539, %v2727
          %v2729 = vpop.f32.mrb[0].mxu0
          %v2730 = vpop.f32.mrb[0].mxu0
          %v2731 = vadd.f32 %v2539, %v2730
          %v2732 = vpop.f32.mrb[0].mxu0
          %2733 = vmatprep.mubr.bf16.mxu0 0
          %2734 = vmatmul.mubr.bf16.gmra.mrb[0].mxu0 %v2516
          %v2735 = vpop.f32.mrb[0].mxu0
          %v2736 = vadd.f32 %v2539, %v2735
          %v2737 = vpop.f32.mrb[0].mxu0
          %v2738 = vpop.f32.mrb[0].mxu0
          %v2739 = vadd.f32 %v2539, %v2738
          %v2740 = vpop.f32.mrb[0].mxu0
          %2741 = vmatprep.mubr.bf16.mxu0 0
          %2742 = vmatmul.mubr.bf16.gmra.mrb[0].mxu0 %v2517
          %v2743 = vpop.f32.mrb[0].mxu0
          %v2744 = vadd.f32 %v2539, %v2743
          %v2745 = vpop.f32.mrb[0].mxu0
          %v2746 = vpop.f32.mrb[0].mxu0
          %v2747 = vadd.f32 %v2539, %v2746
          %v2748 = vpop.f32.mrb[0].mxu0
          %2749 = vdwg.mxu0
          %v2750 = vmax.f32 %v2624, 0.0
          %v2751 = vmax.f32 %v2627, 0.0
          %v2752 = vmax.f32 %v2632, 0.0
          %v2753 = vmax.f32 %v2635, 0.0
          %v2754 = vmax.f32 %v2640, 0.0
          %v2755 = vmax.f32 %v2643, 0.0
          %v2756 = vmax.f32 %v2648, 0.0
          %v2757 = vmax.f32 %v2651, 0.0
          %v2758 = vmax.f32 %v2656, 0.0
          %v2759 = vmax.f32 %v2659, 0.0
          %v2760 = vmax.f32 %v2664, 0.0
          %v2761 = vmax.f32 %v2667, 0.0
          %v2762 = vmax.f32 %v2672, 0.0
          %v2763 = vmax.f32 %v2675, 0.0
          %v2764 = vmax.f32 %v2680, 0.0
          %v2765 = vmax.f32 %v2683, 0.0
          %v2766 = vmax.f32 %v2688, 0.0
          %v2767 = vmax.f32 %v2691, 0.0
          %v2768 = vmax.f32 %v2696, 0.0
          %v2769 = vmax.f32 %v2699, 0.0
          %v2770 = vmax.f32 %v2704, 0.0
          %v2771 = vmax.f32 %v2707, 0.0
          %v2772 = vmax.f32 %v2712, 0.0
          %v2773 = vmax.f32 %v2715, 0.0
          %v2774 = vmax.f32 %v2720, 0.0
          %v2775 = vmax.f32 %v2723, 0.0
          %v2776 = vmax.f32 %v2728, 0.0
          %v2777 = vmax.f32 %v2731, 0.0
          %v2778 = vmax.f32 %v2736, 0.0
          %v2779 = vmax.f32 %v2739, 0.0
          %v2780 = vmax.f32 %v2744, 0.0
          %v2781 = vmax.f32 %v2747, 0.0
          %v2782 = vpack.c.bf16 %v2751, %v2750
          %v2783 = vpack.c.bf16 %v2753, %v2752
          %v2784 = vpack.c.bf16 %v2755, %v2754
          %v2785 = vpack.c.bf16 %v2757, %v2756
          %v2786 = vpack.c.bf16 %v2759, %v2758
          %v2787 = vpack.c.bf16 %v2761, %v2760
          %v2788 = vpack.c.bf16 %v2763, %v2762
          %v2789 = vpack.c.bf16 %v2765, %v2764
          %v2790 = vpack.c.bf16 %v2767, %v2766
          %v2791 = vpack.c.bf16 %v2769, %v2768
          %v2792 = vpack.c.bf16 %v2771, %v2770
          %v2793 = vpack.c.bf16 %v2773, %v2772
          %v2794 = vpack.c.bf16 %v2775, %v2774
          %v2795 = vpack.c.bf16 %v2777, %v2776
          %v2796 = vpack.c.bf16 %v2779, %v2778
          %v2797 = vpack.c.bf16 %v2781, %v2780
          %2798 = vmatprep.subr.bf16.mxu0 0
          %2799 = vmatpush1.bf16.msra.mxu0 %v2782
          %2800 = vmatprep.subr.bf16.mxu0 0
          %2801 = vmatpush1.bf16.msra.mxu0 %v2783
          %2802 = vmatprep.subr.bf16.mxu0 0
          %2803 = vmatpush1.bf16.msra.mxu0 %v2784
          %2804 = vmatprep.subr.bf16.mxu0 0
          %2805 = vmatpush1.bf16.msra.mxu0 %v2785
          %2806 = vmatprep.subr.bf16.mxu0 0
          %2807 = vmatpush1.bf16.msra.mxu0 %v2786
          %2808 = vmatprep.subr.bf16.mxu0 0
          %2809 = vmatpush1.bf16.msra.mxu0 %v2787
          %2810 = vmatprep.subr.bf16.mxu0 0
          %2811 = vmatpush1.bf16.msra.mxu0 %v2788
          %2812 = vmatprep.subr.bf16.mxu0 0
          %2813 = vmatpush1.bf16.msra.mxu0 %v2789
          %2814 = vmatprep.subr.bf16.mxu0 0
          %2815 = vmatpush1.bf16.msra.mxu0 %v2790
          %2816 = vmatprep.subr.bf16.mxu0 0
          %2817 = vmatpush1.bf16.msra.mxu0 %v2791
          %2818 = vmatprep.subr.bf16.mxu0 0
          %2819 = vmatpush1.bf16.msra.mxu0 %v2792
          %2820 = vmatprep.subr.bf16.mxu0 0
          %2821 = vmatpush1.bf16.msra.mxu0 %v2793
          %2822 = vmatprep.subr.bf16.mxu0 0
          %2823 = vmatpush1.bf16.msra.mxu0 %v2794
          %2824 = vmatprep.subr.bf16.mxu0 0
          %2825 = vmatpush1.bf16.msra.mxu0 %v2795
          %2826 = vmatprep.subr.bf16.mxu0 0
          %2827 = vmatpush1.bf16.msra.mxu0 %v2796
          %2828 = vmatprep.subr.bf16.mxu0 0
          %2829 = vmatpush1.bf16.msra.mxu0 %v2797
          %2830 = vmatprep.mubr.bf16.mxu0 %v1458
          %2831 = vmatmul.mubr.bf16.gmra.mrb[0].mxu0 %v1457
          %v2832 = vpop.f32.mrb[0].mxu0
          %v2833 = vadd.f32 0.0, %v2832
          %v2834 = vpop.f32.mrb[0].mxu0
          %v2835 = vpop.f32.mrb[0].mxu0
          %v2836 = vpop.f32.mrb[0].mxu0
          %2837 = vdwg.mxu0
          %v2838 = vld [vmem:[#allocation20] sm:$0xff]
          %v2839 = vpack.c.bf16 %v2833, %v2833
          %v2840 = vld [vmem:[#allocation17] sm:$0xf]
          %v2841 = vld [vmem:[#allocation17 + $0x4] sm:$0xf]
          %v2842 = vld [vmem:[#allocation17 + $0x8] sm:$0xf]
          %v2843 = vld [vmem:[#allocation17 + $0xc] sm:$0xf]
          %v2844 = vld [vmem:[#allocation17 + $0x10] sm:$0xf]
          %v2845 = vld [vmem:[#allocation17 + $0x14] sm:$0xf]
          %v2846 = vld [vmem:[#allocation17 + $0x18] sm:$0xf]
          %v2847 = vld [vmem:[#allocation17 + $0x1c] sm:$0xf]
          %v2848 = vld [vmem:[#allocation17 + $0x20] sm:$0xf]
          %v2849 = vld [vmem:[#allocation17 + $0x24] sm:$0xf]
          %v2850 = vld [vmem:[#allocation17 + $0x28] sm:$0xf]
          %v2851 = vld [vmem:[#allocation17 + $0x2c] sm:$0xf]
          %v2852 = vld [vmem:[#allocation17 + $0x30] sm:$0xf]
          %v2853 = vld [vmem:[#allocation17 + $0x34] sm:$0xf]
          %v2854 = vld [vmem:[#allocation17 + $0x38] sm:$0xf]
          %v2855 = vld [vmem:[#allocation17 + $0x3c] sm:$0xf]
          %v2872 = vunpack.c.l.b16 %v2840
          %v2873 = vunpack.c.l.b16 %v2841
          %v2874 = vunpack.c.l.b16 %v2842
          %v2875 = vunpack.c.l.b16 %v2843
          %v2876 = vunpack.c.l.b16 %v2844
          %v2877 = vunpack.c.l.b16 %v2845
          %v2878 = vunpack.c.l.b16 %v2846
          %v2879 = vunpack.c.l.b16 %v2847
          %v2880 = vunpack.c.l.b16 %v2848
          %v2881 = vunpack.c.l.b16 %v2849
          %v2882 = vunpack.c.l.b16 %v2850
          %v2883 = vunpack.c.l.b16 %v2851
          %v2884 = vunpack.c.l.b16 %v2852
          %v2885 = vunpack.c.l.b16 %v2853
          %v2886 = vunpack.c.l.b16 %v2854
          %v2887 = vunpack.c.l.b16 %v2855
          %v2888 = vpack.c.b16 %v2873, %v2872
          %v2889 = vpack.c.b16 %v2875, %v2874
          %v2890 = vpack.c.b16 %v2877, %v2876
          %v2891 = vpack.c.b16 %v2879, %v2878
          %v2892 = vpack.c.b16 %v2881, %v2880
          %v2893 = vpack.c.b16 %v2883, %v2882
          %v2894 = vpack.c.b16 %v2885, %v2884
          %v2895 = vpack.c.b16 %v2887, %v2886
          %2904 = vmatprep.subr.bf16.mxu0 0
          %2905 = vmatpush1.bf16.msra.mxu0 %v2888
          %2906 = vmatprep.subr.bf16.mxu0 0
          %2907 = vmatpush1.bf16.msra.mxu0 %v2889
          %2908 = vmatprep.subr.bf16.mxu0 0
          %2909 = vmatpush1.bf16.msra.mxu0 %v2890
          %2910 = vmatprep.subr.bf16.mxu0 0
          %2911 = vmatpush1.bf16.msra.mxu0 %v2891
          %2912 = vmatprep.subr.bf16.mxu0 0
          %2913 = vmatpush1.bf16.msra.mxu0 %v2892
          %2914 = vmatprep.subr.bf16.mxu0 0
          %2915 = vmatpush1.bf16.msra.mxu0 %v2893
          %2916 = vmatprep.subr.bf16.mxu0 0
          %2917 = vmatpush1.bf16.msra.mxu0 %v2894
          %2918 = vmatprep.subr.bf16.mxu0 0
          %2919 = vmatpush1.bf16.msra.mxu0 %v2895
          %2920 = vmatprep.subr.bf16.mxu0 0
          %2921 = vmatpush1.bf16.msra.mxu0 0
          %2922 = vmatprep.subr.bf16.mxu0 0
          %2923 = vmatpush1.bf16.msra.mxu0 0
          %2924 = vmatprep.subr.bf16.mxu0 0
          %2925 = vmatpush1.bf16.msra.mxu0 0
          %2926 = vmatprep.subr.bf16.mxu0 0
          %2927 = vmatpush1.bf16.msra.mxu0 0
          %2928 = vmatprep.subr.bf16.mxu0 0
          %2929 = vmatpush1.bf16.msra.mxu0 0
          %2930 = vmatprep.subr.bf16.mxu0 0
          %2931 = vmatpush1.bf16.msra.mxu0 0
          %2932 = vmatprep.subr.bf16.mxu0 0
          %2933 = vmatpush1.bf16.msra.mxu0 0
          %2934 = vmatprep.subr.bf16.mxu0 0
          %2935 = vmatpush1.bf16.msra.mxu0 0
          %2936 = vmatprep.mubr.bf16.mxu0 0
          %2937 = vmatmul.mubr.bf16.gmra.mrb[0].mxu0 %v2839
          %v2938 = vpop.f32.mrb[0].mxu0
          %v2939 = vadd.f32 0.0, %v2938
          %v2940 = vpop.f32.mrb[0].mxu0
          %v2941 = vpop.f32.mrb[0].mxu0
          %v2942 = vpop.f32.mrb[0].mxu0
          %2943 = vdwg.mxu0
          %v2944 = vadd.f32 %v2838, %v2939
          %2945 = vst [vmem:[#allocation20] sm:$0xff] %v2944
          %v2946 = vld [vmem:[#allocation13] sm:$0xf]
          %v2947 = vld [vmem:[#allocation13 + $0x4] sm:$0xf]
          %v2948 = vld [vmem:[#allocation13 + $0x8] sm:$0xf]
          %v2949 = vld [vmem:[#allocation13 + $0xc] sm:$0xf]
          %v2950 = vld [vmem:[#allocation13 + $0x10] sm:$0xf]
          %v2951 = vld [vmem:[#allocation13 + $0x14] sm:$0xf]
          %v2952 = vld [vmem:[#allocation13 + $0x18] sm:$0xf]
          %v2953 = vld [vmem:[#allocation13 + $0x1c] sm:$0xf]
          %v2954 = vld [vmem:[#allocation13 + $0x20] sm:$0xf]
          %v2955 = vld [vmem:[#allocation13 + $0x24] sm:$0xf]
          %v2956 = vld [vmem:[#allocation13 + $0x28] sm:$0xf]
          %v2957 = vld [vmem:[#allocation13 + $0x2c] sm:$0xf]
          %v2958 = vld [vmem:[#allocation13 + $0x30] sm:$0xf]
          %v2959 = vld [vmem:[#allocation13 + $0x34] sm:$0xf]
          %v2960 = vld [vmem:[#allocation13 + $0x38] sm:$0xf]
          %v2961 = vld [vmem:[#allocation13 + $0x3c] sm:$0xf]
          %v2978 = vunpack.c.l.b16 %v2946
          %v2979 = vunpack.c.l.b16 %v2947
          %v2980 = vunpack.c.l.b16 %v2948
          %v2981 = vunpack.c.l.b16 %v2949
          %v2982 = vunpack.c.l.b16 %v2950
          %v2983 = vunpack.c.l.b16 %v2951
          %v2984 = vunpack.c.l.b16 %v2952
          %v2985 = vunpack.c.l.b16 %v2953
          %v2986 = vunpack.c.l.b16 %v2954
          %v2987 = vunpack.c.l.b16 %v2955
          %v2988 = vunpack.c.l.b16 %v2956
          %v2989 = vunpack.c.l.b16 %v2957
          %v2990 = vunpack.c.l.b16 %v2958
          %v2991 = vunpack.c.l.b16 %v2959
          %v2992 = vunpack.c.l.b16 %v2960
          %v2993 = vunpack.c.l.b16 %v2961
          %v2994 = vpack.c.b16 %v2979, %v2978
          %v2995 = vpack.c.b16 %v2981, %v2980
          %v2996 = vpack.c.b16 %v2983, %v2982
          %v2997 = vpack.c.b16 %v2985, %v2984
          %v2998 = vpack.c.b16 %v2987, %v2986
          %v2999 = vpack.c.b16 %v2989, %v2988
          %v3000 = vpack.c.b16 %v2991, %v2990
          %v3001 = vpack.c.b16 %v2993, %v2992
          %3010 = vmatprep.subr.bf16.mxu0 0
          %3011 = vmatpush1.bf16.msra.mxu0 %v2994
          %3012 = vmatprep.subr.bf16.mxu0 0
          %3013 = vmatpush1.bf16.msra.mxu0 %v2995
          %3014 = vmatprep.subr.bf16.mxu0 0
          %3015 = vmatpush1.bf16.msra.mxu0 %v2996
          %3016 = vmatprep.subr.bf16.mxu0 0
          %3017 = vmatpush1.bf16.msra.mxu0 %v2997
          %3018 = vmatprep.subr.bf16.mxu0 0
          %3019 = vmatpush1.bf16.msra.mxu0 %v2998
          %3020 = vmatprep.subr.bf16.mxu0 0
          %3021 = vmatpush1.bf16.msra.mxu0 %v2999
          %3022 = vmatprep.subr.bf16.mxu0 0
          %3023 = vmatpush1.bf16.msra.mxu0 %v3000
          %3024 = vmatprep.subr.bf16.mxu0 0
          %3025 = vmatpush1.bf16.msra.mxu0 %v3001
          %3026 = vmatprep.subr.bf16.mxu0 0
          %3027 = vmatpush1.bf16.msra.mxu0 0
          %3028 = vmatprep.subr.bf16.mxu0 0
          %3029 = vmatpush1.bf16.msra.mxu0 0
          %3030 = vmatprep.subr.bf16.mxu0 0
          %3031 = vmatpush1.bf16.msra.mxu0 0
          %3032 = vmatprep.subr.bf16.mxu0 0
          %3033 = vmatpush1.bf16.msra.mxu0 0
          %3034 = vmatprep.subr.bf16.mxu0 0
          %3035 = vmatpush1.bf16.msra.mxu0 0
          %3036 = vmatprep.subr.bf16.mxu0 0
          %3037 = vmatpush1.bf16.msra.mxu0 0
          %3038 = vmatprep.subr.bf16.mxu0 0
          %3039 = vmatpush1.bf16.msra.mxu0 0
          %3040 = vmatprep.subr.bf16.mxu0 0
          %3041 = vmatpush1.bf16.msra.mxu0 0
          %3042 = vmatprep.mubr.bf16.mxu0 0
          %3043 = vmatmul.mubr.bf16.gmra.mrb[0].mxu0 %v2782
          %v3044 = vpop.f32.mrb[0].mxu0
          %v3045 = vadd.f32 0.0, %v3044
          %v3046 = vpop.f32.mrb[0].mxu0
          %v3047 = vpop.f32.mrb[0].mxu0
          %v3048 = vadd.f32 0.0, %v3047
          %v3049 = vpop.f32.mrb[0].mxu0
          %3050 = vmatprep.mubr.bf16.mxu0 0
          %3051 = vmatmul.mubr.bf16.gmra.mrb[0].mxu0 %v2783
          %v3052 = vpop.f32.mrb[0].mxu0
          %v3053 = vadd.f32 0.0, %v3052
          %v3054 = vpop.f32.mrb[0].mxu0
          %v3055 = vpop.f32.mrb[0].mxu0
          %v3056 = vadd.f32 0.0, %v3055
          %v3057 = vpop.f32.mrb[0].mxu0
          %3058 = vmatprep.mubr.bf16.mxu0 0
          %3059 = vmatmul.mubr.bf16.gmra.mrb[0].mxu0 %v2784
          %v3060 = vpop.f32.mrb[0].mxu0
          %v3061 = vadd.f32 0.0, %v3060
          %v3062 = vpop.f32.mrb[0].mxu0
          %v3063 = vpop.f32.mrb[0].mxu0
          %v3064 = vadd.f32 0.0, %v3063
          %v3065 = vpop.f32.mrb[0].mxu0
          %3066 = vmatprep.mubr.bf16.mxu0 0
          %3067 = vmatmul.mubr.bf16.gmra.mrb[0].mxu0 %v2785
          %v3068 = vpop.f32.mrb[0].mxu0
          %v3069 = vadd.f32 0.0, %v3068
          %v3070 = vpop.f32.mrb[0].mxu0
          %v3071 = vpop.f32.mrb[0].mxu0
          %v3072 = vadd.f32 0.0, %v3071
          %v3073 = vpop.f32.mrb[0].mxu0
          %3074 = vmatprep.mubr.bf16.mxu0 0
          %3075 = vmatmul.mubr.bf16.gmra.mrb[0].mxu0 %v2786
          %v3076 = vpop.f32.mrb[0].mxu0
          %v3077 = vadd.f32 0.0, %v3076
          %v3078 = vpop.f32.mrb[0].mxu0
          %v3079 = vpop.f32.mrb[0].mxu0
          %v3080 = vadd.f32 0.0, %v3079
          %v3081 = vpop.f32.mrb[0].mxu0
          %3082 = vmatprep.mubr.bf16.mxu0 0
          %3083 = vmatmul.mubr.bf16.gmra.mrb[0].mxu0 %v2787
          %v3084 = vpop.f32.mrb[0].mxu0
          %v3085 = vadd.f32 0.0, %v3084
          %v3086 = vpop.f32.mrb[0].mxu0
          %v3087 = vpop.f32.mrb[0].mxu0
          %v3088 = vadd.f32 0.0, %v3087
          %v3089 = vpop.f32.mrb[0].mxu0
          %3090 = vmatprep.mubr.bf16.mxu0 0
          %3091 = vmatmul.mubr.bf16.gmra.mrb[0].mxu0 %v2788
          %v3092 = vpop.f32.mrb[0].mxu0
          %v3093 = vadd.f32 0.0, %v3092
          %v3094 = vpop.f32.mrb[0].mxu0
          %v3095 = vpop.f32.mrb[0].mxu0
          %v3096 = vadd.f32 0.0, %v3095
          %v3097 = vpop.f32.mrb[0].mxu0
          %3098 = vmatprep.mubr.bf16.mxu0 0
          %3099 = vmatmul.mubr.bf16.gmra.mrb[0].mxu0 %v2789
          %v3100 = vpop.f32.mrb[0].mxu0
          %v3101 = vadd.f32 0.0, %v3100
          %v3102 = vpop.f32.mrb[0].mxu0
          %v3103 = vpop.f32.mrb[0].mxu0
          %v3104 = vadd.f32 0.0, %v3103
          %v3105 = vpop.f32.mrb[0].mxu0
          %3106 = vmatprep.mubr.bf16.mxu0 0
          %3107 = vmatmul.mubr.bf16.gmra.mrb[0].mxu0 %v2790
          %v3108 = vpop.f32.mrb[0].mxu0
          %v3109 = vadd.f32 0.0, %v3108
          %v3110 = vpop.f32.mrb[0].mxu0
          %v3111 = vpop.f32.mrb[0].mxu0
          %v3112 = vadd.f32 0.0, %v3111
          %v3113 = vpop.f32.mrb[0].mxu0
          %3114 = vmatprep.mubr.bf16.mxu0 0
          %3115 = vmatmul.mubr.bf16.gmra.mrb[0].mxu0 %v2791
          %v3116 = vpop.f32.mrb[0].mxu0
          %v3117 = vadd.f32 0.0, %v3116
          %v3118 = vpop.f32.mrb[0].mxu0
          %v3119 = vpop.f32.mrb[0].mxu0
          %v3120 = vadd.f32 0.0, %v3119
          %v3121 = vpop.f32.mrb[0].mxu0
          %3122 = vmatprep.mubr.bf16.mxu0 0
          %3123 = vmatmul.mubr.bf16.gmra.mrb[0].mxu0 %v2792
          %v3124 = vpop.f32.mrb[0].mxu0
          %v3125 = vadd.f32 0.0, %v3124
          %v3126 = vpop.f32.mrb[0].mxu0
          %v3127 = vpop.f32.mrb[0].mxu0
          %v3128 = vadd.f32 0.0, %v3127
          %v3129 = vpop.f32.mrb[0].mxu0
          %3130 = vmatprep.mubr.bf16.mxu0 0
          %3131 = vmatmul.mubr.bf16.gmra.mrb[0].mxu0 %v2793
          %v3132 = vpop.f32.mrb[0].mxu0
          %v3133 = vadd.f32 0.0, %v3132
          %v3134 = vpop.f32.mrb[0].mxu0
          %v3135 = vpop.f32.mrb[0].mxu0
          %v3136 = vadd.f32 0.0, %v3135
          %v3137 = vpop.f32.mrb[0].mxu0
          %3138 = vmatprep.mubr.bf16.mxu0 0
          %3139 = vmatmul.mubr.bf16.gmra.mrb[0].mxu0 %v2794
          %v3140 = vpop.f32.mrb[0].mxu0
          %v3141 = vadd.f32 0.0, %v3140
          %v3142 = vpop.f32.mrb[0].mxu0
          %v3143 = vpop.f32.mrb[0].mxu0
          %v3144 = vadd.f32 0.0, %v3143
          %v3145 = vpop.f32.mrb[0].mxu0
          %3146 = vmatprep.mubr.bf16.mxu0 0
          %3147 = vmatmul.mubr.bf16.gmra.mrb[0].mxu0 %v2795
          %v3148 = vpop.f32.mrb[0].mxu0
          %v3149 = vadd.f32 0.0, %v3148
          %v3150 = vpop.f32.mrb[0].mxu0
          %v3151 = vpop.f32.mrb[0].mxu0
          %v3152 = vadd.f32 0.0, %v3151
          %v3153 = vpop.f32.mrb[0].mxu0
          %3154 = vmatprep.mubr.bf16.mxu0 0
          %3155 = vmatmul.mubr.bf16.gmra.mrb[0].mxu0 %v2796
          %v3156 = vpop.f32.mrb[0].mxu0
          %v3157 = vadd.f32 0.0, %v3156
          %v3158 = vpop.f32.mrb[0].mxu0
          %v3159 = vpop.f32.mrb[0].mxu0
          %v3160 = vadd.f32 0.0, %v3159
          %v3161 = vpop.f32.mrb[0].mxu0
          %3162 = vmatprep.mubr.bf16.mxu0 0
          %3163 = vmatmul.mubr.bf16.gmra.mrb[0].mxu0 %v2797
          %v3164 = vpop.f32.mrb[0].mxu0
          %v3165 = vadd.f32 0.0, %v3164
          %v3166 = vpop.f32.mrb[0].mxu0
          %v3167 = vpop.f32.mrb[0].mxu0
          %v3168 = vadd.f32 0.0, %v3167
          %v3169 = vpop.f32.mrb[0].mxu0
          %3170 = vdwg.mxu0
          %v3171 = vpack.c.bf16 %v3048, %v3045
          %v3172 = vpack.c.bf16 %v3056, %v3053
          %v3173 = vpack.c.bf16 %v3064, %v3061
          %v3174 = vpack.c.bf16 %v3072, %v3069
          %v3175 = vpack.c.bf16 %v3080, %v3077
          %v3176 = vpack.c.bf16 %v3088, %v3085
          %v3177 = vpack.c.bf16 %v3096, %v3093
          %v3178 = vpack.c.bf16 %v3104, %v3101
          %v3179 = vpack.c.bf16 %v3112, %v3109
          %v3180 = vpack.c.bf16 %v3120, %v3117
          %v3181 = vpack.c.bf16 %v3128, %v3125
          %v3182 = vpack.c.bf16 %v3136, %v3133
          %v3183 = vpack.c.bf16 %v3144, %v3141
          %v3184 = vpack.c.bf16 %v3152, %v3149
          %v3185 = vpack.c.bf16 %v3160, %v3157
          %v3186 = vpack.c.bf16 %v3168, %v3165
          %s3187 = smul.addr %s1737, 8
          %s3188 = scalar_lea.vmem [#allocation3], %s3187
          %3189 = vst [vmem:[%s3188] sm:$0xff] %v3171
          %3190 = vst [vmem:[%s3188 + $0x8] sm:$0xff] %v3172
          %3191 = vst [vmem:[%s3188 + $0x10] sm:$0xff] %v3173
          %3192 = vst [vmem:[%s3188 + $0x18] sm:$0xff] %v3174
          %3193 = vst [vmem:[%s3188 + $0x20] sm:$0xff] %v3175
          %3194 = vst [vmem:[%s3188 + $0x28] sm:$0xff] %v3176
          %3195 = vst [vmem:[%s3188 + $0x30] sm:$0xff] %v3177
          %3196 = vst [vmem:[%s3188 + $0x38] sm:$0xff] %v3178
          %3197 = vst [vmem:[%s3188 + $0x40] sm:$0xff] %v3179
          %3198 = vst [vmem:[%s3188 + $0x48] sm:$0xff] %v3180
          %3199 = vst [vmem:[%s3188 + $0x50] sm:$0xff] %v3181
          %3200 = vst [vmem:[%s3188 + $0x58] sm:$0xff] %v3182
          %3201 = vst [vmem:[%s3188 + $0x60] sm:$0xff] %v3183
          %3202 = vst [vmem:[%s3188 + $0x68] sm:$0xff] %v3184
          %3203 = vst [vmem:[%s3188 + $0x70] sm:$0xff] %v3185
          %3204 = vst [vmem:[%s3188 + $0x78] sm:$0xff] %v3186
        $region128: #{tpu_custom_call.1} parent=79 // pred_fallthru
          _
        %p3205 = scmp.eq.s32.totalorder %s38, 1
        // Predicated region
        $region129: #{tpu_custom_call.1} parent=79 // pred_check
          %p3206 = pneg %p3205
        $region130: #{tpu_custom_call.1} parent=79 // pred_check_branch
          %3208 = sbr.rel (%p3206) target = $region132
        $region131: #{tpu_custom_call.1} parent=79 // pred_region
          %v3209 = vld [vmem:[#allocation3] sm:$0xff]
          %v3210 = vld [vmem:[#allocation3 + $0x8] sm:$0xff]
          %v3211 = vld [vmem:[#allocation3 + $0x10] sm:$0xff]
          %v3212 = vld [vmem:[#allocation3 + $0x18] sm:$0xff]
          %v3213 = vld [vmem:[#allocation3 + $0x20] sm:$0xff]
          %v3214 = vld [vmem:[#allocation3 + $0x28] sm:$0xff]
          %v3215 = vld [vmem:[#allocation3 + $0x30] sm:$0xff]
          %v3216 = vld [vmem:[#allocation3 + $0x38] sm:$0xff]
          %v3217 = vld [vmem:[#allocation3 + $0x40] sm:$0xff]
          %v3218 = vld [vmem:[#allocation3 + $0x48] sm:$0xff]
          %v3219 = vld [vmem:[#allocation3 + $0x50] sm:$0xff]
          %v3220 = vld [vmem:[#allocation3 + $0x58] sm:$0xff]
          %v3221 = vld [vmem:[#allocation3 + $0x60] sm:$0xff]
          %v3222 = vld [vmem:[#allocation3 + $0x68] sm:$0xff]
          %v3223 = vld [vmem:[#allocation3 + $0x70] sm:$0xff]
          %v3224 = vld [vmem:[#allocation3 + $0x78] sm:$0xff]
          %v3225 = vld [vmem:[#allocation3 + $0x80] sm:$0xff]
          %v3226 = vld [vmem:[#allocation3 + $0x88] sm:$0xff]
          %v3227 = vld [vmem:[#allocation3 + $0x90] sm:$0xff]
          %v3228 = vld [vmem:[#allocation3 + $0x98] sm:$0xff]
          %v3229 = vld [vmem:[#allocation3 + $0xa0] sm:$0xff]
          %v3230 = vld [vmem:[#allocation3 + $0xa8] sm:$0xff]
          %v3231 = vld [vmem:[#allocation3 + $0xb0] sm:$0xff]
          %v3232 = vld [vmem:[#allocation3 + $0xb8] sm:$0xff]
          %v3233 = vld [vmem:[#allocation3 + $0xc0] sm:$0xff]
          %v3234 = vld [vmem:[#allocation3 + $0xc8] sm:$0xff]
          %v3235 = vld [vmem:[#allocation3 + $0xd0] sm:$0xff]
          %v3236 = vld [vmem:[#allocation3 + $0xd8] sm:$0xff]
          %v3237 = vld [vmem:[#allocation3 + $0xe0] sm:$0xff]
          %v3238 = vld [vmem:[#allocation3 + $0xe8] sm:$0xff]
          %v3239 = vld [vmem:[#allocation3 + $0xf0] sm:$0xff]
          %v3240 = vld [vmem:[#allocation3 + $0xf8] sm:$0xff]
          %s3241 = sshra.s32 %s668, 4
          %s3242 = sand.u32 %s668, 15
          %s3243 = smul.addr %s3241, 8
          %s3244 = scalar_lea.vmem [#allocation3], %s3243
          %v3245 = vld [vmem:[%s3244] sm:$0xff]
          %v3246 = vld [vmem:[%s3244 + $0x8] sm:$0xff]
          %v3247 = vld [vmem:[%s3244 + $0x10] sm:$0xff]
          %v3248 = vld [vmem:[%s3244 + $0x18] sm:$0xff]
          %v3249 = vld [vmem:[%s3244 + $0x20] sm:$0xff]
          %v3250 = vld [vmem:[%s3244 + $0x28] sm:$0xff]
          %v3251 = vld [vmem:[%s3244 + $0x30] sm:$0xff]
          %v3252 = vld [vmem:[%s3244 + $0x38] sm:$0xff]
          %v3253 = vld [vmem:[%s3244 + $0x40] sm:$0xff]
          %v3254 = vld [vmem:[%s3244 + $0x48] sm:$0xff]
          %v3255 = vld [vmem:[%s3244 + $0x50] sm:$0xff]
          %v3256 = vld [vmem:[%s3244 + $0x58] sm:$0xff]
          %v3257 = vld [vmem:[%s3244 + $0x60] sm:$0xff]
          %v3258 = vld [vmem:[%s3244 + $0x68] sm:$0xff]
          %v3259 = vld [vmem:[%s3244 + $0x70] sm:$0xff]
          %v3260 = vld [vmem:[%s3244 + $0x78] sm:$0xff]
          %v3261 = vunpack.c.l.bf16 %v3245
          %v3262 = vunpack.c.h.bf16 %v3245
          %v3263 = vunpack.c.l.bf16 %v3246
          %v3264 = vunpack.c.h.bf16 %v3246
          %v3265 = vunpack.c.l.bf16 %v3247
          %v3266 = vunpack.c.h.bf16 %v3247
          %v3267 = vunpack.c.l.bf16 %v3248
          %v3268 = vunpack.c.h.bf16 %v3248
          %v3269 = vunpack.c.l.bf16 %v3249
          %v3270 = vunpack.c.h.bf16 %v3249
          %v3271 = vunpack.c.l.bf16 %v3250
          %v3272 = vunpack.c.h.bf16 %v3250
          %v3273 = vunpack.c.l.bf16 %v3251
          %v3274 = vunpack.c.h.bf16 %v3251
          %v3275 = vunpack.c.l.bf16 %v3252
          %v3276 = vunpack.c.h.bf16 %v3252
          %v3277 = vunpack.c.l.bf16 %v3253
          %v3278 = vunpack.c.h.bf16 %v3253
          %v3279 = vunpack.c.l.bf16 %v3254
          %v3280 = vunpack.c.h.bf16 %v3254
          %v3281 = vunpack.c.l.bf16 %v3255
          %v3282 = vunpack.c.h.bf16 %v3255
          %v3283 = vunpack.c.l.bf16 %v3256
          %v3284 = vunpack.c.h.bf16 %v3256
          %v3285 = vunpack.c.l.bf16 %v3257
          %v3286 = vunpack.c.h.bf16 %v3257
          %v3287 = vunpack.c.l.bf16 %v3258
          %v3288 = vunpack.c.h.bf16 %v3258
          %v3289 = vunpack.c.l.bf16 %v3259
          %v3290 = vunpack.c.h.bf16 %v3259
          %v3291 = vunpack.c.l.bf16 %v3260
          %v3292 = vunpack.c.h.bf16 %v3260
          %v3357 = vunpack.c.l.b16 %v1350
          %v3358 = vunpack.c.h.b16 %v1350
          %v3359 = vunpack.c.l.b16 %v1351
          %v3360 = vunpack.c.h.b16 %v1351
          %v3361 = vunpack.c.l.b16 %v1352
          %v3362 = vunpack.c.h.b16 %v1352
          %v3363 = vunpack.c.l.b16 %v1353
          %v3364 = vunpack.c.h.b16 %v1353
          %v3365 = vunpack.c.l.b16 %v1354
          %v3366 = vunpack.c.h.b16 %v1354
          %v3367 = vunpack.c.l.b16 %v1355
          %v3368 = vunpack.c.h.b16 %v1355
          %v3369 = vunpack.c.l.b16 %v1356
          %v3370 = vunpack.c.h.b16 %v1356
          %v3371 = vunpack.c.l.b16 %v1357
          %v3372 = vunpack.c.h.b16 %v1357
          %v3373 = vunpack.c.l.b16 %v1358
          %v3374 = vunpack.c.h.b16 %v1358
          %v3375 = vunpack.c.l.b16 %v1359
          %v3376 = vunpack.c.h.b16 %v1359
          %v3377 = vunpack.c.l.b16 %v1360
          %v3378 = vunpack.c.h.b16 %v1360
          %v3379 = vunpack.c.l.b16 %v1361
          %v3380 = vunpack.c.h.b16 %v1361
          %v3381 = vunpack.c.l.b16 %v1362
          %v3382 = vunpack.c.h.b16 %v1362
          %v3383 = vunpack.c.l.b16 %v1363
          %v3384 = vunpack.c.h.b16 %v1363
          %v3385 = vunpack.c.l.b16 %v1364
          %v3386 = vunpack.c.h.b16 %v1364
          %v3387 = vunpack.c.l.b16 %v1365
          %v3388 = vunpack.c.h.b16 %v1365
          %v3389 = vunpack.c.l.b16 %v1366
          %v3390 = vunpack.c.h.b16 %v1366
          %v3391 = vunpack.c.l.b16 %v1367
          %v3392 = vunpack.c.h.b16 %v1367
          %v3393 = vunpack.c.l.b16 %v1368
          %v3394 = vunpack.c.h.b16 %v1368
          %v3395 = vunpack.c.l.b16 %v1369
          %v3396 = vunpack.c.h.b16 %v1369
          %v3397 = vunpack.c.l.b16 %v1370
          %v3398 = vunpack.c.h.b16 %v1370
          %v3399 = vunpack.c.l.b16 %v1371
          %v3400 = vunpack.c.h.b16 %v1371
          %v3401 = vunpack.c.l.b16 %v1372
          %v3402 = vunpack.c.h.b16 %v1372
          %v3403 = vunpack.c.l.b16 %v1373
          %v3404 = vunpack.c.h.b16 %v1373
          %v3405 = vunpack.c.l.b16 %v1374
          %v3406 = vunpack.c.h.b16 %v1374
          %v3407 = vunpack.c.l.b16 %v1375
          %v3408 = vunpack.c.h.b16 %v1375
          %v3409 = vunpack.c.l.b16 %v1376
          %v3410 = vunpack.c.h.b16 %v1376
          %v3411 = vunpack.c.l.b16 %v1377
          %v3412 = vunpack.c.h.b16 %v1377
          %v3413 = vunpack.c.l.b16 %v1378
          %v3414 = vunpack.c.h.b16 %v1378
          %v3415 = vunpack.c.l.b16 %v1379
          %v3416 = vunpack.c.h.b16 %v1379
          %v3417 = vunpack.c.l.b16 %v1380
          %v3418 = vunpack.c.h.b16 %v1380
          %v3419 = vunpack.c.l.b16 %v1381
          %v3420 = vunpack.c.h.b16 %v1381
          %v3421 = vunpack.c.l.b16 %v1382
          %v3422 = vunpack.c.h.b16 %v1382
          %v3423 = vunpack.c.l.b16 %v1383
          %v3424 = vunpack.c.h.b16 %v1383
          %v3425 = vunpack.c.l.b16 %v1384
          %v3426 = vunpack.c.h.b16 %v1384
          %v3427 = vunpack.c.l.b16 %v1385
          %v3428 = vunpack.c.h.b16 %v1385
          %v3429 = vunpack.c.l.b16 %v1386
          %v3430 = vunpack.c.h.b16 %v1386
          %v3431 = vunpack.c.l.b16 %v1387
          %v3432 = vunpack.c.h.b16 %v1387
          %v3433 = vunpack.c.l.b16 %v1388
          %v3434 = vunpack.c.h.b16 %v1388
          %v3435 = vunpack.c.l.b16 %v1389
          %v3436 = vunpack.c.h.b16 %v1389
          %v3437 = vunpack.c.l.b16 %v1390
          %v3438 = vunpack.c.h.b16 %v1390
          %v3439 = vunpack.c.l.b16 %v1391
          %v3440 = vunpack.c.h.b16 %v1391
          %v3441 = vunpack.c.l.b16 %v1392
          %v3442 = vunpack.c.h.b16 %v1392
          %v3443 = vunpack.c.l.b16 %v1393
          %v3444 = vunpack.c.h.b16 %v1393
          %v3445 = vunpack.c.l.b16 %v1394
          %v3446 = vunpack.c.h.b16 %v1394
          %v3447 = vunpack.c.l.b16 %v1395
          %v3448 = vunpack.c.h.b16 %v1395
          %v3449 = vunpack.c.l.b16 %v1396
          %v3450 = vunpack.c.h.b16 %v1396
          %v3451 = vunpack.c.l.b16 %v1397
          %v3452 = vunpack.c.h.b16 %v1397
          %v3453 = vunpack.c.l.b16 %v1398
          %v3454 = vunpack.c.h.b16 %v1398
          %v3455 = vunpack.c.l.b16 %v1399
          %v3456 = vunpack.c.h.b16 %v1399
          %v3457 = vunpack.c.l.b16 %v1400
          %v3458 = vunpack.c.h.b16 %v1400
          %v3459 = vunpack.c.l.b16 %v1401
          %v3460 = vunpack.c.h.b16 %v1401
          %v3461 = vunpack.c.l.b16 %v1402
          %v3462 = vunpack.c.h.b16 %v1402
          %v3463 = vunpack.c.l.b16 %v1403
          %v3464 = vunpack.c.h.b16 %v1403
          %v3465 = vunpack.c.l.b16 %v1404
          %v3466 = vunpack.c.h.b16 %v1404
          %v3467 = vunpack.c.l.b16 %v1405
          %v3468 = vunpack.c.h.b16 %v1405
          %v3469 = vunpack.c.l.b16 %v1406
          %v3470 = vunpack.c.h.b16 %v1406
          %v3471 = vunpack.c.l.b16 %v1407
          %v3472 = vunpack.c.h.b16 %v1407
          %v3473 = vunpack.c.l.b16 %v1408
          %v3474 = vunpack.c.h.b16 %v1408
          %v3475 = vunpack.c.l.b16 %v1409
          %v3476 = vunpack.c.h.b16 %v1409
          %v3477 = vunpack.c.l.b16 %v1410
          %v3478 = vunpack.c.h.b16 %v1410
          %v3479 = vunpack.c.l.b16 %v1411
          %v3480 = vunpack.c.h.b16 %v1411
          %v3481 = vunpack.c.l.b16 %v1412
          %v3482 = vunpack.c.h.b16 %v1412
          %v3483 = vunpack.c.l.b16 %v1413
          %v3484 = vunpack.c.h.b16 %v1413
          %v3485 = vpack.c.b16 %v3361, %v3357
          %v3486 = vpack.c.b16 %v3362, %v3358
          %v3487 = vpack.c.b16 %v3363, %v3359
          %v3488 = vpack.c.b16 %v3364, %v3360
          %v3489 = vpack.c.b16 %v3369, %v3365
          %v3490 = vpack.c.b16 %v3370, %v3366
          %v3491 = vpack.c.b16 %v3371, %v3367
          %v3492 = vpack.c.b16 %v3372, %v3368
          %v3493 = vpack.c.b16 %v3377, %v3373
          %v3494 = vpack.c.b16 %v3378, %v3374
          %v3495 = vpack.c.b16 %v3379, %v3375
          %v3496 = vpack.c.b16 %v3380, %v3376
          %v3497 = vpack.c.b16 %v3385, %v3381
          %v3498 = vpack.c.b16 %v3386, %v3382
          %v3499 = vpack.c.b16 %v3387, %v3383
          %v3500 = vpack.c.b16 %v3388, %v3384
          %v3501 = vpack.c.b16 %v3393, %v3389
          %v3502 = vpack.c.b16 %v3394, %v3390
          %v3503 = vpack.c.b16 %v3395, %v3391
          %v3504 = vpack.c.b16 %v3396, %v3392
          %v3505 = vpack.c.b16 %v3401, %v3397
          %v3506 = vpack.c.b16 %v3402, %v3398
          %v3507 = vpack.c.b16 %v3403, %v3399
          %v3508 = vpack.c.b16 %v3404, %v3400
          %v3509 = vpack.c.b16 %v3409, %v3405
          %v3510 = vpack.c.b16 %v3410, %v3406
          %v3511 = vpack.c.b16 %v3411, %v3407
          %v3512 = vpack.c.b16 %v3412, %v3408
          %v3513 = vpack.c.b16 %v3417, %v3413
          %v3514 = vpack.c.b16 %v3418, %v3414
          %v3515 = vpack.c.b16 %v3419, %v3415
          %v3516 = vpack.c.b16 %v3420, %v3416
          %v3517 = vpack.c.b16 %v3425, %v3421
          %v3518 = vpack.c.b16 %v3426, %v3422
          %v3519 = vpack.c.b16 %v3427, %v3423
          %v3520 = vpack.c.b16 %v3428, %v3424
          %v3521 = vpack.c.b16 %v3433, %v3429
          %v3522 = vpack.c.b16 %v3434, %v3430
          %v3523 = vpack.c.b16 %v3435, %v3431
          %v3524 = vpack.c.b16 %v3436, %v3432
          %v3525 = vpack.c.b16 %v3441, %v3437
          %v3526 = vpack.c.b16 %v3442, %v3438
          %v3527 = vpack.c.b16 %v3443, %v3439
          %v3528 = vpack.c.b16 %v3444, %v3440
          %v3529 = vpack.c.b16 %v3449, %v3445
          %v3530 = vpack.c.b16 %v3450, %v3446
          %v3531 = vpack.c.b16 %v3451, %v3447
          %v3532 = vpack.c.b16 %v3452, %v3448
          %v3533 = vpack.c.b16 %v3457, %v3453
          %v3534 = vpack.c.b16 %v3458, %v3454
          %v3535 = vpack.c.b16 %v3459, %v3455
          %v3536 = vpack.c.b16 %v3460, %v3456
          %v3537 = vpack.c.b16 %v3465, %v3461
          %v3538 = vpack.c.b16 %v3466, %v3462
          %v3539 = vpack.c.b16 %v3467, %v3463
          %v3540 = vpack.c.b16 %v3468, %v3464
          %v3541 = vpack.c.b16 %v3473, %v3469
          %v3542 = vpack.c.b16 %v3474, %v3470
          %v3543 = vpack.c.b16 %v3475, %v3471
          %v3544 = vpack.c.b16 %v3476, %v3472
          %v3545 = vpack.c.b16 %v3481, %v3477
          %v3546 = vpack.c.b16 %v3482, %v3478
          %v3547 = vpack.c.b16 %v3483, %v3479
          %v3548 = vpack.c.b16 %v3484, %v3480
          %3613 = vmatprep.subr.bf16.mxu0 0
          %3614 = vmatpush1.bf16.msra.mxu0 %v3209
          %3615 = vmatprep.subr.bf16.mxu0 0
          %3616 = vmatpush1.bf16.msra.mxu0 %v3210
          %3617 = vmatprep.subr.bf16.mxu0 0
          %3618 = vmatpush1.bf16.msra.mxu0 %v3211
          %3619 = vmatprep.subr.bf16.mxu0 0
          %3620 = vmatpush1.bf16.msra.mxu0 %v3212
          %3621 = vmatprep.subr.bf16.mxu0 0
          %3622 = vmatpush1.bf16.msra.mxu0 %v3213
          %3623 = vmatprep.subr.bf16.mxu0 0
          %3624 = vmatpush1.bf16.msra.mxu0 %v3214
          %3625 = vmatprep.subr.bf16.mxu0 0
          %3626 = vmatpush1.bf16.msra.mxu0 %v3215
          %3627 = vmatprep.subr.bf16.mxu0 0
          %3628 = vmatpush1.bf16.msra.mxu0 %v3216
          %3629 = vmatprep.subr.bf16.mxu0 0
          %3630 = vmatpush1.bf16.msra.mxu0 %v3217
          %3631 = vmatprep.subr.bf16.mxu0 0
          %3632 = vmatpush1.bf16.msra.mxu0 %v3218
          %3633 = vmatprep.subr.bf16.mxu0 0
          %3634 = vmatpush1.bf16.msra.mxu0 %v3219
          %3635 = vmatprep.subr.bf16.mxu0 0
          %3636 = vmatpush1.bf16.msra.mxu0 %v3220
          %3637 = vmatprep.subr.bf16.mxu0 0
          %3638 = vmatpush1.bf16.msra.mxu0 %v3221
          %3639 = vmatprep.subr.bf16.mxu0 0
          %3640 = vmatpush1.bf16.msra.mxu0 %v3222
          %3641 = vmatprep.subr.bf16.mxu0 0
          %3642 = vmatpush1.bf16.msra.mxu0 %v3223
          %3643 = vmatprep.subr.bf16.mxu0 0
          %3644 = vmatpush1.bf16.msra.mxu0 %v3224
          %3645 = vmatprep.mubr.bf16.mxu0 %v3486
          %3646 = vmatmul.mubr.bf16.gmra.mrb[0].mxu0 %v3485
          %v3647 = vpop.f32.mrb[0].mxu0
          %v3648 = vadd.f32 %v3261, %v3647
          %v3649 = vpop.f32.mrb[0].mxu0
          %v3650 = vpop.f32.mrb[0].mxu0
          %v3651 = vadd.f32 %v3262, %v3650
          %v3652 = vpop.f32.mrb[0].mxu0
          %3653 = vmatprep.mubr.bf16.mxu0 %v3490
          %3654 = vmatmul.mubr.bf16.gmra.mrb[0].mxu0 %v3489
          %v3655 = vpop.f32.mrb[0].mxu0
          %v3656 = vadd.f32 %v3263, %v3655
          %v3657 = vpop.f32.mrb[0].mxu0
          %v3658 = vpop.f32.mrb[0].mxu0
          %v3659 = vadd.f32 %v3264, %v3658
          %v3660 = vpop.f32.mrb[0].mxu0
          %3661 = vmatprep.mubr.bf16.mxu0 %v3494
          %3662 = vmatmul.mubr.bf16.gmra.mrb[0].mxu0 %v3493
          %v3663 = vpop.f32.mrb[0].mxu0
          %v3664 = vadd.f32 %v3265, %v3663
          %v3665 = vpop.f32.mrb[0].mxu0
          %v3666 = vpop.f32.mrb[0].mxu0
          %v3667 = vadd.f32 %v3266, %v3666
          %v3668 = vpop.f32.mrb[0].mxu0
          %3669 = vmatprep.mubr.bf16.mxu0 %v3498
          %3670 = vmatmul.mubr.bf16.gmra.mrb[0].mxu0 %v3497
          %v3671 = vpop.f32.mrb[0].mxu0
          %v3672 = vadd.f32 %v3267, %v3671
          %v3673 = vpop.f32.mrb[0].mxu0
          %v3674 = vpop.f32.mrb[0].mxu0
          %v3675 = vadd.f32 %v3268, %v3674
          %v3676 = vpop.f32.mrb[0].mxu0
          %3677 = vmatprep.mubr.bf16.mxu0 %v3502
          %3678 = vmatmul.mubr.bf16.gmra.mrb[0].mxu0 %v3501
          %v3679 = vpop.f32.mrb[0].mxu0
          %v3680 = vadd.f32 %v3269, %v3679
          %v3681 = vpop.f32.mrb[0].mxu0
          %v3682 = vpop.f32.mrb[0].mxu0
          %v3683 = vadd.f32 %v3270, %v3682
          %v3684 = vpop.f32.mrb[0].mxu0
          %3685 = vmatprep.mubr.bf16.mxu0 %v3506
          %3686 = vmatmul.mubr.bf16.gmra.mrb[0].mxu0 %v3505
          %v3687 = vpop.f32.mrb[0].mxu0
          %v3688 = vadd.f32 %v3271, %v3687
          %v3689 = vpop.f32.mrb[0].mxu0
          %v3690 = vpop.f32.mrb[0].mxu0
          %v3691 = vadd.f32 %v3272, %v3690
          %v3692 = vpop.f32.mrb[0].mxu0
          %3693 = vmatprep.mubr.bf16.mxu0 %v3510
          %3694 = vmatmul.mubr.bf16.gmra.mrb[0].mxu0 %v3509
          %v3695 = vpop.f32.mrb[0].mxu0
          %v3696 = vadd.f32 %v3273, %v3695
          %v3697 = vpop.f32.mrb[0].mxu0
          %v3698 = vpop.f32.mrb[0].mxu0
          %v3699 = vadd.f32 %v3274, %v3698
          %v3700 = vpop.f32.mrb[0].mxu0
          %3701 = vmatprep.mubr.bf16.mxu0 %v3514
          %3702 = vmatmul.mubr.bf16.gmra.mrb[0].mxu0 %v3513
          %v3703 = vpop.f32.mrb[0].mxu0
          %v3704 = vadd.f32 %v3275, %v3703
          %v3705 = vpop.f32.mrb[0].mxu0
          %v3706 = vpop.f32.mrb[0].mxu0
          %v3707 = vadd.f32 %v3276, %v3706
          %v3708 = vpop.f32.mrb[0].mxu0
          %3709 = vmatprep.mubr.bf16.mxu0 %v3518
          %3710 = vmatmul.mubr.bf16.gmra.mrb[0].mxu0 %v3517
          %v3711 = vpop.f32.mrb[0].mxu0
          %v3712 = vadd.f32 %v3277, %v3711
          %v3713 = vpop.f32.mrb[0].mxu0
          %v3714 = vpop.f32.mrb[0].mxu0
          %v3715 = vadd.f32 %v3278, %v3714
          %v3716 = vpop.f32.mrb[0].mxu0
          %3717 = vmatprep.mubr.bf16.mxu0 %v3522
          %3718 = vmatmul.mubr.bf16.gmra.mrb[0].mxu0 %v3521
          %v3719 = vpop.f32.mrb[0].mxu0
          %v3720 = vadd.f32 %v3279, %v3719
          %v3721 = vpop.f32.mrb[0].mxu0
          %v3722 = vpop.f32.mrb[0].mxu0
          %v3723 = vadd.f32 %v3280, %v3722
          %v3724 = vpop.f32.mrb[0].mxu0
          %3725 = vmatprep.mubr.bf16.mxu0 %v3526
          %3726 = vmatmul.mubr.bf16.gmra.mrb[0].mxu0 %v3525
          %v3727 = vpop.f32.mrb[0].mxu0
          %v3728 = vadd.f32 %v3281, %v3727
          %v3729 = vpop.f32.mrb[0].mxu0
          %v3730 = vpop.f32.mrb[0].mxu0
          %v3731 = vadd.f32 %v3282, %v3730
          %v3732 = vpop.f32.mrb[0].mxu0
          %3733 = vmatprep.mubr.bf16.mxu0 %v3530
          %3734 = vmatmul.mubr.bf16.gmra.mrb[0].mxu0 %v3529
          %v3735 = vpop.f32.mrb[0].mxu0
          %v3736 = vadd.f32 %v3283, %v3735
          %v3737 = vpop.f32.mrb[0].mxu0
          %v3738 = vpop.f32.mrb[0].mxu0
          %v3739 = vadd.f32 %v3284, %v3738
          %v3740 = vpop.f32.mrb[0].mxu0
          %3741 = vmatprep.mubr.bf16.mxu0 %v3534
          %3742 = vmatmul.mubr.bf16.gmra.mrb[0].mxu0 %v3533
          %v3743 = vpop.f32.mrb[0].mxu0
          %v3744 = vadd.f32 %v3285, %v3743
          %v3745 = vpop.f32.mrb[0].mxu0
          %v3746 = vpop.f32.mrb[0].mxu0
          %v3747 = vadd.f32 %v3286, %v3746
          %v3748 = vpop.f32.mrb[0].mxu0
          %3749 = vmatprep.mubr.bf16.mxu0 %v3538
          %3750 = vmatmul.mubr.bf16.gmra.mrb[0].mxu0 %v3537
          %v3751 = vpop.f32.mrb[0].mxu0
          %v3752 = vadd.f32 %v3287, %v3751
          %v3753 = vpop.f32.mrb[0].mxu0
          %v3754 = vpop.f32.mrb[0].mxu0
          %v3755 = vadd.f32 %v3288, %v3754
          %v3756 = vpop.f32.mrb[0].mxu0
          %3757 = vmatprep.mubr.bf16.mxu0 %v3542
          %3758 = vmatmul.mubr.bf16.gmra.mrb[0].mxu0 %v3541
          %v3759 = vpop.f32.mrb[0].mxu0
          %v3760 = vadd.f32 %v3289, %v3759
          %v3761 = vpop.f32.mrb[0].mxu0
          %v3762 = vpop.f32.mrb[0].mxu0
          %v3763 = vadd.f32 %v3290, %v3762
          %v3764 = vpop.f32.mrb[0].mxu0
          %3765 = vmatprep.mubr.bf16.mxu0 %v3546
          %3766 = vmatmul.mubr.bf16.gmra.mrb[0].mxu0 %v3545
          %v3767 = vpop.f32.mrb[0].mxu0
          %v3768 = vadd.f32 %v3291, %v3767
          %v3769 = vpop.f32.mrb[0].mxu0
          %v3770 = vpop.f32.mrb[0].mxu0
          %v3771 = vadd.f32 %v3292, %v3770
          %v3772 = vpop.f32.mrb[0].mxu0
          %3773 = vdwg.mxu0
          %3774 = vmatprep.subr.bf16.mxu0 0
          %3775 = vmatpush1.bf16.msra.mxu0 %v3225
          %3776 = vmatprep.subr.bf16.mxu0 0
          %3777 = vmatpush1.bf16.msra.mxu0 %v3226
          %3778 = vmatprep.subr.bf16.mxu0 0
          %3779 = vmatpush1.bf16.msra.mxu0 %v3227
          %3780 = vmatprep.subr.bf16.mxu0 0
          %3781 = vmatpush1.bf16.msra.mxu0 %v3228
          %3782 = vmatprep.subr.bf16.mxu0 0
          %3783 = vmatpush1.bf16.msra.mxu0 %v3229
          %3784 = vmatprep.subr.bf16.mxu0 0
          %3785 = vmatpush1.bf16.msra.mxu0 %v3230
          %3786 = vmatprep.subr.bf16.mxu0 0
          %3787 = vmatpush1.bf16.msra.mxu0 %v3231
          %3788 = vmatprep.subr.bf16.mxu0 0
          %3789 = vmatpush1.bf16.msra.mxu0 %v3232
          %3790 = vmatprep.subr.bf16.mxu0 0
          %3791 = vmatpush1.bf16.msra.mxu0 %v3233
          %3792 = vmatprep.subr.bf16.mxu0 0
          %3793 = vmatpush1.bf16.msra.mxu0 %v3234
          %3794 = vmatprep.subr.bf16.mxu0 0
          %3795 = vmatpush1.bf16.msra.mxu0 %v3235
          %3796 = vmatprep.subr.bf16.mxu0 0
          %3797 = vmatpush1.bf16.msra.mxu0 %v3236
          %3798 = vmatprep.subr.bf16.mxu0 0
          %3799 = vmatpush1.bf16.msra.mxu0 %v3237
          %3800 = vmatprep.subr.bf16.mxu0 0
          %3801 = vmatpush1.bf16.msra.mxu0 %v3238
          %3802 = vmatprep.subr.bf16.mxu0 0
          %3803 = vmatpush1.bf16.msra.mxu0 %v3239
          %3804 = vmatprep.subr.bf16.mxu0 0
          %3805 = vmatpush1.bf16.msra.mxu0 %v3240
          %3806 = vmatprep.mubr.bf16.mxu0 %v3488
          %3807 = vmatmul.mubr.bf16.gmra.mrb[0].mxu0 %v3487
          %v3808 = vpop.f32.mrb[0].mxu0
          %v3809 = vadd.f32 %v3648, %v3808
          %v3810 = vpop.f32.mrb[0].mxu0
          %v3811 = vpop.f32.mrb[0].mxu0
          %v3812 = vadd.f32 %v3651, %v3811
          %v3813 = vpop.f32.mrb[0].mxu0
          %3814 = vmatprep.mubr.bf16.mxu0 %v3492
          %3815 = vmatmul.mubr.bf16.gmra.mrb[0].mxu0 %v3491
          %v3816 = vpop.f32.mrb[0].mxu0
          %v3817 = vadd.f32 %v3656, %v3816
          %v3818 = vpop.f32.mrb[0].mxu0
          %v3819 = vpop.f32.mrb[0].mxu0
          %v3820 = vadd.f32 %v3659, %v3819
          %v3821 = vpop.f32.mrb[0].mxu0
          %3822 = vmatprep.mubr.bf16.mxu0 %v3496
          %3823 = vmatmul.mubr.bf16.gmra.mrb[0].mxu0 %v3495
          %v3824 = vpop.f32.mrb[0].mxu0
          %v3825 = vadd.f32 %v3664, %v3824
          %v3826 = vpop.f32.mrb[0].mxu0
          %v3827 = vpop.f32.mrb[0].mxu0
          %v3828 = vadd.f32 %v3667, %v3827
          %v3829 = vpop.f32.mrb[0].mxu0
          %3830 = vmatprep.mubr.bf16.mxu0 %v3500
          %3831 = vmatmul.mubr.bf16.gmra.mrb[0].mxu0 %v3499
          %v3832 = vpop.f32.mrb[0].mxu0
          %v3833 = vadd.f32 %v3672, %v3832
          %v3834 = vpop.f32.mrb[0].mxu0
          %v3835 = vpop.f32.mrb[0].mxu0
          %v3836 = vadd.f32 %v3675, %v3835
          %v3837 = vpop.f32.mrb[0].mxu0
          %3838 = vmatprep.mubr.bf16.mxu0 %v3504
          %3839 = vmatmul.mubr.bf16.gmra.mrb[0].mxu0 %v3503
          %v3840 = vpop.f32.mrb[0].mxu0
          %v3841 = vadd.f32 %v3680, %v3840
          %v3842 = vpop.f32.mrb[0].mxu0
          %v3843 = vpop.f32.mrb[0].mxu0
          %v3844 = vadd.f32 %v3683, %v3843
          %v3845 = vpop.f32.mrb[0].mxu0
          %3846 = vmatprep.mubr.bf16.mxu0 %v3508
          %3847 = vmatmul.mubr.bf16.gmra.mrb[0].mxu0 %v3507
          %v3848 = vpop.f32.mrb[0].mxu0
          %v3849 = vadd.f32 %v3688, %v3848
          %v3850 = vpop.f32.mrb[0].mxu0
          %v3851 = vpop.f32.mrb[0].mxu0
          %v3852 = vadd.f32 %v3691, %v3851
          %v3853 = vpop.f32.mrb[0].mxu0
          %3854 = vmatprep.mubr.bf16.mxu0 %v3512
          %3855 = vmatmul.mubr.bf16.gmra.mrb[0].mxu0 %v3511
          %v3856 = vpop.f32.mrb[0].mxu0
          %v3857 = vadd.f32 %v3696, %v3856
          %v3858 = vpop.f32.mrb[0].mxu0
          %v3859 = vpop.f32.mrb[0].mxu0
          %v3860 = vadd.f32 %v3699, %v3859
          %v3861 = vpop.f32.mrb[0].mxu0
          %3862 = vmatprep.mubr.bf16.mxu0 %v3516
          %3863 = vmatmul.mubr.bf16.gmra.mrb[0].mxu0 %v3515
          %v3864 = vpop.f32.mrb[0].mxu0
          %v3865 = vadd.f32 %v3704, %v3864
          %v3866 = vpop.f32.mrb[0].mxu0
          %v3867 = vpop.f32.mrb[0].mxu0
          %v3868 = vadd.f32 %v3707, %v3867
          %v3869 = vpop.f32.mrb[0].mxu0
          %3870 = vmatprep.mubr.bf16.mxu0 %v3520
          %3871 = vmatmul.mubr.bf16.gmra.mrb[0].mxu0 %v3519
          %v3872 = vpop.f32.mrb[0].mxu0
          %v3873 = vadd.f32 %v3712, %v3872
          %v3874 = vpop.f32.mrb[0].mxu0
          %v3875 = vpop.f32.mrb[0].mxu0
          %v3876 = vadd.f32 %v3715, %v3875
          %v3877 = vpop.f32.mrb[0].mxu0
          %3878 = vmatprep.mubr.bf16.mxu0 %v3524
          %3879 = vmatmul.mubr.bf16.gmra.mrb[0].mxu0 %v3523
          %v3880 = vpop.f32.mrb[0].mxu0
          %v3881 = vadd.f32 %v3720, %v3880
          %v3882 = vpop.f32.mrb[0].mxu0
          %v3883 = vpop.f32.mrb[0].mxu0
          %v3884 = vadd.f32 %v3723, %v3883
          %v3885 = vpop.f32.mrb[0].mxu0
          %3886 = vmatprep.mubr.bf16.mxu0 %v3528
          %3887 = vmatmul.mubr.bf16.gmra.mrb[0].mxu0 %v3527
          %v3888 = vpop.f32.mrb[0].mxu0
          %v3889 = vadd.f32 %v3728, %v3888
          %v3890 = vpop.f32.mrb[0].mxu0
          %v3891 = vpop.f32.mrb[0].mxu0
          %v3892 = vadd.f32 %v3731, %v3891
          %v3893 = vpop.f32.mrb[0].mxu0
          %3894 = vmatprep.mubr.bf16.mxu0 %v3532
          %3895 = vmatmul.mubr.bf16.gmra.mrb[0].mxu0 %v3531
          %v3896 = vpop.f32.mrb[0].mxu0
          %v3897 = vadd.f32 %v3736, %v3896
          %v3898 = vpop.f32.mrb[0].mxu0
          %v3899 = vpop.f32.mrb[0].mxu0
          %v3900 = vadd.f32 %v3739, %v3899
          %v3901 = vpop.f32.mrb[0].mxu0
          %3902 = vmatprep.mubr.bf16.mxu0 %v3536
          %3903 = vmatmul.mubr.bf16.gmra.mrb[0].mxu0 %v3535
          %v3904 = vpop.f32.mrb[0].mxu0
          %v3905 = vadd.f32 %v3744, %v3904
          %v3906 = vpop.f32.mrb[0].mxu0
          %v3907 = vpop.f32.mrb[0].mxu0
          %v3908 = vadd.f32 %v3747, %v3907
          %v3909 = vpop.f32.mrb[0].mxu0
          %3910 = vmatprep.mubr.bf16.mxu0 %v3540
          %3911 = vmatmul.mubr.bf16.gmra.mrb[0].mxu0 %v3539
          %v3912 = vpop.f32.mrb[0].mxu0
          %v3913 = vadd.f32 %v3752, %v3912
          %v3914 = vpop.f32.mrb[0].mxu0
          %v3915 = vpop.f32.mrb[0].mxu0
          %v3916 = vadd.f32 %v3755, %v3915
          %v3917 = vpop.f32.mrb[0].mxu0
          %3918 = vmatprep.mubr.bf16.mxu0 %v3544
          %3919 = vmatmul.mubr.bf16.gmra.mrb[0].mxu0 %v3543
          %v3920 = vpop.f32.mrb[0].mxu0
          %v3921 = vadd.f32 %v3760, %v3920
          %v3922 = vpop.f32.mrb[0].mxu0
          %v3923 = vpop.f32.mrb[0].mxu0
          %v3924 = vadd.f32 %v3763, %v3923
          %v3925 = vpop.f32.mrb[0].mxu0
          %3926 = vmatprep.mubr.bf16.mxu0 %v3548
          %3927 = vmatmul.mubr.bf16.gmra.mrb[0].mxu0 %v3547
          %v3928 = vpop.f32.mrb[0].mxu0
          %v3929 = vadd.f32 %v3768, %v3928
          %v3930 = vpop.f32.mrb[0].mxu0
          %v3931 = vpop.f32.mrb[0].mxu0
          %v3932 = vadd.f32 %v3771, %v3931
          %v3933 = vpop.f32.mrb[0].mxu0
          %3934 = vdwg.mxu0
          %v3935 = vld [vmem:[%s8] sm:$0x1]
          %v3937 = vlaneseq
          %v3938 = vshrl.u32 %v3937, 7
          %v3939 = vsub.s32 0, %v3938
          %v3940 = vrot.slane %v3935, %v3939
          %v3942 = vadd.f32 %v3809, %v3940
          %v3943 = vadd.f32 %v3812, %v3940
          %v3944 = vadd.f32 %v3817, %v3940
          %v3945 = vadd.f32 %v3820, %v3940
          %v3946 = vadd.f32 %v3825, %v3940
          %v3947 = vadd.f32 %v3828, %v3940
          %v3948 = vadd.f32 %v3833, %v3940
          %v3949 = vadd.f32 %v3836, %v3940
          %v3950 = vadd.f32 %v3841, %v3940
          %v3951 = vadd.f32 %v3844, %v3940
          %v3952 = vadd.f32 %v3849, %v3940
          %v3953 = vadd.f32 %v3852, %v3940
          %v3954 = vadd.f32 %v3857, %v3940
          %v3955 = vadd.f32 %v3860, %v3940
          %v3956 = vadd.f32 %v3865, %v3940
          %v3957 = vadd.f32 %v3868, %v3940
          %v3958 = vadd.f32 %v3873, %v3940
          %v3959 = vadd.f32 %v3876, %v3940
          %v3960 = vadd.f32 %v3881, %v3940
          %v3961 = vadd.f32 %v3884, %v3940
          %v3962 = vadd.f32 %v3889, %v3940
          %v3963 = vadd.f32 %v3892, %v3940
          %v3964 = vadd.f32 %v3897, %v3940
          %v3965 = vadd.f32 %v3900, %v3940
          %v3966 = vadd.f32 %v3905, %v3940
          %v3967 = vadd.f32 %v3908, %v3940
          %v3968 = vadd.f32 %v3913, %v3940
          %v3969 = vadd.f32 %v3916, %v3940
          %v3970 = vadd.f32 %v3921, %v3940
          %v3971 = vadd.f32 %v3924, %v3940
          %v3972 = vadd.f32 %v3929, %v3940
          %v3973 = vadd.f32 %v3932, %v3940
          %v3974 = vmax.f32 %v3942, 0.0
          %v3975 = vmax.f32 %v3943, 0.0
          %v3976 = vmax.f32 %v3944, 0.0
          %v3977 = vmax.f32 %v3945, 0.0
          %v3978 = vmax.f32 %v3946, 0.0
          %v3979 = vmax.f32 %v3947, 0.0
          %v3980 = vmax.f32 %v3948, 0.0
          %v3981 = vmax.f32 %v3949, 0.0
          %v3982 = vmax.f32 %v3950, 0.0
          %v3983 = vmax.f32 %v3951, 0.0
          %v3984 = vmax.f32 %v3952, 0.0
          %v3985 = vmax.f32 %v3953, 0.0
          %v3986 = vmax.f32 %v3954, 0.0
          %v3987 = vmax.f32 %v3955, 0.0
          %v3988 = vmax.f32 %v3956, 0.0
          %v3989 = vmax.f32 %v3957, 0.0
          %v3990 = vmax.f32 %v3958, 0.0
          %v3991 = vmax.f32 %v3959, 0.0
          %v3992 = vmax.f32 %v3960, 0.0
          %v3993 = vmax.f32 %v3961, 0.0
          %v3994 = vmax.f32 %v3962, 0.0
          %v3995 = vmax.f32 %v3963, 0.0
          %v3996 = vmax.f32 %v3964, 0.0
          %v3997 = vmax.f32 %v3965, 0.0
          %v3998 = vmax.f32 %v3966, 0.0
          %v3999 = vmax.f32 %v3967, 0.0
          %v4000 = vmax.f32 %v3968, 0.0
          %v4001 = vmax.f32 %v3969, 0.0
          %v4002 = vmax.f32 %v3970, 0.0
          %v4003 = vmax.f32 %v3971, 0.0
          %v4004 = vmax.f32 %v3972, 0.0
          %v4005 = vmax.f32 %v3973, 0.0
          %v4006 = vpack.c.bf16 %v3975, %v3974
          %v4007 = vpack.c.bf16 %v3977, %v3976
          %v4008 = vpack.c.bf16 %v3979, %v3978
          %v4009 = vpack.c.bf16 %v3981, %v3980
          %v4010 = vpack.c.bf16 %v3983, %v3982
          %v4011 = vpack.c.bf16 %v3985, %v3984
          %v4012 = vpack.c.bf16 %v3987, %v3986
          %v4013 = vpack.c.bf16 %v3989, %v3988
          %v4014 = vpack.c.bf16 %v3991, %v3990
          %v4015 = vpack.c.bf16 %v3993, %v3992
          %v4016 = vpack.c.bf16 %v3995, %v3994
          %v4017 = vpack.c.bf16 %v3997, %v3996
          %v4018 = vpack.c.bf16 %v3999, %v3998
          %v4019 = vpack.c.bf16 %v4001, %v4000
          %v4020 = vpack.c.bf16 %v4003, %v4002
          %v4021 = vpack.c.bf16 %v4005, %v4004
          %v4022 = vld [vmem:[#allocation14] sm:$0xf]
          %v4023 = vld [vmem:[#allocation14 + $0x4] sm:$0xf]
          %v4024 = vld [vmem:[#allocation14 + $0x8] sm:$0xf]
          %v4025 = vld [vmem:[#allocation14 + $0xc] sm:$0xf]
          %v4026 = vld [vmem:[#allocation14 + $0x10] sm:$0xf]
          %v4027 = vld [vmem:[#allocation14 + $0x14] sm:$0xf]
          %v4028 = vld [vmem:[#allocation14 + $0x18] sm:$0xf]
          %v4029 = vld [vmem:[#allocation14 + $0x1c] sm:$0xf]
          %v4030 = vld [vmem:[#allocation14 + $0x20] sm:$0xf]
          %v4031 = vld [vmem:[#allocation14 + $0x24] sm:$0xf]
          %v4032 = vld [vmem:[#allocation14 + $0x28] sm:$0xf]
          %v4033 = vld [vmem:[#allocation14 + $0x2c] sm:$0xf]
          %v4034 = vld [vmem:[#allocation14 + $0x30] sm:$0xf]
          %v4035 = vld [vmem:[#allocation14 + $0x34] sm:$0xf]
          %v4036 = vld [vmem:[#allocation14 + $0x38] sm:$0xf]
          %v4037 = vld [vmem:[#allocation14 + $0x3c] sm:$0xf]
          %v4038 = vld [vmem:[%s10] sm:$0x1]
          %v4040 = vlaneseq
          %v4041 = vshrl.u32 %v4040, 7
          %v4042 = vsub.s32 0, %v4041
          %v4043 = vrot.slane %v4038, %v4042
          %v4061 = vunpack.c.l.b16 %v4022
          %v4062 = vunpack.c.l.b16 %v4023
          %v4063 = vunpack.c.l.b16 %v4024
          %v4064 = vunpack.c.l.b16 %v4025
          %v4065 = vunpack.c.l.b16 %v4026
          %v4066 = vunpack.c.l.b16 %v4027
          %v4067 = vunpack.c.l.b16 %v4028
          %v4068 = vunpack.c.l.b16 %v4029
          %v4069 = vunpack.c.l.b16 %v4030
          %v4070 = vunpack.c.l.b16 %v4031
          %v4071 = vunpack.c.l.b16 %v4032
          %v4072 = vunpack.c.l.b16 %v4033
          %v4073 = vunpack.c.l.b16 %v4034
          %v4074 = vunpack.c.l.b16 %v4035
          %v4075 = vunpack.c.l.b16 %v4036
          %v4076 = vunpack.c.l.b16 %v4037
          %v4077 = vpack.c.b16 %v4062, %v4061
          %v4078 = vpack.c.b16 %v4064, %v4063
          %v4079 = vpack.c.b16 %v4066, %v4065
          %v4080 = vpack.c.b16 %v4068, %v4067
          %v4081 = vpack.c.b16 %v4070, %v4069
          %v4082 = vpack.c.b16 %v4072, %v4071
          %v4083 = vpack.c.b16 %v4074, %v4073
          %v4084 = vpack.c.b16 %v4076, %v4075
          %4093 = vmatprep.subr.bf16.mxu0 0
          %4094 = vmatpush1.bf16.msra.mxu0 %v4077
          %4095 = vmatprep.subr.bf16.mxu0 0
          %4096 = vmatpush1.bf16.msra.mxu0 %v4078
          %4097 = vmatprep.subr.bf16.mxu0 0
          %4098 = vmatpush1.bf16.msra.mxu0 %v4079
          %4099 = vmatprep.subr.bf16.mxu0 0
          %4100 = vmatpush1.bf16.msra.mxu0 %v4080
          %4101 = vmatprep.subr.bf16.mxu0 0
          %4102 = vmatpush1.bf16.msra.mxu0 %v4081
          %4103 = vmatprep.subr.bf16.mxu0 0
          %4104 = vmatpush1.bf16.msra.mxu0 %v4082
          %4105 = vmatprep.subr.bf16.mxu0 0
          %4106 = vmatpush1.bf16.msra.mxu0 %v4083
          %4107 = vmatprep.subr.bf16.mxu0 0
          %4108 = vmatpush1.bf16.msra.mxu0 %v4084
          %4109 = vmatprep.subr.bf16.mxu0 0
          %4110 = vmatpush1.bf16.msra.mxu0 0
          %4111 = vmatprep.subr.bf16.mxu0 0
          %4112 = vmatpush1.bf16.msra.mxu0 0
          %4113 = vmatprep.subr.bf16.mxu0 0
          %4114 = vmatpush1.bf16.msra.mxu0 0
          %4115 = vmatprep.subr.bf16.mxu0 0
          %4116 = vmatpush1.bf16.msra.mxu0 0
          %4117 = vmatprep.subr.bf16.mxu0 0
          %4118 = vmatpush1.bf16.msra.mxu0 0
          %4119 = vmatprep.subr.bf16.mxu0 0
          %4120 = vmatpush1.bf16.msra.mxu0 0
          %4121 = vmatprep.subr.bf16.mxu0 0
          %4122 = vmatpush1.bf16.msra.mxu0 0
          %4123 = vmatprep.subr.bf16.mxu0 0
          %4124 = vmatpush1.bf16.msra.mxu0 0
          %4125 = vmatprep.mubr.bf16.mxu0 0
          %4126 = vmatmul.mubr.bf16.gmra.mrb[0].mxu0 %v4006
          %v4127 = vpop.f32.mrb[0].mxu0
          %v4128 = vadd.f32 %v4043, %v4127
          %v4129 = vpop.f32.mrb[0].mxu0
          %v4130 = vpop.f32.mrb[0].mxu0
          %v4131 = vadd.f32 %v4043, %v4130
          %v4132 = vpop.f32.mrb[0].mxu0
          %4133 = vmatprep.mubr.bf16.mxu0 0
          %4134 = vmatmul.mubr.bf16.gmra.mrb[0].mxu0 %v4007
          %v4135 = vpop.f32.mrb[0].mxu0
          %v4136 = vadd.f32 %v4043, %v4135
          %v4137 = vpop.f32.mrb[0].mxu0
          %v4138 = vpop.f32.mrb[0].mxu0
          %v4139 = vadd.f32 %v4043, %v4138
          %v4140 = vpop.f32.mrb[0].mxu0
          %4141 = vmatprep.mubr.bf16.mxu0 0
          %4142 = vmatmul.mubr.bf16.gmra.mrb[0].mxu0 %v4008
          %v4143 = vpop.f32.mrb[0].mxu0
          %v4144 = vadd.f32 %v4043, %v4143
          %v4145 = vpop.f32.mrb[0].mxu0
          %v4146 = vpop.f32.mrb[0].mxu0
          %v4147 = vadd.f32 %v4043, %v4146
          %v4148 = vpop.f32.mrb[0].mxu0
          %4149 = vmatprep.mubr.bf16.mxu0 0
          %4150 = vmatmul.mubr.bf16.gmra.mrb[0].mxu0 %v4009
          %v4151 = vpop.f32.mrb[0].mxu0
          %v4152 = vadd.f32 %v4043, %v4151
          %v4153 = vpop.f32.mrb[0].mxu0
          %v4154 = vpop.f32.mrb[0].mxu0
          %v4155 = vadd.f32 %v4043, %v4154
          %v4156 = vpop.f32.mrb[0].mxu0
          %4157 = vmatprep.mubr.bf16.mxu0 0
          %4158 = vmatmul.mubr.bf16.gmra.mrb[0].mxu0 %v4010
          %v4159 = vpop.f32.mrb[0].mxu0
          %v4160 = vadd.f32 %v4043, %v4159
          %v4161 = vpop.f32.mrb[0].mxu0
          %v4162 = vpop.f32.mrb[0].mxu0
          %v4163 = vadd.f32 %v4043, %v4162
          %v4164 = vpop.f32.mrb[0].mxu0
          %4165 = vmatprep.mubr.bf16.mxu0 0
          %4166 = vmatmul.mubr.bf16.gmra.mrb[0].mxu0 %v4011
          %v4167 = vpop.f32.mrb[0].mxu0
          %v4168 = vadd.f32 %v4043, %v4167
          %v4169 = vpop.f32.mrb[0].mxu0
          %v4170 = vpop.f32.mrb[0].mxu0
          %v4171 = vadd.f32 %v4043, %v4170
          %v4172 = vpop.f32.mrb[0].mxu0
          %4173 = vmatprep.mubr.bf16.mxu0 0
          %4174 = vmatmul.mubr.bf16.gmra.mrb[0].mxu0 %v4012
          %v4175 = vpop.f32.mrb[0].mxu0
          %v4176 = vadd.f32 %v4043, %v4175
          %v4177 = vpop.f32.mrb[0].mxu0
          %v4178 = vpop.f32.mrb[0].mxu0
          %v4179 = vadd.f32 %v4043, %v4178
          %v4180 = vpop.f32.mrb[0].mxu0
          %4181 = vmatprep.mubr.bf16.mxu0 0
          %4182 = vmatmul.mubr.bf16.gmra.mrb[0].mxu0 %v4013
          %v4183 = vpop.f32.mrb[0].mxu0
          %v4184 = vadd.f32 %v4043, %v4183
          %v4185 = vpop.f32.mrb[0].mxu0
          %v4186 = vpop.f32.mrb[0].mxu0
          %v4187 = vadd.f32 %v4043, %v4186
          %v4188 = vpop.f32.mrb[0].mxu0
          %4189 = vmatprep.mubr.bf16.mxu0 0
          %4190 = vmatmul.mubr.bf16.gmra.mrb[0].mxu0 %v4014
          %v4191 = vpop.f32.mrb[0].mxu0
          %v4192 = vadd.f32 %v4043, %v4191
          %v4193 = vpop.f32.mrb[0].mxu0
          %v4194 = vpop.f32.mrb[0].mxu0
          %v4195 = vadd.f32 %v4043, %v4194
          %v4196 = vpop.f32.mrb[0].mxu0
          %4197 = vmatprep.mubr.bf16.mxu0 0
          %4198 = vmatmul.mubr.bf16.gmra.mrb[0].mxu0 %v4015
          %v4199 = vpop.f32.mrb[0].mxu0
          %v4200 = vadd.f32 %v4043, %v4199
          %v4201 = vpop.f32.mrb[0].mxu0
          %v4202 = vpop.f32.mrb[0].mxu0
          %v4203 = vadd.f32 %v4043, %v4202
          %v4204 = vpop.f32.mrb[0].mxu0
          %4205 = vmatprep.mubr.bf16.mxu0 0
          %4206 = vmatmul.mubr.bf16.gmra.mrb[0].mxu0 %v4016
          %v4207 = vpop.f32.mrb[0].mxu0
          %v4208 = vadd.f32 %v4043, %v4207
          %v4209 = vpop.f32.mrb[0].mxu0
          %v4210 = vpop.f32.mrb[0].mxu0
          %v4211 = vadd.f32 %v4043, %v4210
          %v4212 = vpop.f32.mrb[0].mxu0
          %4213 = vmatprep.mubr.bf16.mxu0 0
          %4214 = vmatmul.mubr.bf16.gmra.mrb[0].mxu0 %v4017
          %v4215 = vpop.f32.mrb[0].mxu0
          %v4216 = vadd.f32 %v4043, %v4215
          %v4217 = vpop.f32.mrb[0].mxu0
          %v4218 = vpop.f32.mrb[0].mxu0
          %v4219 = vadd.f32 %v4043, %v4218
          %v4220 = vpop.f32.mrb[0].mxu0
          %4221 = vmatprep.mubr.bf16.mxu0 0
          %4222 = vmatmul.mubr.bf16.gmra.mrb[0].mxu0 %v4018
          %v4223 = vpop.f32.mrb[0].mxu0
          %v4224 = vadd.f32 %v4043, %v4223
          %v4225 = vpop.f32.mrb[0].mxu0
          %v4226 = vpop.f32.mrb[0].mxu0
          %v4227 = vadd.f32 %v4043, %v4226
          %v4228 = vpop.f32.mrb[0].mxu0
          %4229 = vmatprep.mubr.bf16.mxu0 0
          %4230 = vmatmul.mubr.bf16.gmra.mrb[0].mxu0 %v4019
          %v4231 = vpop.f32.mrb[0].mxu0
          %v4232 = vadd.f32 %v4043, %v4231
          %v4233 = vpop.f32.mrb[0].mxu0
          %v4234 = vpop.f32.mrb[0].mxu0
          %v4235 = vadd.f32 %v4043, %v4234
          %v4236 = vpop.f32.mrb[0].mxu0
          %4237 = vmatprep.mubr.bf16.mxu0 0
          %4238 = vmatmul.mubr.bf16.gmra.mrb[0].mxu0 %v4020
          %v4239 = vpop.f32.mrb[0].mxu0
          %v4240 = vadd.f32 %v4043, %v4239
          %v4241 = vpop.f32.mrb[0].mxu0
          %v4242 = vpop.f32.mrb[0].mxu0
          %v4243 = vadd.f32 %v4043, %v4242
          %v4244 = vpop.f32.mrb[0].mxu0
          %4245 = vmatprep.mubr.bf16.mxu0 0
          %4246 = vmatmul.mubr.bf16.gmra.mrb[0].mxu0 %v4021
          %v4247 = vpop.f32.mrb[0].mxu0
          %v4248 = vadd.f32 %v4043, %v4247
          %v4249 = vpop.f32.mrb[0].mxu0
          %v4250 = vpop.f32.mrb[0].mxu0
          %v4251 = vadd.f32 %v4043, %v4250
          %v4252 = vpop.f32.mrb[0].mxu0
          %4253 = vdwg.mxu0
          %v4254 = vmax.f32 %v4128, 0.0
          %v4255 = vmax.f32 %v4131, 0.0
          %v4256 = vmax.f32 %v4136, 0.0
          %v4257 = vmax.f32 %v4139, 0.0
          %v4258 = vmax.f32 %v4144, 0.0
          %v4259 = vmax.f32 %v4147, 0.0
          %v4260 = vmax.f32 %v4152, 0.0
          %v4261 = vmax.f32 %v4155, 0.0
          %v4262 = vmax.f32 %v4160, 0.0
          %v4263 = vmax.f32 %v4163, 0.0
          %v4264 = vmax.f32 %v4168, 0.0
          %v4265 = vmax.f32 %v4171, 0.0
          %v4266 = vmax.f32 %v4176, 0.0
          %v4267 = vmax.f32 %v4179, 0.0
          %v4268 = vmax.f32 %v4184, 0.0
          %v4269 = vmax.f32 %v4187, 0.0
          %v4270 = vmax.f32 %v4192, 0.0
          %v4271 = vmax.f32 %v4195, 0.0
          %v4272 = vmax.f32 %v4200, 0.0
          %v4273 = vmax.f32 %v4203, 0.0
          %v4274 = vmax.f32 %v4208, 0.0
          %v4275 = vmax.f32 %v4211, 0.0
          %v4276 = vmax.f32 %v4216, 0.0
          %v4277 = vmax.f32 %v4219, 0.0
          %v4278 = vmax.f32 %v4224, 0.0
          %v4279 = vmax.f32 %v4227, 0.0
          %v4280 = vmax.f32 %v4232, 0.0
          %v4281 = vmax.f32 %v4235, 0.0
          %v4282 = vmax.f32 %v4240, 0.0
          %v4283 = vmax.f32 %v4243, 0.0
          %v4284 = vmax.f32 %v4248, 0.0
          %v4285 = vmax.f32 %v4251, 0.0
          %v4286 = vpack.c.bf16 %v4255, %v4254
          %v4287 = vpack.c.bf16 %v4257, %v4256
          %v4288 = vpack.c.bf16 %v4259, %v4258
          %v4289 = vpack.c.bf16 %v4261, %v4260
          %v4290 = vpack.c.bf16 %v4263, %v4262
          %v4291 = vpack.c.bf16 %v4265, %v4264
          %v4292 = vpack.c.bf16 %v4267, %v4266
          %v4293 = vpack.c.bf16 %v4269, %v4268
          %v4294 = vpack.c.bf16 %v4271, %v4270
          %v4295 = vpack.c.bf16 %v4273, %v4272
          %v4296 = vpack.c.bf16 %v4275, %v4274
          %v4297 = vpack.c.bf16 %v4277, %v4276
          %v4298 = vpack.c.bf16 %v4279, %v4278
          %v4299 = vpack.c.bf16 %v4281, %v4280
          %v4300 = vpack.c.bf16 %v4283, %v4282
          %v4301 = vpack.c.bf16 %v4285, %v4284
          %v4303 = vunpack.c.l.b16 %v1414
          %v4304 = vunpack.c.h.b16 %v1414
          %v4305 = vpack.c.b16 %v4303, %v4303
          %v4306 = vpack.c.b16 %v4304, %v4304
          %4309 = vmatprep.subr.bf16.mxu0 0
          %4310 = vmatpush1.bf16.msra.mxu0 %v4286
          %4311 = vmatprep.subr.bf16.mxu0 0
          %4312 = vmatpush1.bf16.msra.mxu0 %v4287
          %4313 = vmatprep.subr.bf16.mxu0 0
          %4314 = vmatpush1.bf16.msra.mxu0 %v4288
          %4315 = vmatprep.subr.bf16.mxu0 0
          %4316 = vmatpush1.bf16.msra.mxu0 %v4289
          %4317 = vmatprep.subr.bf16.mxu0 0
          %4318 = vmatpush1.bf16.msra.mxu0 %v4290
          %4319 = vmatprep.subr.bf16.mxu0 0
          %4320 = vmatpush1.bf16.msra.mxu0 %v4291
          %4321 = vmatprep.subr.bf16.mxu0 0
          %4322 = vmatpush1.bf16.msra.mxu0 %v4292
          %4323 = vmatprep.subr.bf16.mxu0 0
          %4324 = vmatpush1.bf16.msra.mxu0 %v4293
          %4325 = vmatprep.subr.bf16.mxu0 0
          %4326 = vmatpush1.bf16.msra.mxu0 %v4294
          %4327 = vmatprep.subr.bf16.mxu0 0
          %4328 = vmatpush1.bf16.msra.mxu0 %v4295
          %4329 = vmatprep.subr.bf16.mxu0 0
          %4330 = vmatpush1.bf16.msra.mxu0 %v4296
          %4331 = vmatprep.subr.bf16.mxu0 0
          %4332 = vmatpush1.bf16.msra.mxu0 %v4297
          %4333 = vmatprep.subr.bf16.mxu0 0
          %4334 = vmatpush1.bf16.msra.mxu0 %v4298
          %4335 = vmatprep.subr.bf16.mxu0 0
          %4336 = vmatpush1.bf16.msra.mxu0 %v4299
          %4337 = vmatprep.subr.bf16.mxu0 0
          %4338 = vmatpush1.bf16.msra.mxu0 %v4300
          %4339 = vmatprep.subr.bf16.mxu0 0
          %4340 = vmatpush1.bf16.msra.mxu0 %v4301
          %4341 = vmatprep.mubr.bf16.mxu0 %v4306
          %4342 = vmatmul.mubr.bf16.gmra.mrb[0].mxu0 %v4305
          %v4343 = vpop.f32.mrb[0].mxu0
          %v4344 = vadd.f32 0.0, %v4343
          %v4345 = vpop.f32.mrb[0].mxu0
          %v4346 = vpop.f32.mrb[0].mxu0
          %v4347 = vpop.f32.mrb[0].mxu0
          %4348 = vdwg.mxu0
          %v4349 = vld [vmem:[#allocation20] sm:$0xff]
          %v4350 = vpack.c.bf16 %v4344, %v4344
          %v4351 = vld [vmem:[#allocation19] sm:$0xf]
          %v4352 = vld [vmem:[#allocation19 + $0x4] sm:$0xf]
          %v4353 = vld [vmem:[#allocation19 + $0x8] sm:$0xf]
          %v4354 = vld [vmem:[#allocation19 + $0xc] sm:$0xf]
          %v4355 = vld [vmem:[#allocation19 + $0x10] sm:$0xf]
          %v4356 = vld [vmem:[#allocation19 + $0x14] sm:$0xf]
          %v4357 = vld [vmem:[#allocation19 + $0x18] sm:$0xf]
          %v4358 = vld [vmem:[#allocation19 + $0x1c] sm:$0xf]
          %v4359 = vld [vmem:[#allocation19 + $0x20] sm:$0xf]
          %v4360 = vld [vmem:[#allocation19 + $0x24] sm:$0xf]
          %v4361 = vld [vmem:[#allocation19 + $0x28] sm:$0xf]
          %v4362 = vld [vmem:[#allocation19 + $0x2c] sm:$0xf]
          %v4363 = vld [vmem:[#allocation19 + $0x30] sm:$0xf]
          %v4364 = vld [vmem:[#allocation19 + $0x34] sm:$0xf]
          %v4365 = vld [vmem:[#allocation19 + $0x38] sm:$0xf]
          %v4366 = vld [vmem:[#allocation19 + $0x3c] sm:$0xf]
          %v4383 = vunpack.c.l.b16 %v4351
          %v4384 = vunpack.c.l.b16 %v4352
          %v4385 = vunpack.c.l.b16 %v4353
          %v4386 = vunpack.c.l.b16 %v4354
          %v4387 = vunpack.c.l.b16 %v4355
          %v4388 = vunpack.c.l.b16 %v4356
          %v4389 = vunpack.c.l.b16 %v4357
          %v4390 = vunpack.c.l.b16 %v4358
          %v4391 = vunpack.c.l.b16 %v4359
          %v4392 = vunpack.c.l.b16 %v4360
          %v4393 = vunpack.c.l.b16 %v4361
          %v4394 = vunpack.c.l.b16 %v4362
          %v4395 = vunpack.c.l.b16 %v4363
          %v4396 = vunpack.c.l.b16 %v4364
          %v4397 = vunpack.c.l.b16 %v4365
          %v4398 = vunpack.c.l.b16 %v4366
          %v4399 = vpack.c.b16 %v4384, %v4383
          %v4400 = vpack.c.b16 %v4386, %v4385
          %v4401 = vpack.c.b16 %v4388, %v4387
          %v4402 = vpack.c.b16 %v4390, %v4389
          %v4403 = vpack.c.b16 %v4392, %v4391
          %v4404 = vpack.c.b16 %v4394, %v4393
          %v4405 = vpack.c.b16 %v4396, %v4395
          %v4406 = vpack.c.b16 %v4398, %v4397
          %4415 = vmatprep.subr.bf16.mxu0 0
          %4416 = vmatpush1.bf16.msra.mxu0 %v4399
          %4417 = vmatprep.subr.bf16.mxu0 0
          %4418 = vmatpush1.bf16.msra.mxu0 %v4400
          %4419 = vmatprep.subr.bf16.mxu0 0
          %4420 = vmatpush1.bf16.msra.mxu0 %v4401
          %4421 = vmatprep.subr.bf16.mxu0 0
          %4422 = vmatpush1.bf16.msra.mxu0 %v4402
          %4423 = vmatprep.subr.bf16.mxu0 0
          %4424 = vmatpush1.bf16.msra.mxu0 %v4403
          %4425 = vmatprep.subr.bf16.mxu0 0
          %4426 = vmatpush1.bf16.msra.mxu0 %v4404
          %4427 = vmatprep.subr.bf16.mxu0 0
          %4428 = vmatpush1.bf16.msra.mxu0 %v4405
          %4429 = vmatprep.subr.bf16.mxu0 0
          %4430 = vmatpush1.bf16.msra.mxu0 %v4406
          %4431 = vmatprep.subr.bf16.mxu0 0
          %4432 = vmatpush1.bf16.msra.mxu0 0
          %4433 = vmatprep.subr.bf16.mxu0 0
          %4434 = vmatpush1.bf16.msra.mxu0 0
          %4435 = vmatprep.subr.bf16.mxu0 0
          %4436 = vmatpush1.bf16.msra.mxu0 0
          %4437 = vmatprep.subr.bf16.mxu0 0
          %4438 = vmatpush1.bf16.msra.mxu0 0
          %4439 = vmatprep.subr.bf16.mxu0 0
          %4440 = vmatpush1.bf16.msra.mxu0 0
          %4441 = vmatprep.subr.bf16.mxu0 0
          %4442 = vmatpush1.bf16.msra.mxu0 0
          %4443 = vmatprep.subr.bf16.mxu0 0
          %4444 = vmatpush1.bf16.msra.mxu0 0
          %4445 = vmatprep.subr.bf16.mxu0 0
          %4446 = vmatpush1.bf16.msra.mxu0 0
          %4447 = vmatprep.mubr.bf16.mxu0 0
          %4448 = vmatmul.mubr.bf16.gmra.mrb[0].mxu0 %v4350
          %v4449 = vpop.f32.mrb[0].mxu0
          %v4450 = vadd.f32 0.0, %v4449
          %v4451 = vpop.f32.mrb[0].mxu0
          %v4452 = vpop.f32.mrb[0].mxu0
          %v4453 = vpop.f32.mrb[0].mxu0
          %4454 = vdwg.mxu0
          %v4455 = vadd.f32 %v4349, %v4450
          %4456 = vst [vmem:[#allocation20] sm:$0xff] %v4455
        $region132: #{tpu_custom_call.1} parent=79 // pred_fallthru
          _
        // Predicated region
        $region133: #{tpu_custom_call.1} parent=79 // pred_check
          %p4457 = pneg %p384
        $region134: #{tpu_custom_call.1} parent=79 // pred_check_branch
          %4459 = sbr.rel (%p4457) target = $region136
        $region135: #{tpu_custom_call.1} parent=79 // pred_region
          %s4461 = ssub.s32 128, 128
          %4462 = vsyncadd [#allocation6], %s4461
          %s4464 = sshll.u32 [#allocation20], 4
          %s4465 = int_to_ptr.vmem [resolvable:$true] %s4464
          %4467 = dma.vmem_to_hbm [thread:$0]  %s4465, 128, %s15, [#allocation6]
        $region136: #{tpu_custom_call.1} parent=79 // pred_fallthru
          _
        // Predicated region
        $region137: #{tpu_custom_call.1} parent=79 // pred_check
          %p4468 = pneg %p384
        $region138: #{tpu_custom_call.1} parent=79 // pred_check_branch
          %4470 = sbr.rel (%p4468) target = $region140
        $region139: #{tpu_custom_call.1} parent=79 // pred_region
          %4471 = dma.done [#allocation6], 128
        $region140: #{tpu_custom_call.1} parent=79 // pred_fallthru
          _
      $region80: #{tpu_custom_call.1} parent=5 // pred_fallthru
        _
      %p4472 = scmp.le.s32.totalorder 2, %s29
      // Predicated region
      $region141: #{tpu_custom_call.1} parent=5 // pred_check
        %p4473 = pneg %p4472
      $region142: #{tpu_custom_call.1} parent=5 // pred_check_branch
        %4475 = sbr.rel (%p4473) target = $region144
      $region143: #{tpu_custom_call.1} parent=5 // pred_region
        %s4476 = ssub.s32 %s29, 2
      $region144: #{tpu_custom_call.1} parent=5 // pred_fallthru
        _
    $region6: #{tpu_custom_call.1} parent=1 // loop_footer
      %s33 = sadd.s32 1, %s29
    $region7: #{tpu_custom_call.1} parent=1 // loop_footer_branch
      %28 = sbr.rel target = $region3
    $region8: #{tpu_custom_call.1} parent=1 // loop_exit
      _
    %4477 = vsyncpa [#allocation5], 1
    %s4478 = scalar_lea.sflag [#allocation5], 1
    %4479 = vsyncpa %s4478, 1
    %4480 = vsyncpa [#allocation8], 1
    %4481 = vsyncpa [#allocation12], 1
    %4482 = vsyncpa [#allocation15], 1
    %4483 = vsyncpa [#allocation18], 1
    %4484 = vsyncpa [#allocation6], 1
    %s4485 = scalar_lea.sflag [#allocation6], 1
    %4486 = vsyncpa %s4485, 1

</llo_original>
